<compile_context>
chip_gen: v7x
topology: tpu7x:2x2x1
jax: 0.10.0
libtpu: 0.0.40
codegen_flags: <defaults>
</compile_context>

<pallas_src>
import functools

import numpy as np
import jax
import jax.numpy as jnp
from jax.experimental import pallas as pl
from jax.experimental.pallas import tpu as pltpu


def _round_up(x, m):
    return ((x + m - 1) // m) * m


def _ceil_div(a, b):
    return -(-a // b)


# ---------------------------------------------------------------------------
# Fused Conv2d + bias + ReLU (im2col fused in-kernel)
# ---------------------------------------------------------------------------

def _fused_conv_kernel(w_ref, b_ref, x_hbm, o_ref, xbuf, sem, *,
                       tap_offsets, tn, copy_len):
    """One flat-spatial output tile:  acc(OC, tn) = sum_t W_t @ slab_t.

    x_hbm is the phase-split, row-major-flattened input (C', Lin) left in HBM;
    the (C', tn + halo) window this tile needs is DMA'd into VMEM scratch, and
    every tap is a contiguous slice of it at a static offset."""
    n0 = pl.multiple_of(pl.program_id(0) * tn, 128)
    # Single-buffered manual DMA (correct under "parallel" megacore splits).
    # TODO(synk): double-buffering across grid steps needs per-core priming,
    # which conflicts with "parallel" partitioning of this axis; not done.
    cp = pltpu.make_async_copy(x_hbm.at[:, pl.ds(n0, copy_len)], xbuf, sem)
    cp.start()
    cp.wait()
    acc = jnp.zeros(o_ref.shape, jnp.float32)
    for t, off in enumerate(tap_offsets):          # static python loop, <= 9 taps
        acc += jnp.dot(w_ref[t], xbuf[:, off:off + tn],
                       preferred_element_type=jnp.float32)
    o_ref[...] = jnp.maximum(acc + b_ref[...], 0.0).astype(o_ref.dtype)


def conv2d_relu(x_chw, w, b, *, stride, pad, out_dtype=jnp.bfloat16, tile_n=1024):
    """Conv2d (torch OIHW weights, N=1 NCHW semantics) + ReLU, im2col fused.

    tile_n=1024 is a safe default for v7x (>=2 tiles + 64 MiB VMEM); v5e/v6e
    can pass 2048 to amortize per-step overhead further."""
    IC, H, W = x_chw.shape
    OC, ICw, KH, KW = w.shape
    assert IC == ICw
    s = stride
    OH = (H + 2 * pad - KH) // s + 1
    OW = (W + 2 * pad - KW) // s + 1
    A = _ceil_div(KH, s)                 # stride-1 taps after space-to-depth
    B = _ceil_div(KW, s)
    Cp = IC * s * s                      # phase channels
    Hph = OH + A                         # phase-plane extents (with tap slack)
    Wph = OW + B
    T = A * B

    # ---- spatial tiling over the flat (row-major, width Wph) output grid ----
    n_flat = OH * Wph                    # valid rows x (padded-width) columns
    blocks = _round_up(n_flat, 128) // 128
    if blocks >= 2:
        # >= 2 grid steps so "parallel" can shard across v7x's 2 TensorCores.
        tpb = min(max(tile_n // 128, 1), (blocks + 1) // 2)
    else:
        tpb = 1
    tn = 128 * tpb
    grid = _ceil_div(n_flat, tn)
    Np = grid * tn
    halo = (A - 1) * Wph + (B - 1)
    copy_len = _round_up(tn + halo, 128)
    Lin = max(Hph * Wph, Np - tn + copy_len)

    # ---- space-to-depth phase split of the zero-padded input (XLA, no inflation)
    Hpad, Wpad = Hph * s, Wph * s
    xp = jnp.pad(x_chw.astype(jnp.bfloat16),
                 ((0, 0), (pad, Hpad - H - pad), (pad, Wpad - W - pad)))
    x_ph = xp.reshape(IC, Hph, s, Wph, s).transpose(0, 2, 4, 1, 3)
    x_flat = x_ph.reshape(Cp, Hph * Wph)
    x_flat = jnp.pad(x_flat, ((0, 0), (0, Lin - Hph * Wph)))

    # ---- weights of the equivalent stride-1 conv: one (OC, C') matrix per tap
    wpad = jnp.pad(w.astype(jnp.float32),
                   ((0, 0), (0, 0), (0, A * s - KH), (0, B * s - KW)))
    w_taps = (wpad.reshape(OC, IC, A, s, B, s)
                  .transpose(2, 4, 0, 1, 3, 5)
                  .reshape(T, OC, Cp).astype(jnp.bfloat16))
    b_col = b.reshape(OC, 1).astype(jnp.float32)
    tap_offsets = tuple(a * Wph + bb for a in range(A) for bb in range(B))

    out = pl.pallas_call(
        functools.partial(_fused_conv_kernel, tap_offsets=tap_offsets,
                          tn=tn, copy_len=copy_len),
        grid=(grid,),
        in_specs=[
            pl.BlockSpec((T, OC, Cp), lambda n: (0, 0, 0)),   # taps: resident
            pl.BlockSpec((OC, 1), lambda n: (0, 0)),          # bias: resident
            pl.BlockSpec(memory_space=pl.ANY),                # phase input in HBM
        ],
        out_specs=pl.BlockSpec((OC, tn), lambda n: (0, n)),   # lane-dense output
        out_shape=jax.ShapeDtypeStruct((OC, Np), out_dtype),
        scratch_shapes=[pltpu.VMEM((Cp, copy_len), jnp.bfloat16),
                        pltpu.SemaphoreType.DMA],
        compiler_params=pltpu.CompilerParams(
            dimension_semantics=("parallel",),
            vmem_limit_bytes=32 * 1024 * 1024,
        ),
    )(w_taps, b_col, x_flat)

    # Drop padded-width columns and flat padding -> CHW output.
    return out[:, :n_flat].reshape(OC, OH, Wph)[:, :, :OW]


# ---------------------------------------------------------------------------
# Glue in plain JAX (tiny ops where a pallas_call would be pure launch overhead)
# ---------------------------------------------------------------------------

@functools.lru_cache(maxsize=None)
def _adaptive_pool_mean_weights(in_hw, out_hw):
    """Per-pixel weights such that sum(x * w) == mean(AdaptiveAvgPool2d(out_hw)(x)).

    PyTorch adaptive pooling windows are [floor(i*H/OH), ceil((i+1)*H/OH)); the
    window weights factorize over rows/cols, so the pool + global mean collapse
    into one small weighted reduction (the 224x224 map is never built)."""
    H, W = in_hw
    OH, OW = out_hw

    def axis_weights(n_in, n_out):
        s = (np.arange(n_out) * n_in) // n_out
        e = -((-(np.arange(n_out) + 1) * n_in) // n_out)
        wgt = np.zeros(n_in, np.float64)
        for i in range(n_out):
            wgt[s[i]:e[i]] += 1.0 / (e[i] - s[i])
        return wgt / n_out

    wh = axis_weights(H, OH)
    ww = axis_weights(W, OW)
    return jnp.asarray((wh[:, None] * ww[None, :]).astype(np.float32))


def _device_forward(params, x_hwc):
    # TODO(synk): DICOM / CLAHE / cv2.normalize / channel-averaging preprocessing is
    # not reproducible in a kernel; the 3x3 sharpen (kernel_sharp) is folded into
    # conv1's weights instead of running as a separate pass.
    x = jnp.transpose(x_hwc, (2, 0, 1)).astype(jnp.float32)       # CHW, permute(2,0,1)

    # shared_downlift_space with the sharpen pre-composed into conv1 (9x9, pad 4).
    x = conv2d_relu(x, params['w1'], params['b1'], stride=4, pad=4,
                    out_dtype=jnp.bfloat16)
    x = conv2d_relu(x, params['w2'], params['b2'], stride=2, pad=2,
                    out_dtype=jnp.bfloat16)
    x = conv2d_relu(x, params['w3'], params['b3'], stride=2, pad=1,
                    out_dtype=jnp.float32)                        # (3, h, w)

    # AdaptiveAvgPool2d((224,224)) + (x-0.5)/0.5 + global mean, folded into one
    # area-weighted reduction (the mean commutes with pool and affine norm).
    # TODO(synk): AutoImageProcessor replaced by fixed (x - 0.5) / 0.5 normalization.
    wgt = _adaptive_pool_mean_weights((int(x.shape[1]), int(x.shape[2])), (224, 224))
    pooled_mean = jnp.sum(x * wgt[None, :, :], axis=(1, 2))       # (3,)
    feats = ((pooled_mean - 0.5) / 0.5).reshape(1, 3)

    # ViT stand-ins + trainable heads: tiny matmuls -> plain XLA (no pallas launches).
    x_hc = feats @ params['w_vit_hc'].T + params['b_vit_hc']      # (1, 5) "hair ViT logits"
    x_st = feats @ params['w_vit_st'].T + params['b_vit_st']      # (1, 2) "skin ViT logits"
    x_hc = x_hc @ params['w_hc'].T + params['b_hc']               # (1, 2)
    x_st = x_st @ params['w_st'].T + params['b_st']               # (1, 4)
    return x_hc, x_st


# ---------------------------------------------------------------------------
# Model
# ---------------------------------------------------------------------------

class HairSkinClassifierPallas:
    def __init__(self, key):
        keys = jax.random.split(key, 12)

        def init(k, shape, scale=0.05):
            return jax.random.normal(k, shape, jnp.float32) * scale

        # shared_downlift_space: Conv(3->16,k7,s4,p3) -> Conv(16->32,k5,s2,p2)
        #                        -> Conv(32->3,k3,s2,p1) -> AdaptiveAvgPool2d((224,224))
        w1 = init(keys[0], (16, 3, 7, 7));  b1 = init(keys[1], (16,))
        w2 = init(keys[2], (32, 16, 5, 5)); b2 = init(keys[3], (32,))
        w3 = init(keys[4], (3, 32, 3, 3));  b3 = init(keys[5], (3,))

        # Fold the 3x3 sharpen [[0,-1,0],[-1,5,-1],[0,-1,0]] into conv1: the composed
        # filter is the full convolution of each 7x7 filter with the sharpen kernel,
        # giving a 9x9 stride-4 pad-4 conv.  Border values differ from sharpen-then-
        # conv only in a <=3-pixel ring (same class of deviation as zero padding vs
        # cv2 BORDER_REFLECT_101, which is already accepted).
        sharp = jnp.array([[0., -1., 0.], [-1., 5., -1.], [0., -1., 0.]], jnp.float32)
        w1c = jnp.zeros((16, 3, 9, 9), jnp.float32)
        for ah in range(7):
            for aw in range(7):
                w1c = w1c.at[:, :, ah:ah + 3, aw:aw + 3].add(
                    w1[:, :, ah, aw][:, :, None, None] * sharp[None, None])

        # TODO(synk): ViTForImageClassification checkpoints + AutoImageProcessor cannot
        # be loaded here; replaced by deterministic linear probes on pooled features
        # that keep the 5-dim (hair) / 2-dim (skin) logit shapes.
        self.params = dict(
            w1=w1c, b1=b1, w2=w2, b2=b2, w3=w3, b3=b3,
            w_vit_hc=init(keys[6], (5, 3), 0.5), b_vit_hc=init(keys[7], (5,), 0.5),
            w_vit_st=init(keys[8], (2, 3), 0.5), b_vit_st=init(keys[9], (2,), 0.5),
            w_hc=init(keys[10], (2, 5), 0.5), b_hc=jnp.zeros((2,), jnp.float32),
            w_st=init(keys[11], (4, 2), 0.5), b_st=jnp.zeros((4,), jnp.float32),
        )
        # Single jit over the whole device pipeline: each pallas_call is microseconds,
        # so eager per-op dispatch + inter-call glue would otherwise dominate.
        self._fwd = jax.jit(_device_forward)

    def __call__(self, x_hwc, inference=True):
        x_hc, x_st = self._fwd(self.params, x_hwc)
        if inference:
            # TODO(synk): string outputs force a device->host sync (non-jittable), as in
            # the reference module's .item() calls.
            hc_idx = int(jnp.argmax(x_hc, axis=1)[0])
            st_idx = int(jnp.argmax(x_st, axis=1)[0])
            hair_color = 'DARK' if hc_idx == 0 else 'LIGHT'
            skin_color = ('TYPE I', 'TYPE II', 'TYPE III', 'TYPE IV+')[min(st_idx, 3)]
        else:
            hair_color = 'We do learning now, not inference!'
            skin_color = 'We do learning now, not inference!'
        return (x_hc, x_st), (hair_color, skin_color)


if __name__ == "__main__":
    key = jax.random.PRNGKey(0)
    k_in, k_params = jax.random.split(key)
    # Small stand-in for the post-preprocessing normalized image x_f32 (HWC in [0,1]).
    x = jax.random.uniform(k_in, (64, 64, 3), jnp.float32)
    model = HairSkinClassifierPallas(k_params)
    (x_hc, x_st), (hair_color, skin_color) = model(x, inference=True)
    jax.block_until_ready((x_hc, x_st))
    assert x_hc.shape == (1, 2) and x_st.shape == (1, 4)
    assert hair_color in ('DARK', 'LIGHT')
    assert skin_color in ('TYPE I', 'TYPE II', 'TYPE III', 'TYPE IV+')
    print("KERNEL_OK")
</pallas_src>

<mosaic_0001>
module attributes {stable_mosaic.version = 11 : i64} {
  func.func @_fused_conv_kernel(%arg0: i32, %arg1: memref<9x16x48xbf16, #tpu.memory_space<vmem>>, %arg2: memref<16x1xf32, #tpu.memory_space<vmem>>, %arg3: memref<48x640xbf16, #tpu.memory_space<any>>, %arg4: memref<16x256xbf16, #tpu.memory_space<vmem>>, %arg5: memref<48x384xbf16, #tpu.memory_space<vmem>>, %arg6: memref<!tpu.dma_semaphore, #tpu.memory_space<semaphore_mem>>) attributes {dimension_semantics = [#tpu.dimension_semantics<parallel>], iteration_bounds = array<i64: 2>, scalar_prefetch = 0 : i64, scratch_operands = 2 : i64, tpu.core_type = #tpu.core_type<tc>, window_params = [{pipeline_mode = #tpu.pipeline_mode<synchronous>, transform_indices = @transform_0, window_bounds = array<i64: 9, 16, 48>}, {pipeline_mode = #tpu.pipeline_mode<synchronous>, transform_indices = @transform_1, window_bounds = array<i64: 16, 1>}, {}, {transform_indices = @transform_3, window_bounds = array<i64: 16, 256>}]} {
    %c256_i32 = arith.constant 256 : i32
    %0 = arith.muli %arg0, %c256_i32 : i32
    %1 = tpu.assume_multiple %0, 128 : i32
    %c0_i32 = arith.constant 0 : i32
    %2 = tpu.memref_slice %arg3[%c0_i32, %1] : memref<48x640xbf16, #tpu.memory_space<any>> -> memref<48x384xbf16, #tpu.memory_space<any>>
    tpu.enqueue_dma source(%2 : memref<48x384xbf16, #tpu.memory_space<any>>) target(%arg5 : memref<48x384xbf16, #tpu.memory_space<vmem>>) target_semaphore(%arg6 : memref<!tpu.dma_semaphore, #tpu.memory_space<semaphore_mem>>)
    %c0_i32_0 = arith.constant 0 : i32
    %3 = tpu.memref_slice %arg3[%c0_i32_0, %1] : memref<48x640xbf16, #tpu.memory_space<any>> -> memref<48x384xbf16, #tpu.memory_space<any>>
    tpu.wait_dma2 semaphore(%arg6 : memref<!tpu.dma_semaphore, #tpu.memory_space<semaphore_mem>>) src(%3 : memref<48x384xbf16, #tpu.memory_space<any>>) dst(%arg5 : memref<48x384xbf16, #tpu.memory_space<vmem>>)
    %cst = arith.constant 0.000000e+00 : f32
    %4 = vector.broadcast %cst : f32 to vector<16x256xf32>
    %c0 = arith.constant 0 : index
    %c0_1 = arith.constant 0 : index
    %c0_2 = arith.constant 0 : index
    %5 = vector.load %arg1[%c0, %c0_1, %c0_2] : memref<9x16x48xbf16, #tpu.memory_space<vmem>>, vector<1x16x48xbf16>
    %6 = vector.shape_cast %5 : vector<1x16x48xbf16> to vector<16x48xbf16>
    %c0_3 = arith.constant 0 : index
    %c0_4 = arith.constant 0 : index
    %7 = vector.load %arg5[%c0_3, %c0_4] : memref<48x384xbf16, #tpu.memory_space<vmem>>, vector<48x256xbf16>
    %cst_5 = arith.constant dense<0.000000e+00> : vector<16x256xf32>
    %8 = tpu.matmul %6, %7, %cst_5 {dimension_numbers = #tpu.dot_dimension_numbers<[1], [0], [0], [1], [0, 0, 1, 1], [], []>} : vector<16x48xbf16>, vector<48x256xbf16>, vector<16x256xf32> -> vector<16x256xf32>
    %9 = arith.addf %4, %8 : vector<16x256xf32>
    %c1 = arith.constant 1 : index
    %c0_6 = arith.constant 0 : index
    %c0_7 = arith.constant 0 : index
    %10 = vector.load %arg1[%c1, %c0_6, %c0_7] : memref<9x16x48xbf16, #tpu.memory_space<vmem>>, vector<1x16x48xbf16>
    %11 = vector.shape_cast %10 : vector<1x16x48xbf16> to vector<16x48xbf16>
    %c0_8 = arith.constant 0 : index
    %c1_9 = arith.constant 1 : index
    %12 = vector.load %arg5[%c0_8, %c1_9] : memref<48x384xbf16, #tpu.memory_space<vmem>>, vector<48x256xbf16>
    %cst_10 = arith.constant dense<0.000000e+00> : vector<16x256xf32>
    %13 = tpu.matmul %11, %12, %cst_10 {dimension_numbers = #tpu.dot_dimension_numbers<[1], [0], [0], [1], [0, 0, 1, 1], [], []>} : vector<16x48xbf16>, vector<48x256xbf16>, vector<16x256xf32> -> vector<16x256xf32>
    %14 = arith.addf %9, %13 : vector<16x256xf32>
    %c2 = arith.constant 2 : index
    %c0_11 = arith.constant 0 : index
    %c0_12 = arith.constant 0 : index
    %15 = vector.load %arg1[%c2, %c0_11, %c0_12] : memref<9x16x48xbf16, #tpu.memory_space<vmem>>, vector<1x16x48xbf16>
    %16 = vector.shape_cast %15 : vector<1x16x48xbf16> to vector<16x48xbf16>
    %c0_13 = arith.constant 0 : index
    %c2_14 = arith.constant 2 : index
    %17 = vector.load %arg5[%c0_13, %c2_14] : memref<48x384xbf16, #tpu.memory_space<vmem>>, vector<48x256xbf16>
    %cst_15 = arith.constant dense<0.000000e+00> : vector<16x256xf32>
    %18 = tpu.matmul %16, %17, %cst_15 {dimension_numbers = #tpu.dot_dimension_numbers<[1], [0], [0], [1], [0, 0, 1, 1], [], []>} : vector<16x48xbf16>, vector<48x256xbf16>, vector<16x256xf32> -> vector<16x256xf32>
    %19 = arith.addf %14, %18 : vector<16x256xf32>
    %c3 = arith.constant 3 : index
    %c0_16 = arith.constant 0 : index
    %c0_17 = arith.constant 0 : index
    %20 = vector.load %arg1[%c3, %c0_16, %c0_17] : memref<9x16x48xbf16, #tpu.memory_space<vmem>>, vector<1x16x48xbf16>
    %21 = vector.shape_cast %20 : vector<1x16x48xbf16> to vector<16x48xbf16>
    %c0_18 = arith.constant 0 : index
    %c19 = arith.constant 19 : index
    %22 = vector.load %arg5[%c0_18, %c19] : memref<48x384xbf16, #tpu.memory_space<vmem>>, vector<48x256xbf16>
    %cst_19 = arith.constant dense<0.000000e+00> : vector<16x256xf32>
    %23 = tpu.matmul %21, %22, %cst_19 {dimension_numbers = #tpu.dot_dimension_numbers<[1], [0], [0], [1], [0, 0, 1, 1], [], []>} : vector<16x48xbf16>, vector<48x256xbf16>, vector<16x256xf32> -> vector<16x256xf32>
    %24 = arith.addf %19, %23 : vector<16x256xf32>
    %c4 = arith.constant 4 : index
    %c0_20 = arith.constant 0 : index
    %c0_21 = arith.constant 0 : index
    %25 = vector.load %arg1[%c4, %c0_20, %c0_21] : memref<9x16x48xbf16, #tpu.memory_space<vmem>>, vector<1x16x48xbf16>
    %26 = vector.shape_cast %25 : vector<1x16x48xbf16> to vector<16x48xbf16>
    %c0_22 = arith.constant 0 : index
    %c20 = arith.constant 20 : index
    %27 = vector.load %arg5[%c0_22, %c20] : memref<48x384xbf16, #tpu.memory_space<vmem>>, vector<48x256xbf16>
    %cst_23 = arith.constant dense<0.000000e+00> : vector<16x256xf32>
    %28 = tpu.matmul %26, %27, %cst_23 {dimension_numbers = #tpu.dot_dimension_numbers<[1], [0], [0], [1], [0, 0, 1, 1], [], []>} : vector<16x48xbf16>, vector<48x256xbf16>, vector<16x256xf32> -> vector<16x256xf32>
    %29 = arith.addf %24, %28 : vector<16x256xf32>
    %c5 = arith.constant 5 : index
    %c0_24 = arith.constant 0 : index
    %c0_25 = arith.constant 0 : index
    %30 = vector.load %arg1[%c5, %c0_24, %c0_25] : memref<9x16x48xbf16, #tpu.memory_space<vmem>>, vector<1x16x48xbf16>
    %31 = vector.shape_cast %30 : vector<1x16x48xbf16> to vector<16x48xbf16>
    %c0_26 = arith.constant 0 : index
    %c21 = arith.constant 21 : index
    %32 = vector.load %arg5[%c0_26, %c21] : memref<48x384xbf16, #tpu.memory_space<vmem>>, vector<48x256xbf16>
    %cst_27 = arith.constant dense<0.000000e+00> : vector<16x256xf32>
    %33 = tpu.matmul %31, %32, %cst_27 {dimension_numbers = #tpu.dot_dimension_numbers<[1], [0], [0], [1], [0, 0, 1, 1], [], []>} : vector<16x48xbf16>, vector<48x256xbf16>, vector<16x256xf32> -> vector<16x256xf32>
    %34 = arith.addf %29, %33 : vector<16x256xf32>
    %c6 = arith.constant 6 : index
    %c0_28 = arith.constant 0 : index
    %c0_29 = arith.constant 0 : index
    %35 = vector.load %arg1[%c6, %c0_28, %c0_29] : memref<9x16x48xbf16, #tpu.memory_space<vmem>>, vector<1x16x48xbf16>
    %36 = vector.shape_cast %35 : vector<1x16x48xbf16> to vector<16x48xbf16>
    %c0_30 = arith.constant 0 : index
    %c38 = arith.constant 38 : index
    %37 = vector.load %arg5[%c0_30, %c38] : memref<48x384xbf16, #tpu.memory_space<vmem>>, vector<48x256xbf16>
    %cst_31 = arith.constant dense<0.000000e+00> : vector<16x256xf32>
    %38 = tpu.matmul %36, %37, %cst_31 {dimension_numbers = #tpu.dot_dimension_numbers<[1], [0], [0], [1], [0, 0, 1, 1], [], []>} : vector<16x48xbf16>, vector<48x256xbf16>, vector<16x256xf32> -> vector<16x256xf32>
    %39 = arith.addf %34, %38 : vector<16x256xf32>
    %c7 = arith.constant 7 : index
    %c0_32 = arith.constant 0 : index
    %c0_33 = arith.constant 0 : index
    %40 = vector.load %arg1[%c7, %c0_32, %c0_33] : memref<9x16x48xbf16, #tpu.memory_space<vmem>>, vector<1x16x48xbf16>
    %41 = vector.shape_cast %40 : vector<1x16x48xbf16> to vector<16x48xbf16>
    %c0_34 = arith.constant 0 : index
    %c39 = arith.constant 39 : index
    %42 = vector.load %arg5[%c0_34, %c39] : memref<48x384xbf16, #tpu.memory_space<vmem>>, vector<48x256xbf16>
    %cst_35 = arith.constant dense<0.000000e+00> : vector<16x256xf32>
    %43 = tpu.matmul %41, %42, %cst_35 {dimension_numbers = #tpu.dot_dimension_numbers<[1], [0], [0], [1], [0, 0, 1, 1], [], []>} : vector<16x48xbf16>, vector<48x256xbf16>, vector<16x256xf32> -> vector<16x256xf32>
    %44 = arith.addf %39, %43 : vector<16x256xf32>
    %c8 = arith.constant 8 : index
    %c0_36 = arith.constant 0 : index
    %c0_37 = arith.constant 0 : index
    %45 = vector.load %arg1[%c8, %c0_36, %c0_37] : memref<9x16x48xbf16, #tpu.memory_space<vmem>>, vector<1x16x48xbf16>
    %46 = vector.shape_cast %45 : vector<1x16x48xbf16> to vector<16x48xbf16>
    %c0_38 = arith.constant 0 : index
    %c40 = arith.constant 40 : index
    %47 = vector.load %arg5[%c0_38, %c40] : memref<48x384xbf16, #tpu.memory_space<vmem>>, vector<48x256xbf16>
    %cst_39 = arith.constant dense<0.000000e+00> : vector<16x256xf32>
    %48 = tpu.matmul %46, %47, %cst_39 {dimension_numbers = #tpu.dot_dimension_numbers<[1], [0], [0], [1], [0, 0, 1, 1], [], []>} : vector<16x48xbf16>, vector<48x256xbf16>, vector<16x256xf32> -> vector<16x256xf32>
    %49 = arith.addf %44, %48 : vector<16x256xf32>
    %c0_40 = arith.constant 0 : index
    %c0_41 = arith.constant 0 : index
    %50 = vector.load %arg2[%c0_40, %c0_41] : memref<16x1xf32, #tpu.memory_space<vmem>>, vector<16x1xf32>
    %51 = vector.broadcast %50 : vector<16x1xf32> to vector<16x256xf32>
    %52 = arith.addf %49, %51 : vector<16x256xf32>
    %cst_42 = arith.constant 0.000000e+00 : f32
    %53 = vector.broadcast %cst_42 : f32 to vector<16x256xf32>
    %54 = arith.maximumf %52, %53 : vector<16x256xf32>
    %55 = arith.truncf %54 : vector<16x256xf32> to vector<16x256xbf16>
    %c0_43 = arith.constant 0 : index
    %c0_44 = arith.constant 0 : index
    %56 = vector.load %arg4[%c0_43, %c0_44] : memref<16x256xbf16, #tpu.memory_space<vmem>>, vector<16x256xbf16>
    tpu.vector_store %arg4[%c0_43, %c0_44], %55 {strides = array<i32>} : memref<16x256xbf16, #tpu.memory_space<vmem>>, vector<16x256xbf16>,
    return
  }
  func.func @transform_0(%arg0: i32) -> (i32, i32, i32) {
    %c0_i32 = arith.constant 0 : i32
    %c0_i32_0 = arith.constant 0 : i32
    %c0_i32_1 = arith.constant 0 : i32
    %c0_i32_2 = arith.constant 0 : i32
    return %c0_i32, %c0_i32_0, %c0_i32_1 : i32, i32, i32
  }
  func.func @transform_1(%arg0: i32) -> (i32, i32) {
    %c0_i32 = arith.constant 0 : i32
    %c0_i32_0 = arith.constant 0 : i32
    %c0_i32_1 = arith.constant 0 : i32
    return %c0_i32, %c0_i32_0 : i32, i32
  }
  func.func @transform_3(%arg0: i32) -> (i32, i32) {
    %c0_i32 = arith.constant 0 : i32
    %c0_i32_0 = arith.constant 0 : i32
    return %c0_i32, %arg0 : i32, i32
  }
}

module attributes {stable_mosaic.version = 11 : i64} {
  func.func @_fused_conv_kernel(%arg0: i32, %arg1: memref<9x32x64xbf16, #tpu.memory_space<vmem>>, %arg2: memref<32x1xf32, #tpu.memory_space<vmem>>, %arg3: memref<64x256xbf16, #tpu.memory_space<any>>, %arg4: memref<32x128xbf16, #tpu.memory_space<vmem>>, %arg5: memref<64x256xbf16, #tpu.memory_space<vmem>>, %arg6: memref<!tpu.dma_semaphore, #tpu.memory_space<semaphore_mem>>) attributes {dimension_semantics = [#tpu.dimension_semantics<parallel>], iteration_bounds = array<i64: 1>, scalar_prefetch = 0 : i64, scratch_operands = 2 : i64, tpu.core_type = #tpu.core_type<tc>, window_params = [{pipeline_mode = #tpu.pipeline_mode<synchronous>, transform_indices = @transform_0, window_bounds = array<i64: 9, 32, 64>}, {pipeline_mode = #tpu.pipeline_mode<synchronous>, transform_indices = @transform_1, window_bounds = array<i64: 32, 1>}, {}, {transform_indices = @transform_3, window_bounds = array<i64: 32, 128>}]} {
    %c128_i32 = arith.constant 128 : i32
    %0 = arith.muli %arg0, %c128_i32 : i32
    %1 = tpu.assume_multiple %0, 128 : i32
    %c0_i32 = arith.constant 0 : i32
    %2 = tpu.memref_slice %arg3[%c0_i32, %1] : memref<64x256xbf16, #tpu.memory_space<any>> -> memref<64x256xbf16, #tpu.memory_space<any>>
    tpu.enqueue_dma source(%2 : memref<64x256xbf16, #tpu.memory_space<any>>) target(%arg5 : memref<64x256xbf16, #tpu.memory_space<vmem>>) target_semaphore(%arg6 : memref<!tpu.dma_semaphore, #tpu.memory_space<semaphore_mem>>)
    %c0_i32_0 = arith.constant 0 : i32
    %3 = tpu.memref_slice %arg3[%c0_i32_0, %1] : memref<64x256xbf16, #tpu.memory_space<any>> -> memref<64x256xbf16, #tpu.memory_space<any>>
    tpu.wait_dma2 semaphore(%arg6 : memref<!tpu.dma_semaphore, #tpu.memory_space<semaphore_mem>>) src(%3 : memref<64x256xbf16, #tpu.memory_space<any>>) dst(%arg5 : memref<64x256xbf16, #tpu.memory_space<vmem>>)
    %cst = arith.constant 0.000000e+00 : f32
    %4 = vector.broadcast %cst : f32 to vector<32x128xf32>
    %c0 = arith.constant 0 : index
    %c0_1 = arith.constant 0 : index
    %c0_2 = arith.constant 0 : index
    %5 = vector.load %arg1[%c0, %c0_1, %c0_2] : memref<9x32x64xbf16, #tpu.memory_space<vmem>>, vector<1x32x64xbf16>
    %6 = vector.shape_cast %5 : vector<1x32x64xbf16> to vector<32x64xbf16>
    %c0_3 = arith.constant 0 : index
    %c0_4 = arith.constant 0 : index
    %7 = vector.load %arg5[%c0_3, %c0_4] : memref<64x256xbf16, #tpu.memory_space<vmem>>, vector<64x128xbf16>
    %cst_5 = arith.constant dense<0.000000e+00> : vector<32x128xf32>
    %8 = tpu.matmul %6, %7, %cst_5 {dimension_numbers = #tpu.dot_dimension_numbers<[1], [0], [0], [1], [0, 0, 1, 1], [], []>} : vector<32x64xbf16>, vector<64x128xbf16>, vector<32x128xf32> -> vector<32x128xf32>
    %9 = arith.addf %4, %8 : vector<32x128xf32>
    %c1 = arith.constant 1 : index
    %c0_6 = arith.constant 0 : index
    %c0_7 = arith.constant 0 : index
    %10 = vector.load %arg1[%c1, %c0_6, %c0_7] : memref<9x32x64xbf16, #tpu.memory_space<vmem>>, vector<1x32x64xbf16>
    %11 = vector.shape_cast %10 : vector<1x32x64xbf16> to vector<32x64xbf16>
    %c0_8 = arith.constant 0 : index
    %c1_9 = arith.constant 1 : index
    %12 = vector.load %arg5[%c0_8, %c1_9] : memref<64x256xbf16, #tpu.memory_space<vmem>>, vector<64x128xbf16>
    %cst_10 = arith.constant dense<0.000000e+00> : vector<32x128xf32>
    %13 = tpu.matmul %11, %12, %cst_10 {dimension_numbers = #tpu.dot_dimension_numbers<[1], [0], [0], [1], [0, 0, 1, 1], [], []>} : vector<32x64xbf16>, vector<64x128xbf16>, vector<32x128xf32> -> vector<32x128xf32>
    %14 = arith.addf %9, %13 : vector<32x128xf32>
    %c2 = arith.constant 2 : index
    %c0_11 = arith.constant 0 : index
    %c0_12 = arith.constant 0 : index
    %15 = vector.load %arg1[%c2, %c0_11, %c0_12] : memref<9x32x64xbf16, #tpu.memory_space<vmem>>, vector<1x32x64xbf16>
    %16 = vector.shape_cast %15 : vector<1x32x64xbf16> to vector<32x64xbf16>
    %c0_13 = arith.constant 0 : index
    %c2_14 = arith.constant 2 : index
    %17 = vector.load %arg5[%c0_13, %c2_14] : memref<64x256xbf16, #tpu.memory_space<vmem>>, vector<64x128xbf16>
    %cst_15 = arith.constant dense<0.000000e+00> : vector<32x128xf32>
    %18 = tpu.matmul %16, %17, %cst_15 {dimension_numbers = #tpu.dot_dimension_numbers<[1], [0], [0], [1], [0, 0, 1, 1], [], []>} : vector<32x64xbf16>, vector<64x128xbf16>, vector<32x128xf32> -> vector<32x128xf32>
    %19 = arith.addf %14, %18 : vector<32x128xf32>
    %c3 = arith.constant 3 : index
    %c0_16 = arith.constant 0 : index
    %c0_17 = arith.constant 0 : index
    %20 = vector.load %arg1[%c3, %c0_16, %c0_17] : memref<9x32x64xbf16, #tpu.memory_space<vmem>>, vector<1x32x64xbf16>
    %21 = vector.shape_cast %20 : vector<1x32x64xbf16> to vector<32x64xbf16>
    %c0_18 = arith.constant 0 : index
    %c11 = arith.constant 11 : index
    %22 = vector.load %arg5[%c0_18, %c11] : memref<64x256xbf16, #tpu.memory_space<vmem>>, vector<64x128xbf16>
    %cst_19 = arith.constant dense<0.000000e+00> : vector<32x128xf32>
    %23 = tpu.matmul %21, %22, %cst_19 {dimension_numbers = #tpu.dot_dimension_numbers<[1], [0], [0], [1], [0, 0, 1, 1], [], []>} : vector<32x64xbf16>, vector<64x128xbf16>, vector<32x128xf32> -> vector<32x128xf32>
    %24 = arith.addf %19, %23 : vector<32x128xf32>
    %c4 = arith.constant 4 : index
    %c0_20 = arith.constant 0 : index
    %c0_21 = arith.constant 0 : index
    %25 = vector.load %arg1[%c4, %c0_20, %c0_21] : memref<9x32x64xbf16, #tpu.memory_space<vmem>>, vector<1x32x64xbf16>
    %26 = vector.shape_cast %25 : vector<1x32x64xbf16> to vector<32x64xbf16>
    %c0_22 = arith.constant 0 : index
    %c12 = arith.constant 12 : index
    %27 = vector.load %arg5[%c0_22, %c12] : memref<64x256xbf16, #tpu.memory_space<vmem>>, vector<64x128xbf16>
    %cst_23 = arith.constant dense<0.000000e+00> : vector<32x128xf32>
    %28 = tpu.matmul %26, %27, %cst_23 {dimension_numbers = #tpu.dot_dimension_numbers<[1], [0], [0], [1], [0, 0, 1, 1], [], []>} : vector<32x64xbf16>, vector<64x128xbf16>, vector<32x128xf32> -> vector<32x128xf32>
    %29 = arith.addf %24, %28 : vector<32x128xf32>
    %c5 = arith.constant 5 : index
    %c0_24 = arith.constant 0 : index
    %c0_25 = arith.constant 0 : index
    %30 = vector.load %arg1[%c5, %c0_24, %c0_25] : memref<9x32x64xbf16, #tpu.memory_space<vmem>>, vector<1x32x64xbf16>
    %31 = vector.shape_cast %30 : vector<1x32x64xbf16> to vector<32x64xbf16>
    %c0_26 = arith.constant 0 : index
    %c13 = arith.constant 13 : index
    %32 = vector.load %arg5[%c0_26, %c13] : memref<64x256xbf16, #tpu.memory_space<vmem>>, vector<64x128xbf16>
    %cst_27 = arith.constant dense<0.000000e+00> : vector<32x128xf32>
    %33 = tpu.matmul %31, %32, %cst_27 {dimension_numbers = #tpu.dot_dimension_numbers<[1], [0], [0], [1], [0, 0, 1, 1], [], []>} : vector<32x64xbf16>, vector<64x128xbf16>, vector<32x128xf32> -> vector<32x128xf32>
    %34 = arith.addf %29, %33 : vector<32x128xf32>
    %c6 = arith.constant 6 : index
    %c0_28 = arith.constant 0 : index
    %c0_29 = arith.constant 0 : index
    %35 = vector.load %arg1[%c6, %c0_28, %c0_29] : memref<9x32x64xbf16, #tpu.memory_space<vmem>>, vector<1x32x64xbf16>
    %36 = vector.shape_cast %35 : vector<1x32x64xbf16> to vector<32x64xbf16>
    %c0_30 = arith.constant 0 : index
    %c22 = arith.constant 22 : index
    %37 = vector.load %arg5[%c0_30, %c22] : memref<64x256xbf16, #tpu.memory_space<vmem>>, vector<64x128xbf16>
    %cst_31 = arith.constant dense<0.000000e+00> : vector<32x128xf32>
    %38 = tpu.matmul %36, %37, %cst_31 {dimension_numbers = #tpu.dot_dimension_numbers<[1], [0], [0], [1], [0, 0, 1, 1], [], []>} : vector<32x64xbf16>, vector<64x128xbf16>, vector<32x128xf32> -> vector<32x128xf32>
    %39 = arith.addf %34, %38 : vector<32x128xf32>
    %c7 = arith.constant 7 : index
    %c0_32 = arith.constant 0 : index
    %c0_33 = arith.constant 0 : index
    %40 = vector.load %arg1[%c7, %c0_32, %c0_33] : memref<9x32x64xbf16, #tpu.memory_space<vmem>>, vector<1x32x64xbf16>
    %41 = vector.shape_cast %40 : vector<1x32x64xbf16> to vector<32x64xbf16>
    %c0_34 = arith.constant 0 : index
    %c23 = arith.constant 23 : index
    %42 = vector.load %arg5[%c0_34, %c23] : memref<64x256xbf16, #tpu.memory_space<vmem>>, vector<64x128xbf16>
    %cst_35 = arith.constant dense<0.000000e+00> : vector<32x128xf32>
    %43 = tpu.matmul %41, %42, %cst_35 {dimension_numbers = #tpu.dot_dimension_numbers<[1], [0], [0], [1], [0, 0, 1, 1], [], []>} : vector<32x64xbf16>, vector<64x128xbf16>, vector<32x128xf32> -> vector<32x128xf32>
    %44 = arith.addf %39, %43 : vector<32x128xf32>
    %c8 = arith.constant 8 : index
    %c0_36 = arith.constant 0 : index
    %c0_37 = arith.constant 0 : index
    %45 = vector.load %arg1[%c8, %c0_36, %c0_37] : memref<9x32x64xbf16, #tpu.memory_space<vmem>>, vector<1x32x64xbf16>
    %46 = vector.shape_cast %45 : vector<1x32x64xbf16> to vector<32x64xbf16>
    %c0_38 = arith.constant 0 : index
    %c24 = arith.constant 24 : index
    %47 = vector.load %arg5[%c0_38, %c24] : memref<64x256xbf16, #tpu.memory_space<vmem>>, vector<64x128xbf16>
    %cst_39 = arith.constant dense<0.000000e+00> : vector<32x128xf32>
    %48 = tpu.matmul %46, %47, %cst_39 {dimension_numbers = #tpu.dot_dimension_numbers<[1], [0], [0], [1], [0, 0, 1, 1], [], []>} : vector<32x64xbf16>, vector<64x128xbf16>, vector<32x128xf32> -> vector<32x128xf32>
    %49 = arith.addf %44, %48 : vector<32x128xf32>
    %c0_40 = arith.constant 0 : index
    %c0_41 = arith.constant 0 : index
    %50 = vector.load %arg2[%c0_40, %c0_41] : memref<32x1xf32, #tpu.memory_space<vmem>>, vector<32x1xf32>
    %51 = vector.broadcast %50 : vector<32x1xf32> to vector<32x128xf32>
    %52 = arith.addf %49, %51 : vector<32x128xf32>
    %cst_42 = arith.constant 0.000000e+00 : f32
    %53 = vector.broadcast %cst_42 : f32 to vector<32x128xf32>
    %54 = arith.maximumf %52, %53 : vector<32x128xf32>
    %55 = arith.truncf %54 : vector<32x128xf32> to vector<32x128xbf16>
    %c0_43 = arith.constant 0 : index
    %c0_44 = arith.constant 0 : index
    %56 = vector.load %arg4[%c0_43, %c0_44] : memref<32x128xbf16, #tpu.memory_space<vmem>>, vector<32x128xbf16>
    tpu.vector_store %arg4[%c0_43, %c0_44], %55 {strides = array<i32>} : memref<32x128xbf16, #tpu.memory_space<vmem>>, vector<32x128xbf16>,
    return
  }
  func.func @transform_0(%arg0: i32) -> (i32, i32, i32) {
    %c0_i32 = arith.constant 0 : i32
    %c0_i32_0 = arith.constant 0 : i32
    %c0_i32_1 = arith.constant 0 : i32
    %c0_i32_2 = arith.constant 0 : i32
    return %c0_i32, %c0_i32_0, %c0_i32_1 : i32, i32, i32
  }
  func.func @transform_1(%arg0: i32) -> (i32, i32) {
    %c0_i32 = arith.constant 0 : i32
    %c0_i32_0 = arith.constant 0 : i32
    %c0_i32_1 = arith.constant 0 : i32
    return %c0_i32, %c0_i32_0 : i32, i32
  }
  func.func @transform_3(%arg0: i32) -> (i32, i32) {
    %c0_i32 = arith.constant 0 : i32
    %c0_i32_0 = arith.constant 0 : i32
    return %c0_i32, %arg0 : i32, i32
  }
}

module attributes {stable_mosaic.version = 11 : i64} {
  func.func @_fused_conv_kernel(%arg0: i32, %arg1: memref<4x3x128xbf16, #tpu.memory_space<vmem>>, %arg2: memref<3x1xf32, #tpu.memory_space<vmem>>, %arg3: memref<128x256xbf16, #tpu.memory_space<any>>, %arg4: memref<3x128xf32, #tpu.memory_space<vmem>>, %arg5: memref<128x256xbf16, #tpu.memory_space<vmem>>, %arg6: memref<!tpu.dma_semaphore, #tpu.memory_space<semaphore_mem>>) attributes {dimension_semantics = [#tpu.dimension_semantics<parallel>], iteration_bounds = array<i64: 1>, scalar_prefetch = 0 : i64, scratch_operands = 2 : i64, tpu.core_type = #tpu.core_type<tc>, window_params = [{pipeline_mode = #tpu.pipeline_mode<synchronous>, transform_indices = @transform_0, window_bounds = array<i64: 4, 3, 128>}, {pipeline_mode = #tpu.pipeline_mode<synchronous>, transform_indices = @transform_1, window_bounds = array<i64: 3, 1>}, {}, {transform_indices = @transform_3, window_bounds = array<i64: 3, 128>}]} {
    %c128_i32 = arith.constant 128 : i32
    %0 = arith.muli %arg0, %c128_i32 : i32
    %1 = tpu.assume_multiple %0, 128 : i32
    %c0_i32 = arith.constant 0 : i32
    %2 = tpu.memref_slice %arg3[%c0_i32, %1] : memref<128x256xbf16, #tpu.memory_space<any>> -> memref<128x256xbf16, #tpu.memory_space<any>>
    tpu.enqueue_dma source(%2 : memref<128x256xbf16, #tpu.memory_space<any>>) target(%arg5 : memref<128x256xbf16, #tpu.memory_space<vmem>>) target_semaphore(%arg6 : memref<!tpu.dma_semaphore, #tpu.memory_space<semaphore_mem>>)
    %c0_i32_0 = arith.constant 0 : i32
    %3 = tpu.memref_slice %arg3[%c0_i32_0, %1] : memref<128x256xbf16, #tpu.memory_space<any>> -> memref<128x256xbf16, #tpu.memory_space<any>>
    tpu.wait_dma2 semaphore(%arg6 : memref<!tpu.dma_semaphore, #tpu.memory_space<semaphore_mem>>) src(%3 : memref<128x256xbf16, #tpu.memory_space<any>>) dst(%arg5 : memref<128x256xbf16, #tpu.memory_space<vmem>>)
    %cst = arith.constant 0.000000e+00 : f32
    %4 = vector.broadcast %cst : f32 to vector<3x128xf32>
    %c0 = arith.constant 0 : index
    %c0_1 = arith.constant 0 : index
    %c0_2 = arith.constant 0 : index
    %5 = vector.load %arg1[%c0, %c0_1, %c0_2] : memref<4x3x128xbf16, #tpu.memory_space<vmem>>, vector<1x3x128xbf16>
    %6 = vector.shape_cast %5 : vector<1x3x128xbf16> to vector<3x128xbf16>
    %c0_3 = arith.constant 0 : index
    %c0_4 = arith.constant 0 : index
    %7 = vector.load %arg5[%c0_3, %c0_4] : memref<128x256xbf16, #tpu.memory_space<vmem>>, vector<128x128xbf16>
    %cst_5 = arith.constant dense<0.000000e+00> : vector<3x128xf32>
    %8 = tpu.matmul %6, %7, %cst_5 {dimension_numbers = #tpu.dot_dimension_numbers<[1], [0], [0], [1], [0, 0, 1, 1], [], []>} : vector<3x128xbf16>, vector<128x128xbf16>, vector<3x128xf32> -> vector<3x128xf32>
    %9 = arith.addf %4, %8 : vector<3x128xf32>
    %c1 = arith.constant 1 : index
    %c0_6 = arith.constant 0 : index
    %c0_7 = arith.constant 0 : index
    %10 = vector.load %arg1[%c1, %c0_6, %c0_7] : memref<4x3x128xbf16, #tpu.memory_space<vmem>>, vector<1x3x128xbf16>
    %11 = vector.shape_cast %10 : vector<1x3x128xbf16> to vector<3x128xbf16>
    %c0_8 = arith.constant 0 : index
    %c1_9 = arith.constant 1 : index
    %12 = vector.load %arg5[%c0_8, %c1_9] : memref<128x256xbf16, #tpu.memory_space<vmem>>, vector<128x128xbf16>
    %cst_10 = arith.constant dense<0.000000e+00> : vector<3x128xf32>
    %13 = tpu.matmul %11, %12, %cst_10 {dimension_numbers = #tpu.dot_dimension_numbers<[1], [0], [0], [1], [0, 0, 1, 1], [], []>} : vector<3x128xbf16>, vector<128x128xbf16>, vector<3x128xf32> -> vector<3x128xf32>
    %14 = arith.addf %9, %13 : vector<3x128xf32>
    %c2 = arith.constant 2 : index
    %c0_11 = arith.constant 0 : index
    %c0_12 = arith.constant 0 : index
    %15 = vector.load %arg1[%c2, %c0_11, %c0_12] : memref<4x3x128xbf16, #tpu.memory_space<vmem>>, vector<1x3x128xbf16>
    %16 = vector.shape_cast %15 : vector<1x3x128xbf16> to vector<3x128xbf16>
    %c0_13 = arith.constant 0 : index
    %c6 = arith.constant 6 : index
    %17 = vector.load %arg5[%c0_13, %c6] : memref<128x256xbf16, #tpu.memory_space<vmem>>, vector<128x128xbf16>
    %cst_14 = arith.constant dense<0.000000e+00> : vector<3x128xf32>
    %18 = tpu.matmul %16, %17, %cst_14 {dimension_numbers = #tpu.dot_dimension_numbers<[1], [0], [0], [1], [0, 0, 1, 1], [], []>} : vector<3x128xbf16>, vector<128x128xbf16>, vector<3x128xf32> -> vector<3x128xf32>
    %19 = arith.addf %14, %18 : vector<3x128xf32>
    %c3 = arith.constant 3 : index
    %c0_15 = arith.constant 0 : index
    %c0_16 = arith.constant 0 : index
    %20 = vector.load %arg1[%c3, %c0_15, %c0_16] : memref<4x3x128xbf16, #tpu.memory_space<vmem>>, vector<1x3x128xbf16>
    %21 = vector.shape_cast %20 : vector<1x3x128xbf16> to vector<3x128xbf16>
    %c0_17 = arith.constant 0 : index
    %c7 = arith.constant 7 : index
    %22 = vector.load %arg5[%c0_17, %c7] : memref<128x256xbf16, #tpu.memory_space<vmem>>, vector<128x128xbf16>
    %cst_18 = arith.constant dense<0.000000e+00> : vector<3x128xf32>
    %23 = tpu.matmul %21, %22, %cst_18 {dimension_numbers = #tpu.dot_dimension_numbers<[1], [0], [0], [1], [0, 0, 1, 1], [], []>} : vector<3x128xbf16>, vector<128x128xbf16>, vector<3x128xf32> -> vector<3x128xf32>
    %24 = arith.addf %19, %23 : vector<3x128xf32>
    %c0_19 = arith.constant 0 : index
    %c0_20 = arith.constant 0 : index
    %25 = vector.load %arg2[%c0_19, %c0_20] : memref<3x1xf32, #tpu.memory_space<vmem>>, vector<3x1xf32>
    %26 = vector.broadcast %25 : vector<3x1xf32> to vector<3x128xf32>
    %27 = arith.addf %24, %26 : vector<3x128xf32>
    %cst_21 = arith.constant 0.000000e+00 : f32
    %28 = vector.broadcast %cst_21 : f32 to vector<3x128xf32>
    %29 = arith.maximumf %27, %28 : vector<3x128xf32>
    %c0_22 = arith.constant 0 : index
    %c0_23 = arith.constant 0 : index
    %30 = vector.load %arg4[%c0_22, %c0_23] : memref<3x128xf32, #tpu.memory_space<vmem>>, vector<3x128xf32>
    tpu.vector_store %arg4[%c0_22, %c0_23], %29 {strides = array<i32>} : memref<3x128xf32, #tpu.memory_space<vmem>>, vector<3x128xf32>,
    return
  }
  func.func @transform_0(%arg0: i32) -> (i32, i32, i32) {
    %c0_i32 = arith.constant 0 : i32
    %c0_i32_0 = arith.constant 0 : i32
    %c0_i32_1 = arith.constant 0 : i32
    %c0_i32_2 = arith.constant 0 : i32
    return %c0_i32, %c0_i32_0, %c0_i32_1 : i32, i32, i32
  }
  func.func @transform_1(%arg0: i32) -> (i32, i32) {
    %c0_i32 = arith.constant 0 : i32
    %c0_i32_0 = arith.constant 0 : i32
    %c0_i32_1 = arith.constant 0 : i32
    return %c0_i32, %c0_i32_0 : i32, i32
  }
  func.func @transform_3(%arg0: i32) -> (i32, i32) {
    %c0_i32 = arith.constant 0 : i32
    %c0_i32_0 = arith.constant 0 : i32
    return %c0_i32, %arg0 : i32, i32
  }
}

</mosaic_0001>

<llo_original>
// kernel: _device_forward.3
$region0: #{_device_forward.3}
  #allocation0 [shape = 'u32[]', space=smem, size = 0x4, offset = 0x4, fixed_abs, tag = 'smem constant byte address 0x4 - core index']
  #allocation1 [shape = 'u32[144,128]{1,0:T(1,128)}', space=vmem, size = 0x12000, scoped, tag = 'internal scratch']
  #allocation2 [shape = 'bf16[48,384]{1,0:T(16,128)(2,1)}', space=vmem, size = 0x9000, scoped, tag = 'scratch operand']
  #allocation3 [shape = 's32[1]{0}', space=sflag, size = 0x4, scoped, tag = 'scratch operand']
  #allocation5 [shape = 's32[]', space=sflag, size = 0x4, offset = 0, fixed_abs, tag = 'sflag constant byte address 0x0 - dummy sync flag']
  %s0 = inlined_call_operand.vmem [shape: bf16[9,16,48], index: 0, kind: input, shape index: {}]
  %s1 = inlined_call_operand.vmem [shape: f32[16,1], index: 1, kind: input, shape index: {}]
  %s2 = inlined_call_operand.vmem [shape: bf16[48,640], index: 2, kind: input, shape index: {}]
  %s3 = inlined_call_operand.vmem [shape: bf16[16,512], index: 3, kind: output, shape index: {}]
  %s4 = sld [smem:[#allocation0]]
  $region112: #{_device_forward.3} parent=0
    _
  %s6 = ssub.s32 1, %s4
  %s7 = scalar_select 0, %s6, %s4
  $region1: #{_device_forward.3} parent=0
    #allocation4 [shape = 'u8[16384]{0}', space=vmem, size = 0x4000, scoped, tag = 'output window, operand 0']
    loop: start=0, step=1, limit=4
    $region2: #{_device_forward.3} parent=1 // loop_pre_header
      _
    $region3: #{_device_forward.3} parent=1 // loop_header
      %s9 = sphi 0, %s13
      %p10 = scmp.ge.s32.totalorder %s9, 4
      %s17 = sphi 0, %s17
      %s19 = sphi 0, %s17
      %s20 = sphi 0, %s19
      %s34 = sphi 0, %s20
      %s38 = sphi 0, %s38
      %s40 = sphi 0, %s38
      %s41 = sphi 0, %s40
      %s55 = sphi 0, %s41
      %s61 = sphi 0, %s63
      %s64 = sphi 0, %s61
      %s65 = sphi 0, %s64
      %s81 = sphi 0, %s65
    $region4: #{_device_forward.3} parent=1 // loop_header_branch
      %12 = sbr.rel (%p10) target = $region8
    $region5: #{_device_forward.3} parent=1 // loop_body
      %s14 = ssub.s32 %s9, 1
      %s15 = ssub.s32 %s9, 2
      %s16 = sadd.s32 %s9, 1
      %s18 = sadd.s32 %s17, 1
      %p21 = scmp.eq.s32.totalorder %s9, 1
      %p22 = scmp.ne.s32.totalorder %s17, %s19
      %p23 = scmp.eq.s32.totalorder %s9, 0
      %p24 = por %p22, %p23
      %p25 = scmp.ne.s32.totalorder %s17, %s19
      %p26 = scmp.eq.s32.totalorder %s14, 1
      %p27 = por %p25, %p26
      %p28 = scmp.ne.s32.totalorder %s19, %s20
      %p29 = scmp.eq.s32.totalorder %s14, 0
      %p30 = por %p28, %p29
      %p31 = scmp.ne.s32.totalorder %s19, %s20
      %p32 = scmp.eq.s32.totalorder %s15, 1
      %p33 = por %p31, %p32
      %p35 = scmp.ne.s32.totalorder %s20, %s34
      %p36 = scmp.eq.s32.totalorder %s15, 0
      %p37 = por %p35, %p36
      %s39 = sadd.s32 %s38, 1
      %p42 = scmp.eq.s32.totalorder %s9, 1
      %p43 = scmp.ne.s32.totalorder %s38, %s40
      %p44 = scmp.eq.s32.totalorder %s9, 0
      %p45 = por %p43, %p44
      %p46 = scmp.ne.s32.totalorder %s38, %s40
      %p47 = scmp.eq.s32.totalorder %s14, 1
      %p48 = por %p46, %p47
      %p49 = scmp.ne.s32.totalorder %s40, %s41
      %p50 = scmp.eq.s32.totalorder %s14, 0
      %p51 = por %p49, %p50
      %p52 = scmp.ne.s32.totalorder %s40, %s41
      %p53 = scmp.eq.s32.totalorder %s15, 1
      %p54 = por %p52, %p53
      %p56 = scmp.ne.s32.totalorder %s41, %s55
      %p57 = scmp.eq.s32.totalorder %s15, 0
      %p58 = por %p56, %p57
      %s59 = ssub.s32 %s9, %s16
      %p60 = scmp.eq.s32.totalorder %s59, 0
      %s62 = sadd.s32 %s61, 1
      %s63 = scalar_select %p60, %s61, %s62
      %p66 = pneg %p60
      %p67 = scmp.eq.s32.totalorder %s9, 1
      %p68 = por %p66, %p67
      %p69 = scmp.ne.s32.totalorder %s61, %s64
      %p70 = scmp.eq.s32.totalorder %s9, 0
      %p71 = por %p69, %p70
      %p72 = scmp.ne.s32.totalorder %s61, %s64
      %p73 = scmp.eq.s32.totalorder %s14, 1
      %p74 = por %p72, %p73
      %p75 = scmp.ne.s32.totalorder %s64, %s65
      %p76 = scmp.eq.s32.totalorder %s14, 0
      %p77 = por %p75, %p76
      %p78 = scmp.ne.s32.totalorder %s64, %s65
      %p79 = scmp.eq.s32.totalorder %s15, 1
      %p80 = por %p78, %p79
      %p82 = scmp.ne.s32.totalorder %s65, %s81
      %p83 = scmp.eq.s32.totalorder %s15, 0
      %p84 = por %p82, %p83
      %p85 = scmp.le.s32.totalorder 1, %s9
      %p86 = scmp.lt.s32.totalorder %s9, 3
      %p87 = pnand %p85, %p86
      %p88 = pneg %p87
      // Predicated region
      $region9: #{_device_forward.3} parent=5 // pred_check
        _
      $region10: #{_device_forward.3} parent=5 // pred_check_branch
        %90 = sbr.rel (%p87) target = $region12
      $region11: #{_device_forward.3} parent=5 // pred_region
        %s91 = ssub.s32 %s9, 1
        // Predicated region
        $region13: #{_device_forward.3} parent=11 // pred_check
          %p92 = pneg %p30
        $region14: #{_device_forward.3} parent=11 // pred_check_branch
          %94 = sbr.rel (%p92) target = $region16
        $region15: #{_device_forward.3} parent=11 // pred_region
          _
        $region16: #{_device_forward.3} parent=11 // pred_fallthru
          _
        // Predicated region
        $region17: #{_device_forward.3} parent=11 // pred_check
          %p95 = pneg %p51
        $region18: #{_device_forward.3} parent=11 // pred_check_branch
          %97 = sbr.rel (%p95) target = $region20
        $region19: #{_device_forward.3} parent=11 // pred_region
          _
        $region20: #{_device_forward.3} parent=11 // pred_fallthru
          _
      $region12: #{_device_forward.3} parent=5 // pred_fallthru
        _
      %p98 = scmp.lt.s32.totalorder %s9, 2
      // Predicated region
      $region21: #{_device_forward.3} parent=5 // pred_check
        %p99 = pneg %p98
      $region22: #{_device_forward.3} parent=5 // pred_check_branch
        %101 = sbr.rel (%p99) target = $region24
      $region23: #{_device_forward.3} parent=5 // pred_region
        _
      $region24: #{_device_forward.3} parent=5 // pred_fallthru
        _
      %p102 = scmp.le.s32.totalorder 1, %s9
      %p103 = scmp.lt.s32.totalorder %s9, 3
      %p104 = pnand %p102, %p103
      %p105 = pneg %p104
      // Predicated region
      $region25: #{_device_forward.3} parent=5 // pred_check
        _
      $region26: #{_device_forward.3} parent=5 // pred_check_branch
        %107 = sbr.rel (%p104) target = $region28
      $region27: #{_device_forward.3} parent=5 // pred_region
        %s108 = ssub.s32 %s9, 1
        %p109 = pneg %p30
        %p110 = pneg %p27
        %p111 = pneg %p51
        %p112 = pneg %p48
        %p113 = pneg %p77
        %p114 = pneg %p74
        %s115 = sand.u32 %s64, 1
        %s116 = sand.u32 %s64, 1
        %s117 = smul.addr %s116, 16
        %s118 = scalar_lea.vmem [#allocation4], %s117
        %s119 = smul.u32 2, %s14
        %s121 = smul.u32 %s14, 256
        %s122 = sshra.s32 %s121, 7
        %s123 = sand.u32 %s121, 127
        %s124 = smul.addr %s122, 4
        %s125 = scalar_lea.vmem %s2, %s124
        %p127 = scmp.lt.u32.totalorder 4, 8
        %p128 = pneg %p127
        // Predicated region
        $region29: #{_device_forward.3} parent=27 // pred_check
          _
        $region30: #{_device_forward.3} parent=27 // pred_check_branch
          %130 = sbr.rel (%p127) target = $region32
        $region31: #{_device_forward.3} parent=27 // pred_region
          %s179 = sand.u32 4, 7
          %p180 = scmp.eq.s32.totalorder %s179, 0
          %p181 = pneg %p180
          // Predicated region
          $region44: #{_device_forward.3} parent=31 // pred_check
            _
          $region45: #{_device_forward.3} parent=31 // pred_check_branch
            %183 = sbr.rel (%p180) target = $region47
          $region46: #{_device_forward.3} parent=31 // pred_region
            %s184 = sand.u32 4, 7
            %s185 = ssub.s32 4, %s184
            %s186 = scalar_lea.vmem %s125, %s185
            %s187 = ssub.s32 4, %s184
            %s188 = scalar_lea.vmem [#allocation2], %s187
            loop: start=0, step=1, limit=1
            $region48: #{_device_forward.3} parent=46 // loop_pre_header
              _
            $region49: #{_device_forward.3} parent=46 // loop_header
              %s190 = sphi 0, %s194
              %p191 = scmp.ge.s32.totalorder %s190, 1
              %s195 = sphi %s125, %s125
              %s196 = sphi [#allocation2], [#allocation2]
            $region50: #{_device_forward.3} parent=46 // loop_header_branch
              %193 = sbr.rel (%p191) target = $region54
            $region51: #{_device_forward.3} parent=46 // loop_body
              _
            $region52: #{_device_forward.3} parent=46 // loop_footer
              %s194 = sadd.s32 1, %s190
            $region53: #{_device_forward.3} parent=46 // loop_footer_branch
              %189 = sbr.rel target = $region49
            $region54: #{_device_forward.3} parent=46 // loop_exit
              _
            %s197 = sshllo.u32 0, %s184
            loop: start=0, step=1, limit=1
            $region55: #{_device_forward.3} parent=46 // loop_pre_header
              _
            $region56: #{_device_forward.3} parent=46 // loop_header
              %s199 = sphi 0, %s203
              %p200 = scmp.ge.s32.totalorder %s199, 1
              %s204 = sphi %s186, %s186
              %s205 = sphi %s188, %s188
            $region57: #{_device_forward.3} parent=46 // loop_header_branch
              %202 = sbr.rel (%p200) target = $region61
            $region58: #{_device_forward.3} parent=46 // loop_body
              %v206 = vld [vmem:[%s204] sm:%s197]
              %207 = vst [vmem:[%s205] sm:%s197] %v206
              %v208 = vld [vmem:[%s204 + $0x14] sm:%s197]
              %209 = vst [vmem:[%s205 + $0x4] sm:%s197] %v208
              %v210 = vld [vmem:[%s204 + $0x4] sm:%s197]
              %211 = vst [vmem:[%s205 + $0x8] sm:%s197] %v210
              %v212 = vld [vmem:[%s204 + $0x18] sm:%s197]
              %213 = vst [vmem:[%s205 + $0xc] sm:%s197] %v212
              %v214 = vld [vmem:[%s204 + $0x8] sm:%s197]
              %215 = vst [vmem:[%s205 + $0x10] sm:%s197] %v214
              %v216 = vld [vmem:[%s204 + $0x1c] sm:%s197]
              %217 = vst [vmem:[%s205 + $0x14] sm:%s197] %v216
              %v218 = vld [vmem:[%s204 + $0x28] sm:%s197]
              %219 = vst [vmem:[%s205 + $0x18] sm:%s197] %v218
              %v220 = vld [vmem:[%s204 + $0x3c] sm:%s197]
              %221 = vst [vmem:[%s205 + $0x1c] sm:%s197] %v220
              %v222 = vld [vmem:[%s204 + $0x2c] sm:%s197]
              %223 = vst [vmem:[%s205 + $0x20] sm:%s197] %v222
              %v224 = vld [vmem:[%s204 + $0x40] sm:%s197]
              %225 = vst [vmem:[%s205 + $0x24] sm:%s197] %v224
              %v226 = vld [vmem:[%s204 + $0x30] sm:%s197]
              %227 = vst [vmem:[%s205 + $0x28] sm:%s197] %v226
              %v228 = vld [vmem:[%s204 + $0x44] sm:%s197]
              %229 = vst [vmem:[%s205 + $0x2c] sm:%s197] %v228
              %v230 = vld [vmem:[%s204 + $0x50] sm:%s197]
              %231 = vst [vmem:[%s205 + $0x30] sm:%s197] %v230
              %v232 = vld [vmem:[%s204 + $0x64] sm:%s197]
              %233 = vst [vmem:[%s205 + $0x34] sm:%s197] %v232
              %v234 = vld [vmem:[%s204 + $0x54] sm:%s197]
              %235 = vst [vmem:[%s205 + $0x38] sm:%s197] %v234
              %v236 = vld [vmem:[%s204 + $0x68] sm:%s197]
              %237 = vst [vmem:[%s205 + $0x3c] sm:%s197] %v236
              %v238 = vld [vmem:[%s204 + $0x58] sm:%s197]
              %239 = vst [vmem:[%s205 + $0x40] sm:%s197] %v238
              %v240 = vld [vmem:[%s204 + $0x6c] sm:%s197]
              %241 = vst [vmem:[%s205 + $0x44] sm:%s197] %v240
            $region59: #{_device_forward.3} parent=46 // loop_footer
              %s203 = sadd.s32 1, %s199
            $region60: #{_device_forward.3} parent=46 // loop_footer_branch
              %198 = sbr.rel target = $region56
            $region61: #{_device_forward.3} parent=46 // loop_exit
              _
          $region47: #{_device_forward.3} parent=31 // pred_fallthru
            _
        $region32: #{_device_forward.3} parent=27 // pred_fallthru
          _
        // Predicated region
        $region33: #{_device_forward.3} parent=27 // pred_check
          %p131 = pneg %p127
        $region34: #{_device_forward.3} parent=27 // pred_check_branch
          %133 = sbr.rel (%p131) target = $region36
        $region35: #{_device_forward.3} parent=27 // pred_region
          %s134 = sshllo.u32 0, 4
          loop: start=0, step=1, limit=1
          $region37: #{_device_forward.3} parent=35 // loop_pre_header
            _
          $region38: #{_device_forward.3} parent=35 // loop_header
            %s136 = sphi 0, %s140
            %p137 = scmp.ge.s32.totalorder %s136, 1
            %s141 = sphi %s125, %s125
            %s142 = sphi [#allocation2], [#allocation2]
          $region39: #{_device_forward.3} parent=35 // loop_header_branch
            %139 = sbr.rel (%p137) target = $region43
          $region40: #{_device_forward.3} parent=35 // loop_body
            %v143 = vld [vmem:[%s141] sm:%s134]
            %144 = vst [vmem:[%s142] sm:%s134] %v143
            %v145 = vld [vmem:[%s141 + $0x14] sm:%s134]
            %146 = vst [vmem:[%s142 + $0x4] sm:%s134] %v145
            %v147 = vld [vmem:[%s141 + $0x4] sm:%s134]
            %148 = vst [vmem:[%s142 + $0x8] sm:%s134] %v147
            %v149 = vld [vmem:[%s141 + $0x18] sm:%s134]
            %150 = vst [vmem:[%s142 + $0xc] sm:%s134] %v149
            %v151 = vld [vmem:[%s141 + $0x8] sm:%s134]
            %152 = vst [vmem:[%s142 + $0x10] sm:%s134] %v151
            %v153 = vld [vmem:[%s141 + $0x1c] sm:%s134]
            %154 = vst [vmem:[%s142 + $0x14] sm:%s134] %v153
            %v155 = vld [vmem:[%s141 + $0x28] sm:%s134]
            %156 = vst [vmem:[%s142 + $0x18] sm:%s134] %v155
            %v157 = vld [vmem:[%s141 + $0x3c] sm:%s134]
            %158 = vst [vmem:[%s142 + $0x1c] sm:%s134] %v157
            %v159 = vld [vmem:[%s141 + $0x2c] sm:%s134]
            %160 = vst [vmem:[%s142 + $0x20] sm:%s134] %v159
            %v161 = vld [vmem:[%s141 + $0x40] sm:%s134]
            %162 = vst [vmem:[%s142 + $0x24] sm:%s134] %v161
            %v163 = vld [vmem:[%s141 + $0x30] sm:%s134]
            %164 = vst [vmem:[%s142 + $0x28] sm:%s134] %v163
            %v165 = vld [vmem:[%s141 + $0x44] sm:%s134]
            %166 = vst [vmem:[%s142 + $0x2c] sm:%s134] %v165
            %v167 = vld [vmem:[%s141 + $0x50] sm:%s134]
            %168 = vst [vmem:[%s142 + $0x30] sm:%s134] %v167
            %v169 = vld [vmem:[%s141 + $0x64] sm:%s134]
            %170 = vst [vmem:[%s142 + $0x34] sm:%s134] %v169
            %v171 = vld [vmem:[%s141 + $0x54] sm:%s134]
            %172 = vst [vmem:[%s142 + $0x38] sm:%s134] %v171
            %v173 = vld [vmem:[%s141 + $0x68] sm:%s134]
            %174 = vst [vmem:[%s142 + $0x3c] sm:%s134] %v173
            %v175 = vld [vmem:[%s141 + $0x58] sm:%s134]
            %176 = vst [vmem:[%s142 + $0x40] sm:%s134] %v175
            %v177 = vld [vmem:[%s141 + $0x6c] sm:%s134]
            %178 = vst [vmem:[%s142 + $0x44] sm:%s134] %v177
          $region41: #{_device_forward.3} parent=35 // loop_footer
            %s140 = sadd.s32 1, %s136
          $region42: #{_device_forward.3} parent=35 // loop_footer_branch
            %135 = sbr.rel target = $region38
          $region43: #{_device_forward.3} parent=35 // loop_exit
            _
        $region36: #{_device_forward.3} parent=27 // pred_fallthru
          _
        // Predicated region
        $region62: #{_device_forward.3} parent=27 // pred_check
          _
        $region63: #{_device_forward.3} parent=27 // pred_check_branch
          %244 = sbr.rel (0) target = $region65
        $region64: #{_device_forward.3} parent=27 // pred_region
          %245 = vsyncadd [#allocation3], 1152
        $region65: #{_device_forward.3} parent=27 // pred_fallthru
          _
        %s246 = smul.u32 4, 6
        %s247 = smul.u32 %s246, 3
        %s248 = sshll.u32 %s247, 4
        %249 = dma.done [#allocation3], %s248
        %v250 = vld [vmem:[%s0] sm:$0xf]
        %v251 = vld [vmem:[%s0 + $0x4] sm:$0xf]
        %v252 = vld [vmem:[#allocation2] sm:$0xff]
        %v253 = vld [vmem:[#allocation2 + $0x8] sm:$0xff]
        %v254 = vld [vmem:[#allocation2 + $0x18] sm:$0xff]
        %v255 = vld [vmem:[#allocation2 + $0x20] sm:$0xff]
        %v256 = vld [vmem:[#allocation2 + $0x30] sm:$0xff]
        %v257 = vld [vmem:[#allocation2 + $0x38] sm:$0xff]
        %s258 = scalar_lea.vmem %s0, 8
        %v259 = vld [vmem:[%s258] sm:$0xf]
        %v260 = vld [vmem:[%s258 + $0x4] sm:$0xf]
        %v261 = vld [vmem:[#allocation2] sm:$0xff]
        %v262 = vld [vmem:[#allocation2 + $0x8] sm:$0xff]
        %v263 = vld [vmem:[#allocation2 + $0x10] sm:$0xff]
        %v264 = vld [vmem:[#allocation2 + $0x18] sm:$0xff]
        %v265 = vld [vmem:[#allocation2 + $0x20] sm:$0xff]
        %v266 = vld [vmem:[#allocation2 + $0x28] sm:$0xff]
        %v267 = vld [vmem:[#allocation2 + $0x30] sm:$0xff]
        %v268 = vld [vmem:[#allocation2 + $0x38] sm:$0xff]
        %v269 = vld [vmem:[#allocation2 + $0x40] sm:$0xff]
        %v272 = vunpack.c.l.b16 %v259
        %v273 = vunpack.c.l.b16 %v260
        %v274 = vpack.c.b16 %v273, %v272
        %284 = vrot.lane.b32.xlu0 %v261, 127
        %v285 = vpop.permute.xlu0 %284
        %286 = vrot.lane.b32.xlu0 %v262, 127
        %v287 = vpop.permute.xlu0 %286
        %288 = vrot.lane.b32.xlu0 %v263, 127
        %v289 = vpop.permute.xlu0 %288
        %290 = vrot.lane.b32.xlu0 %v264, 127
        %v291 = vpop.permute.xlu0 %290
        %292 = vrot.lane.b32.xlu0 %v265, 127
        %v293 = vpop.permute.xlu0 %292
        %294 = vrot.lane.b32.xlu0 %v266, 127
        %v295 = vpop.permute.xlu0 %294
        %296 = vrot.lane.b32.xlu0 %v267, 127
        %v297 = vpop.permute.xlu0 %296
        %298 = vrot.lane.b32.xlu0 %v268, 127
        %v299 = vpop.permute.xlu0 %298
        %300 = vrot.lane.b32.xlu0 %v269, 127
        %v301 = vpop.permute.xlu0 %300
        %vm302 = vcmask 1039360
        %v303 = vsel %vm302, %v285, %v287
        %v304 = vsel %vm302, %v287, %v289
        %v305 = vsel %vm302, %v291, %v293
        %v306 = vsel %vm302, %v293, %v295
        %v307 = vsel %vm302, %v297, %v299
        %v308 = vsel %vm302, %v299, %v301
        %vm315 = vcmask 392192
        %v317 = vsel %vm315, %v274, 0
        %319 = vmatprep.subr.bf16.mxu0 %v304
        %320 = vmatpush1.bf16.msra.mxu0 %v303
        %321 = vmatprep.subr.bf16.mxu0 %v306
        %322 = vmatpush1.bf16.msra.mxu0 %v305
        %323 = vmatprep.subr.bf16.mxu0 %v308
        %324 = vmatpush1.bf16.msra.mxu0 %v307
        %325 = vmatprep.subr.bf16.mxu0 0
        %326 = vmatpush1.bf16.msra.mxu0 0
        %327 = vmatprep.subr.bf16.mxu0 0
        %328 = vmatpush1.bf16.msra.mxu0 0
        %329 = vmatprep.subr.bf16.mxu0 0
        %330 = vmatpush1.bf16.msra.mxu0 0
        %331 = vmatprep.subr.bf16.mxu0 0
        %332 = vmatpush1.bf16.msra.mxu0 0
        %333 = vmatprep.subr.bf16.mxu0 0
        %334 = vmatpush1.bf16.msra.mxu0 0
        %335 = vmatprep.subr.bf16.mxu0 0
        %336 = vmatpush1.bf16.msra.mxu0 0
        %337 = vmatprep.subr.bf16.mxu0 0
        %338 = vmatpush1.bf16.msra.mxu0 0
        %339 = vmatprep.subr.bf16.mxu0 0
        %340 = vmatpush1.bf16.msra.mxu0 0
        %341 = vmatprep.subr.bf16.mxu0 0
        %342 = vmatpush1.bf16.msra.mxu0 0
        %343 = vmatprep.subr.bf16.mxu0 0
        %344 = vmatpush1.bf16.msra.mxu0 0
        %345 = vmatprep.subr.bf16.mxu0 0
        %346 = vmatpush1.bf16.msra.mxu0 0
        %347 = vmatprep.subr.bf16.mxu0 0
        %348 = vmatpush1.bf16.msra.mxu0 0
        %349 = vmatprep.subr.bf16.mxu0 0
        %350 = vmatpush1.bf16.msra.mxu0 0
        %351 = vmatprep.mubr.bf16.mxu0 0
        %352 = vmatmul.mubr.bf16.gmra.mrb[0].mxu0 %v317
        %v353 = vpop.f32.mrb[0].mxu0
        %v354 = vadd.f32 0.0, %v353
        %v355 = vpop.f32.mrb[0].mxu0
        %v356 = vadd.f32 0.0, %v355
        %v357 = vpop.f32.mrb[0].mxu0
        %v358 = vadd.f32 0.0, %v357
        %v359 = vpop.f32.mrb[0].mxu0
        %v360 = vadd.f32 0.0, %v359
        %361 = vdwg.mxu0
        %v364 = vunpack.c.l.b16 %v250
        %v365 = vunpack.c.l.b16 %v251
        %v366 = vpack.c.b16 %v365, %v364
        %v368 = vsel %vm315, %v366, 0
        %370 = vmatprep.subr.bf16.mxu0 %v253
        %371 = vmatpush1.bf16.msra.mxu0 %v252
        %372 = vmatprep.subr.bf16.mxu0 %v255
        %373 = vmatpush1.bf16.msra.mxu0 %v254
        %374 = vmatprep.subr.bf16.mxu0 %v257
        %375 = vmatpush1.bf16.msra.mxu0 %v256
        %376 = vmatprep.subr.bf16.mxu0 0
        %377 = vmatpush1.bf16.msra.mxu0 0
        %378 = vmatprep.subr.bf16.mxu0 0
        %379 = vmatpush1.bf16.msra.mxu0 0
        %380 = vmatprep.subr.bf16.mxu0 0
        %381 = vmatpush1.bf16.msra.mxu0 0
        %382 = vmatprep.subr.bf16.mxu0 0
        %383 = vmatpush1.bf16.msra.mxu0 0
        %384 = vmatprep.subr.bf16.mxu0 0
        %385 = vmatpush1.bf16.msra.mxu0 0
        %386 = vmatprep.subr.bf16.mxu0 0
        %387 = vmatpush1.bf16.msra.mxu0 0
        %388 = vmatprep.subr.bf16.mxu0 0
        %389 = vmatpush1.bf16.msra.mxu0 0
        %390 = vmatprep.subr.bf16.mxu0 0
        %391 = vmatpush1.bf16.msra.mxu0 0
        %392 = vmatprep.subr.bf16.mxu0 0
        %393 = vmatpush1.bf16.msra.mxu0 0
        %394 = vmatprep.subr.bf16.mxu0 0
        %395 = vmatpush1.bf16.msra.mxu0 0
        %396 = vmatprep.subr.bf16.mxu0 0
        %397 = vmatpush1.bf16.msra.mxu0 0
        %398 = vmatprep.subr.bf16.mxu0 0
        %399 = vmatpush1.bf16.msra.mxu0 0
        %400 = vmatprep.subr.bf16.mxu0 0
        %401 = vmatpush1.bf16.msra.mxu0 0
        %402 = vmatprep.mubr.bf16.mxu0 0
        %403 = vmatmul.mubr.bf16.gmra.mrb[0].mxu0 %v368
        %v404 = vpop.f32.mrb[0].mxu0
        %v405 = vadd.f32 %v354, %v404
        %v406 = vpop.f32.mrb[0].mxu0
        %v407 = vadd.f32 %v356, %v406
        %v408 = vpop.f32.mrb[0].mxu0
        %v409 = vadd.f32 %v358, %v408
        %v410 = vpop.f32.mrb[0].mxu0
        %v411 = vadd.f32 %v360, %v410
        %412 = vdwg.mxu0
        %s413 = scalar_lea.vmem %s0, 16
        %v414 = vld [vmem:[%s413] sm:$0xf]
        %v415 = vld [vmem:[%s413 + $0x4] sm:$0xf]
        %v418 = vunpack.c.l.b16 %v414
        %v419 = vunpack.c.l.b16 %v415
        %v420 = vpack.c.b16 %v419, %v418
        %421 = vrot.lane.b32.xlu0 %v261, 126
        %v422 = vpop.permute.xlu0 %421
        %423 = vrot.lane.b32.xlu0 %v262, 126
        %v424 = vpop.permute.xlu0 %423
        %425 = vrot.lane.b32.xlu0 %v263, 126
        %v426 = vpop.permute.xlu0 %425
        %427 = vrot.lane.b32.xlu0 %v264, 126
        %v428 = vpop.permute.xlu0 %427
        %429 = vrot.lane.b32.xlu0 %v265, 126
        %v430 = vpop.permute.xlu0 %429
        %431 = vrot.lane.b32.xlu0 %v266, 126
        %v432 = vpop.permute.xlu0 %431
        %433 = vrot.lane.b32.xlu0 %v267, 126
        %v434 = vpop.permute.xlu0 %433
        %435 = vrot.lane.b32.xlu0 %v268, 126
        %v436 = vpop.permute.xlu0 %435
        %437 = vrot.lane.b32.xlu0 %v269, 126
        %v438 = vpop.permute.xlu0 %437
        %vm439 = vcmask 1031168
        %v440 = vsel %vm439, %v422, %v424
        %v441 = vsel %vm439, %v424, %v426
        %v442 = vsel %vm439, %v428, %v430
        %v443 = vsel %vm439, %v430, %v432
        %v444 = vsel %vm439, %v434, %v436
        %v445 = vsel %vm439, %v436, %v438
        %v453 = vsel %vm315, %v420, 0
        %455 = vmatprep.subr.bf16.mxu0 %v441
        %456 = vmatpush1.bf16.msra.mxu0 %v440
        %457 = vmatprep.subr.bf16.mxu0 %v443
        %458 = vmatpush1.bf16.msra.mxu0 %v442
        %459 = vmatprep.subr.bf16.mxu0 %v445
        %460 = vmatpush1.bf16.msra.mxu0 %v444
        %461 = vmatprep.subr.bf16.mxu0 0
        %462 = vmatpush1.bf16.msra.mxu0 0
        %463 = vmatprep.subr.bf16.mxu0 0
        %464 = vmatpush1.bf16.msra.mxu0 0
        %465 = vmatprep.subr.bf16.mxu0 0
        %466 = vmatpush1.bf16.msra.mxu0 0
        %467 = vmatprep.subr.bf16.mxu0 0
        %468 = vmatpush1.bf16.msra.mxu0 0
        %469 = vmatprep.subr.bf16.mxu0 0
        %470 = vmatpush1.bf16.msra.mxu0 0
        %471 = vmatprep.subr.bf16.mxu0 0
        %472 = vmatpush1.bf16.msra.mxu0 0
        %473 = vmatprep.subr.bf16.mxu0 0
        %474 = vmatpush1.bf16.msra.mxu0 0
        %475 = vmatprep.subr.bf16.mxu0 0
        %476 = vmatpush1.bf16.msra.mxu0 0
        %477 = vmatprep.subr.bf16.mxu0 0
        %478 = vmatpush1.bf16.msra.mxu0 0
        %479 = vmatprep.subr.bf16.mxu0 0
        %480 = vmatpush1.bf16.msra.mxu0 0
        %481 = vmatprep.subr.bf16.mxu0 0
        %482 = vmatpush1.bf16.msra.mxu0 0
        %483 = vmatprep.subr.bf16.mxu0 0
        %484 = vmatpush1.bf16.msra.mxu0 0
        %485 = vmatprep.subr.bf16.mxu0 0
        %486 = vmatpush1.bf16.msra.mxu0 0
        %487 = vmatprep.mubr.bf16.mxu0 0
        %488 = vmatmul.mubr.bf16.gmra.mrb[0].mxu0 %v453
        %v489 = vpop.f32.mrb[0].mxu0
        %v490 = vadd.f32 0.0, %v489
        %v491 = vpop.f32.mrb[0].mxu0
        %v492 = vadd.f32 0.0, %v491
        %v493 = vpop.f32.mrb[0].mxu0
        %v494 = vadd.f32 0.0, %v493
        %v495 = vpop.f32.mrb[0].mxu0
        %v496 = vadd.f32 0.0, %v495
        %497 = vdwg.mxu0
        %v498 = vadd.f32 %v405, %v490
        %v499 = vadd.f32 %v407, %v492
        %v500 = vadd.f32 %v409, %v494
        %v501 = vadd.f32 %v411, %v496
        %s502 = scalar_lea.vmem %s0, 24
        %v503 = vld [vmem:[%s502] sm:$0xf]
        %v504 = vld [vmem:[%s502 + $0x4] sm:$0xf]
        %v507 = vunpack.c.l.b16 %v503
        %v508 = vunpack.c.l.b16 %v504
        %v509 = vpack.c.b16 %v508, %v507
        %510 = vrot.lane.b32.xlu0 %v261, 109
        %v511 = vpop.permute.xlu0 %510
        %512 = vrot.lane.b32.xlu0 %v262, 109
        %v513 = vpop.permute.xlu0 %512
        %514 = vrot.lane.b32.xlu0 %v263, 109
        %v515 = vpop.permute.xlu0 %514
        %516 = vrot.lane.b32.xlu0 %v264, 109
        %v517 = vpop.permute.xlu0 %516
        %518 = vrot.lane.b32.xlu0 %v265, 109
        %v519 = vpop.permute.xlu0 %518
        %520 = vrot.lane.b32.xlu0 %v266, 109
        %v521 = vpop.permute.xlu0 %520
        %522 = vrot.lane.b32.xlu0 %v267, 109
        %v523 = vpop.permute.xlu0 %522
        %524 = vrot.lane.b32.xlu0 %v268, 109
        %v525 = vpop.permute.xlu0 %524
        %526 = vrot.lane.b32.xlu0 %v269, 109
        %v527 = vpop.permute.xlu0 %526
        %vm528 = vcmask 891904
        %v529 = vsel %vm528, %v511, %v513
        %v530 = vsel %vm528, %v513, %v515
        %v531 = vsel %vm528, %v517, %v519
        %v532 = vsel %vm528, %v519, %v521
        %v533 = vsel %vm528, %v523, %v525
        %v534 = vsel %vm528, %v525, %v527
        %v542 = vsel %vm315, %v509, 0
        %544 = vmatprep.subr.bf16.mxu0 %v530
        %545 = vmatpush1.bf16.msra.mxu0 %v529
        %546 = vmatprep.subr.bf16.mxu0 %v532
        %547 = vmatpush1.bf16.msra.mxu0 %v531
        %548 = vmatprep.subr.bf16.mxu0 %v534
        %549 = vmatpush1.bf16.msra.mxu0 %v533
        %550 = vmatprep.subr.bf16.mxu0 0
        %551 = vmatpush1.bf16.msra.mxu0 0
        %552 = vmatprep.subr.bf16.mxu0 0
        %553 = vmatpush1.bf16.msra.mxu0 0
        %554 = vmatprep.subr.bf16.mxu0 0
        %555 = vmatpush1.bf16.msra.mxu0 0
        %556 = vmatprep.subr.bf16.mxu0 0
        %557 = vmatpush1.bf16.msra.mxu0 0
        %558 = vmatprep.subr.bf16.mxu0 0
        %559 = vmatpush1.bf16.msra.mxu0 0
        %560 = vmatprep.subr.bf16.mxu0 0
        %561 = vmatpush1.bf16.msra.mxu0 0
        %562 = vmatprep.subr.bf16.mxu0 0
        %563 = vmatpush1.bf16.msra.mxu0 0
        %564 = vmatprep.subr.bf16.mxu0 0
        %565 = vmatpush1.bf16.msra.mxu0 0
        %566 = vmatprep.subr.bf16.mxu0 0
        %567 = vmatpush1.bf16.msra.mxu0 0
        %568 = vmatprep.subr.bf16.mxu0 0
        %569 = vmatpush1.bf16.msra.mxu0 0
        %570 = vmatprep.subr.bf16.mxu0 0
        %571 = vmatpush1.bf16.msra.mxu0 0
        %572 = vmatprep.subr.bf16.mxu0 0
        %573 = vmatpush1.bf16.msra.mxu0 0
        %574 = vmatprep.subr.bf16.mxu0 0
        %575 = vmatpush1.bf16.msra.mxu0 0
        %576 = vmatprep.mubr.bf16.mxu0 0
        %577 = vmatmul.mubr.bf16.gmra.mrb[0].mxu0 %v542
        %v578 = vpop.f32.mrb[0].mxu0
        %v579 = vadd.f32 0.0, %v578
        %v580 = vpop.f32.mrb[0].mxu0
        %v581 = vadd.f32 0.0, %v580
        %v582 = vpop.f32.mrb[0].mxu0
        %v583 = vadd.f32 0.0, %v582
        %v584 = vpop.f32.mrb[0].mxu0
        %v585 = vadd.f32 0.0, %v584
        %586 = vdwg.mxu0
        %v587 = vadd.f32 %v498, %v579
        %v588 = vadd.f32 %v499, %v581
        %v589 = vadd.f32 %v500, %v583
        %v590 = vadd.f32 %v501, %v585
        %s591 = scalar_lea.vmem %s0, 32
        %v592 = vld [vmem:[%s591] sm:$0xf]
        %v593 = vld [vmem:[%s591 + $0x4] sm:$0xf]
        %v596 = vunpack.c.l.b16 %v592
        %v597 = vunpack.c.l.b16 %v593
        %v598 = vpack.c.b16 %v597, %v596
        %599 = vrot.lane.b32.xlu0 %v261, 108
        %v600 = vpop.permute.xlu0 %599
        %601 = vrot.lane.b32.xlu0 %v262, 108
        %v602 = vpop.permute.xlu0 %601
        %603 = vrot.lane.b32.xlu0 %v263, 108
        %v604 = vpop.permute.xlu0 %603
        %605 = vrot.lane.b32.xlu0 %v264, 108
        %v606 = vpop.permute.xlu0 %605
        %607 = vrot.lane.b32.xlu0 %v265, 108
        %v608 = vpop.permute.xlu0 %607
        %609 = vrot.lane.b32.xlu0 %v266, 108
        %v610 = vpop.permute.xlu0 %609
        %611 = vrot.lane.b32.xlu0 %v267, 108
        %v612 = vpop.permute.xlu0 %611
        %613 = vrot.lane.b32.xlu0 %v268, 108
        %v614 = vpop.permute.xlu0 %613
        %615 = vrot.lane.b32.xlu0 %v269, 108
        %v616 = vpop.permute.xlu0 %615
        %vm617 = vcmask 883712
        %v618 = vsel %vm617, %v600, %v602
        %v619 = vsel %vm617, %v602, %v604
        %v620 = vsel %vm617, %v606, %v608
        %v621 = vsel %vm617, %v608, %v610
        %v622 = vsel %vm617, %v612, %v614
        %v623 = vsel %vm617, %v614, %v616
        %v631 = vsel %vm315, %v598, 0
        %633 = vmatprep.subr.bf16.mxu0 %v619
        %634 = vmatpush1.bf16.msra.mxu0 %v618
        %635 = vmatprep.subr.bf16.mxu0 %v621
        %636 = vmatpush1.bf16.msra.mxu0 %v620
        %637 = vmatprep.subr.bf16.mxu0 %v623
        %638 = vmatpush1.bf16.msra.mxu0 %v622
        %639 = vmatprep.subr.bf16.mxu0 0
        %640 = vmatpush1.bf16.msra.mxu0 0
        %641 = vmatprep.subr.bf16.mxu0 0
        %642 = vmatpush1.bf16.msra.mxu0 0
        %643 = vmatprep.subr.bf16.mxu0 0
        %644 = vmatpush1.bf16.msra.mxu0 0
        %645 = vmatprep.subr.bf16.mxu0 0
        %646 = vmatpush1.bf16.msra.mxu0 0
        %647 = vmatprep.subr.bf16.mxu0 0
        %648 = vmatpush1.bf16.msra.mxu0 0
        %649 = vmatprep.subr.bf16.mxu0 0
        %650 = vmatpush1.bf16.msra.mxu0 0
        %651 = vmatprep.subr.bf16.mxu0 0
        %652 = vmatpush1.bf16.msra.mxu0 0
        %653 = vmatprep.subr.bf16.mxu0 0
        %654 = vmatpush1.bf16.msra.mxu0 0
        %655 = vmatprep.subr.bf16.mxu0 0
        %656 = vmatpush1.bf16.msra.mxu0 0
        %657 = vmatprep.subr.bf16.mxu0 0
        %658 = vmatpush1.bf16.msra.mxu0 0
        %659 = vmatprep.subr.bf16.mxu0 0
        %660 = vmatpush1.bf16.msra.mxu0 0
        %661 = vmatprep.subr.bf16.mxu0 0
        %662 = vmatpush1.bf16.msra.mxu0 0
        %663 = vmatprep.subr.bf16.mxu0 0
        %664 = vmatpush1.bf16.msra.mxu0 0
        %665 = vmatprep.mubr.bf16.mxu0 0
        %666 = vmatmul.mubr.bf16.gmra.mrb[0].mxu0 %v631
        %v667 = vpop.f32.mrb[0].mxu0
        %v668 = vadd.f32 0.0, %v667
        %v669 = vpop.f32.mrb[0].mxu0
        %v670 = vadd.f32 0.0, %v669
        %v671 = vpop.f32.mrb[0].mxu0
        %v672 = vadd.f32 0.0, %v671
        %v673 = vpop.f32.mrb[0].mxu0
        %v674 = vadd.f32 0.0, %v673
        %675 = vdwg.mxu0
        %v676 = vadd.f32 %v587, %v668
        %v677 = vadd.f32 %v588, %v670
        %v678 = vadd.f32 %v589, %v672
        %v679 = vadd.f32 %v590, %v674
        %s680 = scalar_lea.vmem %s0, 40
        %v681 = vld [vmem:[%s680] sm:$0xf]
        %v682 = vld [vmem:[%s680 + $0x4] sm:$0xf]
        %v685 = vunpack.c.l.b16 %v681
        %v686 = vunpack.c.l.b16 %v682
        %v687 = vpack.c.b16 %v686, %v685
        %688 = vrot.lane.b32.xlu0 %v261, 107
        %v689 = vpop.permute.xlu0 %688
        %690 = vrot.lane.b32.xlu0 %v262, 107
        %v691 = vpop.permute.xlu0 %690
        %692 = vrot.lane.b32.xlu0 %v263, 107
        %v693 = vpop.permute.xlu0 %692
        %694 = vrot.lane.b32.xlu0 %v264, 107
        %v695 = vpop.permute.xlu0 %694
        %696 = vrot.lane.b32.xlu0 %v265, 107
        %v697 = vpop.permute.xlu0 %696
        %698 = vrot.lane.b32.xlu0 %v266, 107
        %v699 = vpop.permute.xlu0 %698
        %700 = vrot.lane.b32.xlu0 %v267, 107
        %v701 = vpop.permute.xlu0 %700
        %702 = vrot.lane.b32.xlu0 %v268, 107
        %v703 = vpop.permute.xlu0 %702
        %704 = vrot.lane.b32.xlu0 %v269, 107
        %v705 = vpop.permute.xlu0 %704
        %vm706 = vcmask 875520
        %v707 = vsel %vm706, %v689, %v691
        %v708 = vsel %vm706, %v691, %v693
        %v709 = vsel %vm706, %v695, %v697
        %v710 = vsel %vm706, %v697, %v699
        %v711 = vsel %vm706, %v701, %v703
        %v712 = vsel %vm706, %v703, %v705
        %v720 = vsel %vm315, %v687, 0
        %722 = vmatprep.subr.bf16.mxu0 %v708
        %723 = vmatpush1.bf16.msra.mxu0 %v707
        %724 = vmatprep.subr.bf16.mxu0 %v710
        %725 = vmatpush1.bf16.msra.mxu0 %v709
        %726 = vmatprep.subr.bf16.mxu0 %v712
        %727 = vmatpush1.bf16.msra.mxu0 %v711
        %728 = vmatprep.subr.bf16.mxu0 0
        %729 = vmatpush1.bf16.msra.mxu0 0
        %730 = vmatprep.subr.bf16.mxu0 0
        %731 = vmatpush1.bf16.msra.mxu0 0
        %732 = vmatprep.subr.bf16.mxu0 0
        %733 = vmatpush1.bf16.msra.mxu0 0
        %734 = vmatprep.subr.bf16.mxu0 0
        %735 = vmatpush1.bf16.msra.mxu0 0
        %736 = vmatprep.subr.bf16.mxu0 0
        %737 = vmatpush1.bf16.msra.mxu0 0
        %738 = vmatprep.subr.bf16.mxu0 0
        %739 = vmatpush1.bf16.msra.mxu0 0
        %740 = vmatprep.subr.bf16.mxu0 0
        %741 = vmatpush1.bf16.msra.mxu0 0
        %742 = vmatprep.subr.bf16.mxu0 0
        %743 = vmatpush1.bf16.msra.mxu0 0
        %744 = vmatprep.subr.bf16.mxu0 0
        %745 = vmatpush1.bf16.msra.mxu0 0
        %746 = vmatprep.subr.bf16.mxu0 0
        %747 = vmatpush1.bf16.msra.mxu0 0
        %748 = vmatprep.subr.bf16.mxu0 0
        %749 = vmatpush1.bf16.msra.mxu0 0
        %750 = vmatprep.subr.bf16.mxu0 0
        %751 = vmatpush1.bf16.msra.mxu0 0
        %752 = vmatprep.subr.bf16.mxu0 0
        %753 = vmatpush1.bf16.msra.mxu0 0
        %754 = vmatprep.mubr.bf16.mxu0 0
        %755 = vmatmul.mubr.bf16.gmra.mrb[0].mxu0 %v720
        %v756 = vpop.f32.mrb[0].mxu0
        %v757 = vadd.f32 0.0, %v756
        %v758 = vpop.f32.mrb[0].mxu0
        %v759 = vadd.f32 0.0, %v758
        %v760 = vpop.f32.mrb[0].mxu0
        %v761 = vadd.f32 0.0, %v760
        %v762 = vpop.f32.mrb[0].mxu0
        %v763 = vadd.f32 0.0, %v762
        %764 = vdwg.mxu0
        %v765 = vadd.f32 %v676, %v757
        %v766 = vadd.f32 %v677, %v759
        %v767 = vadd.f32 %v678, %v761
        %v768 = vadd.f32 %v679, %v763
        %s769 = scalar_lea.vmem %s0, 48
        %v770 = vld [vmem:[%s769] sm:$0xf]
        %v771 = vld [vmem:[%s769 + $0x4] sm:$0xf]
        %v774 = vunpack.c.l.b16 %v770
        %v775 = vunpack.c.l.b16 %v771
        %v776 = vpack.c.b16 %v775, %v774
        %777 = vrot.lane.b32.xlu0 %v261, 90
        %v778 = vpop.permute.xlu0 %777
        %779 = vrot.lane.b32.xlu0 %v262, 90
        %v780 = vpop.permute.xlu0 %779
        %781 = vrot.lane.b32.xlu0 %v263, 90
        %v782 = vpop.permute.xlu0 %781
        %783 = vrot.lane.b32.xlu0 %v264, 90
        %v784 = vpop.permute.xlu0 %783
        %785 = vrot.lane.b32.xlu0 %v265, 90
        %v786 = vpop.permute.xlu0 %785
        %787 = vrot.lane.b32.xlu0 %v266, 90
        %v788 = vpop.permute.xlu0 %787
        %789 = vrot.lane.b32.xlu0 %v267, 90
        %v790 = vpop.permute.xlu0 %789
        %791 = vrot.lane.b32.xlu0 %v268, 90
        %v792 = vpop.permute.xlu0 %791
        %793 = vrot.lane.b32.xlu0 %v269, 90
        %v794 = vpop.permute.xlu0 %793
        %vm795 = vcmask 736256
        %v796 = vsel %vm795, %v778, %v780
        %v797 = vsel %vm795, %v780, %v782
        %v798 = vsel %vm795, %v784, %v786
        %v799 = vsel %vm795, %v786, %v788
        %v800 = vsel %vm795, %v790, %v792
        %v801 = vsel %vm795, %v792, %v794
        %v809 = vsel %vm315, %v776, 0
        %811 = vmatprep.subr.bf16.mxu0 %v797
        %812 = vmatpush1.bf16.msra.mxu0 %v796
        %813 = vmatprep.subr.bf16.mxu0 %v799
        %814 = vmatpush1.bf16.msra.mxu0 %v798
        %815 = vmatprep.subr.bf16.mxu0 %v801
        %816 = vmatpush1.bf16.msra.mxu0 %v800
        %817 = vmatprep.subr.bf16.mxu0 0
        %818 = vmatpush1.bf16.msra.mxu0 0
        %819 = vmatprep.subr.bf16.mxu0 0
        %820 = vmatpush1.bf16.msra.mxu0 0
        %821 = vmatprep.subr.bf16.mxu0 0
        %822 = vmatpush1.bf16.msra.mxu0 0
        %823 = vmatprep.subr.bf16.mxu0 0
        %824 = vmatpush1.bf16.msra.mxu0 0
        %825 = vmatprep.subr.bf16.mxu0 0
        %826 = vmatpush1.bf16.msra.mxu0 0
        %827 = vmatprep.subr.bf16.mxu0 0
        %828 = vmatpush1.bf16.msra.mxu0 0
        %829 = vmatprep.subr.bf16.mxu0 0
        %830 = vmatpush1.bf16.msra.mxu0 0
        %831 = vmatprep.subr.bf16.mxu0 0
        %832 = vmatpush1.bf16.msra.mxu0 0
        %833 = vmatprep.subr.bf16.mxu0 0
        %834 = vmatpush1.bf16.msra.mxu0 0
        %835 = vmatprep.subr.bf16.mxu0 0
        %836 = vmatpush1.bf16.msra.mxu0 0
        %837 = vmatprep.subr.bf16.mxu0 0
        %838 = vmatpush1.bf16.msra.mxu0 0
        %839 = vmatprep.subr.bf16.mxu0 0
        %840 = vmatpush1.bf16.msra.mxu0 0
        %841 = vmatprep.subr.bf16.mxu0 0
        %842 = vmatpush1.bf16.msra.mxu0 0
        %843 = vmatprep.mubr.bf16.mxu0 0
        %844 = vmatmul.mubr.bf16.gmra.mrb[0].mxu0 %v809
        %v845 = vpop.f32.mrb[0].mxu0
        %v846 = vadd.f32 0.0, %v845
        %v847 = vpop.f32.mrb[0].mxu0
        %v848 = vadd.f32 0.0, %v847
        %v849 = vpop.f32.mrb[0].mxu0
        %v850 = vadd.f32 0.0, %v849
        %v851 = vpop.f32.mrb[0].mxu0
        %v852 = vadd.f32 0.0, %v851
        %853 = vdwg.mxu0
        %v854 = vadd.f32 %v765, %v846
        %v855 = vadd.f32 %v766, %v848
        %v856 = vadd.f32 %v767, %v850
        %v857 = vadd.f32 %v768, %v852
        %s858 = scalar_lea.vmem %s0, 56
        %v859 = vld [vmem:[%s858] sm:$0xf]
        %v860 = vld [vmem:[%s858 + $0x4] sm:$0xf]
        %v863 = vunpack.c.l.b16 %v859
        %v864 = vunpack.c.l.b16 %v860
        %v865 = vpack.c.b16 %v864, %v863
        %866 = vrot.lane.b32.xlu0 %v261, 89
        %v867 = vpop.permute.xlu0 %866
        %868 = vrot.lane.b32.xlu0 %v262, 89
        %v869 = vpop.permute.xlu0 %868
        %870 = vrot.lane.b32.xlu0 %v263, 89
        %v871 = vpop.permute.xlu0 %870
        %872 = vrot.lane.b32.xlu0 %v264, 89
        %v873 = vpop.permute.xlu0 %872
        %874 = vrot.lane.b32.xlu0 %v265, 89
        %v875 = vpop.permute.xlu0 %874
        %876 = vrot.lane.b32.xlu0 %v266, 89
        %v877 = vpop.permute.xlu0 %876
        %878 = vrot.lane.b32.xlu0 %v267, 89
        %v879 = vpop.permute.xlu0 %878
        %880 = vrot.lane.b32.xlu0 %v268, 89
        %v881 = vpop.permute.xlu0 %880
        %882 = vrot.lane.b32.xlu0 %v269, 89
        %v883 = vpop.permute.xlu0 %882
        %vm884 = vcmask 728064
        %v885 = vsel %vm884, %v867, %v869
        %v886 = vsel %vm884, %v869, %v871
        %v887 = vsel %vm884, %v873, %v875
        %v888 = vsel %vm884, %v875, %v877
        %v889 = vsel %vm884, %v879, %v881
        %v890 = vsel %vm884, %v881, %v883
        %v898 = vsel %vm315, %v865, 0
        %900 = vmatprep.subr.bf16.mxu0 %v886
        %901 = vmatpush1.bf16.msra.mxu0 %v885
        %902 = vmatprep.subr.bf16.mxu0 %v888
        %903 = vmatpush1.bf16.msra.mxu0 %v887
        %904 = vmatprep.subr.bf16.mxu0 %v890
        %905 = vmatpush1.bf16.msra.mxu0 %v889
        %906 = vmatprep.subr.bf16.mxu0 0
        %907 = vmatpush1.bf16.msra.mxu0 0
        %908 = vmatprep.subr.bf16.mxu0 0
        %909 = vmatpush1.bf16.msra.mxu0 0
        %910 = vmatprep.subr.bf16.mxu0 0
        %911 = vmatpush1.bf16.msra.mxu0 0
        %912 = vmatprep.subr.bf16.mxu0 0
        %913 = vmatpush1.bf16.msra.mxu0 0
        %914 = vmatprep.subr.bf16.mxu0 0
        %915 = vmatpush1.bf16.msra.mxu0 0
        %916 = vmatprep.subr.bf16.mxu0 0
        %917 = vmatpush1.bf16.msra.mxu0 0
        %918 = vmatprep.subr.bf16.mxu0 0
        %919 = vmatpush1.bf16.msra.mxu0 0
        %920 = vmatprep.subr.bf16.mxu0 0
        %921 = vmatpush1.bf16.msra.mxu0 0
        %922 = vmatprep.subr.bf16.mxu0 0
        %923 = vmatpush1.bf16.msra.mxu0 0
        %924 = vmatprep.subr.bf16.mxu0 0
        %925 = vmatpush1.bf16.msra.mxu0 0
        %926 = vmatprep.subr.bf16.mxu0 0
        %927 = vmatpush1.bf16.msra.mxu0 0
        %928 = vmatprep.subr.bf16.mxu0 0
        %929 = vmatpush1.bf16.msra.mxu0 0
        %930 = vmatprep.subr.bf16.mxu0 0
        %931 = vmatpush1.bf16.msra.mxu0 0
        %932 = vmatprep.mubr.bf16.mxu0 0
        %933 = vmatmul.mubr.bf16.gmra.mrb[0].mxu0 %v898
        %v934 = vpop.f32.mrb[0].mxu0
        %v935 = vadd.f32 0.0, %v934
        %v936 = vpop.f32.mrb[0].mxu0
        %v937 = vadd.f32 0.0, %v936
        %v938 = vpop.f32.mrb[0].mxu0
        %v939 = vadd.f32 0.0, %v938
        %v940 = vpop.f32.mrb[0].mxu0
        %v941 = vadd.f32 0.0, %v940
        %942 = vdwg.mxu0
        %v943 = vadd.f32 %v854, %v935
        %v944 = vadd.f32 %v855, %v937
        %v945 = vadd.f32 %v856, %v939
        %v946 = vadd.f32 %v857, %v941
        %s947 = scalar_lea.vmem %s0, 64
        %v948 = vld [vmem:[%s947] sm:$0xf]
        %v949 = vld [vmem:[%s947 + $0x4] sm:$0xf]
        %v952 = vunpack.c.l.b16 %v948
        %v953 = vunpack.c.l.b16 %v949
        %v954 = vpack.c.b16 %v953, %v952
        %955 = vrot.lane.b32.xlu0 %v261, 88
        %v956 = vpop.permute.xlu0 %955
        %957 = vrot.lane.b32.xlu0 %v262, 88
        %v958 = vpop.permute.xlu0 %957
        %959 = vrot.lane.b32.xlu0 %v263, 88
        %v960 = vpop.permute.xlu0 %959
        %961 = vrot.lane.b32.xlu0 %v264, 88
        %v962 = vpop.permute.xlu0 %961
        %963 = vrot.lane.b32.xlu0 %v265, 88
        %v964 = vpop.permute.xlu0 %963
        %965 = vrot.lane.b32.xlu0 %v266, 88
        %v966 = vpop.permute.xlu0 %965
        %967 = vrot.lane.b32.xlu0 %v267, 88
        %v968 = vpop.permute.xlu0 %967
        %969 = vrot.lane.b32.xlu0 %v268, 88
        %v970 = vpop.permute.xlu0 %969
        %971 = vrot.lane.b32.xlu0 %v269, 88
        %v972 = vpop.permute.xlu0 %971
        %vm973 = vcmask 719872
        %v974 = vsel %vm973, %v956, %v958
        %v975 = vsel %vm973, %v958, %v960
        %v976 = vsel %vm973, %v962, %v964
        %v977 = vsel %vm973, %v964, %v966
        %v978 = vsel %vm973, %v968, %v970
        %v979 = vsel %vm973, %v970, %v972
        %v987 = vsel %vm315, %v954, 0
        %989 = vmatprep.subr.bf16.mxu0 %v975
        %990 = vmatpush1.bf16.msra.mxu0 %v974
        %991 = vmatprep.subr.bf16.mxu0 %v977
        %992 = vmatpush1.bf16.msra.mxu0 %v976
        %993 = vmatprep.subr.bf16.mxu0 %v979
        %994 = vmatpush1.bf16.msra.mxu0 %v978
        %995 = vmatprep.subr.bf16.mxu0 0
        %996 = vmatpush1.bf16.msra.mxu0 0
        %997 = vmatprep.subr.bf16.mxu0 0
        %998 = vmatpush1.bf16.msra.mxu0 0
        %999 = vmatprep.subr.bf16.mxu0 0
        %1000 = vmatpush1.bf16.msra.mxu0 0
        %1001 = vmatprep.subr.bf16.mxu0 0
        %1002 = vmatpush1.bf16.msra.mxu0 0
        %1003 = vmatprep.subr.bf16.mxu0 0
        %1004 = vmatpush1.bf16.msra.mxu0 0
        %1005 = vmatprep.subr.bf16.mxu0 0
        %1006 = vmatpush1.bf16.msra.mxu0 0
        %1007 = vmatprep.subr.bf16.mxu0 0
        %1008 = vmatpush1.bf16.msra.mxu0 0
        %1009 = vmatprep.subr.bf16.mxu0 0
        %1010 = vmatpush1.bf16.msra.mxu0 0
        %1011 = vmatprep.subr.bf16.mxu0 0
        %1012 = vmatpush1.bf16.msra.mxu0 0
        %1013 = vmatprep.subr.bf16.mxu0 0
        %1014 = vmatpush1.bf16.msra.mxu0 0
        %1015 = vmatprep.subr.bf16.mxu0 0
        %1016 = vmatpush1.bf16.msra.mxu0 0
        %1017 = vmatprep.subr.bf16.mxu0 0
        %1018 = vmatpush1.bf16.msra.mxu0 0
        %1019 = vmatprep.subr.bf16.mxu0 0
        %1020 = vmatpush1.bf16.msra.mxu0 0
        %1021 = vmatprep.mubr.bf16.mxu0 0
        %1022 = vmatmul.mubr.bf16.gmra.mrb[0].mxu0 %v987
        %v1023 = vpop.f32.mrb[0].mxu0
        %v1024 = vadd.f32 0.0, %v1023
        %v1025 = vpop.f32.mrb[0].mxu0
        %v1026 = vadd.f32 0.0, %v1025
        %v1027 = vpop.f32.mrb[0].mxu0
        %v1028 = vadd.f32 0.0, %v1027
        %v1029 = vpop.f32.mrb[0].mxu0
        %v1030 = vadd.f32 0.0, %v1029
        %1031 = vdwg.mxu0
        %v1032 = vadd.f32 %v943, %v1024
        %v1033 = vadd.f32 %v944, %v1026
        %v1034 = vadd.f32 %v945, %v1028
        %v1035 = vadd.f32 %v946, %v1030
        %v1036 = vld [vmem:[%s1] sm:$0xff]
        %v1037 = vld [vmem:[%s1 + $0x8] sm:$0xff]
        %1039 = vset.pattern.permute.xlu0 0
        %1040 = vperm.xlu0 %1039, %v1036
        %v1041 = vpop.permute.xlu0 %1040
        %1044 = vset.pattern.permute.xlu0 0
        %1045 = vperm.xlu0 %1044, %v1037
        %v1046 = vpop.permute.xlu0 %1045
        %v1048 = vadd.f32 %v1032, %v1041
        %v1049 = vadd.f32 %v1033, %v1041
        %v1050 = vadd.f32 %v1034, %v1046
        %v1051 = vadd.f32 %v1035, %v1046
        %v1052 = vmax.f32 %v1048, 0.0
        %v1053 = vmax.f32 %v1049, 0.0
        %v1054 = vmax.f32 %v1050, 0.0
        %v1055 = vmax.f32 %v1051, 0.0
        %v1056 = vpack.c.bf16 %v1054, %v1052
        %v1057 = vpack.c.bf16 %v1055, %v1053
        %v1060 = vunpack.c.l.b16 %v1056
        %v1061 = vunpack.c.l.b16 %v1057
        %v1062 = vunpack.c.h.b16 %v1056
        %v1063 = vunpack.c.h.b16 %v1057
        %v1064 = vpack.c.b16 %v1061, %v1060
        %v1065 = vpack.c.b16 %v1063, %v1062
        %1068 = vst [vmem:[%s118] sm:$0xff] %v1064
        %1069 = vst [vmem:[%s118 + $0x8] sm:$0xff] %v1065
        %s1070 = sand.u32 %s64, 1
        %s1071 = sand.u32 %s64, 1
        %s1072 = smul.addr %s1071, 16
        %s1073 = scalar_lea.vmem [#allocation4], %s1072
        // Predicated region
        $region66: #{_device_forward.3} parent=27 // pred_check
          %p1074 = pneg %p74
        $region67: #{_device_forward.3} parent=27 // pred_check_branch
          %1076 = sbr.rel (%p1074) target = $region69
        $region68: #{_device_forward.3} parent=27 // pred_region
          %s1077 = smul.u32 2, %s14
          %s1078 = smul.addr %s1077, 4
          %s1079 = scalar_lea.vmem %s3, %s1078
          // Predicated region
          $region70: #{_device_forward.3} parent=68 // pred_check
            _
          $region71: #{_device_forward.3} parent=68 // pred_check_branch
            %1081 = sbr.rel (0) target = $region73
          $region72: #{_device_forward.3} parent=68 // pred_region
            // Predicated region
            $region74: #{_device_forward.3} parent=72 // pred_check
              _
            $region75: #{_device_forward.3} parent=72 // pred_check_branch
              %1083 = sbr.rel (0) target = $region77
            $region76: #{_device_forward.3} parent=72 // pred_region
              // Predicated region
              $region89: #{_device_forward.3} parent=76 // pred_check
                _
              $region90: #{_device_forward.3} parent=76 // pred_check_branch
                %1100 = sbr.rel (0) target = $region92
              $region91: #{_device_forward.3} parent=76 // pred_region
                loop: start=0, step=1, limit=1
                $region93: #{_device_forward.3} parent=91 // loop_pre_header
                  _
                $region94: #{_device_forward.3} parent=91 // loop_header
                  %s1102 = sphi 0, %s1106
                  %p1103 = scmp.ge.s32.totalorder %s1102, 1
                  %s1107 = sphi %s1073, %s1073
                  %s1108 = sphi %s1079, %s1079
                $region95: #{_device_forward.3} parent=91 // loop_header_branch
                  %1105 = sbr.rel (%p1103) target = $region99
                $region96: #{_device_forward.3} parent=91 // loop_body
                  %v1109 = vld [vmem:[%s1107] sm:$0xff]
                  %1110 = vst [vmem:[%s1108] sm:$0xff] %v1109
                  %v1111 = vld [vmem:[%s1107 + $0x8] sm:$0xff]
                  %1112 = vst [vmem:[%s1108 + $0x10] sm:$0xff] %v1111
                $region97: #{_device_forward.3} parent=91 // loop_footer
                  %s1106 = sadd.s32 1, %s1102
                $region98: #{_device_forward.3} parent=91 // loop_footer_branch
                  %1101 = sbr.rel target = $region94
                $region99: #{_device_forward.3} parent=91 // loop_exit
                  _
              $region92: #{_device_forward.3} parent=76 // pred_fallthru
                _
              // Predicated region
              $region100: #{_device_forward.3} parent=76 // pred_check
                _
              $region101: #{_device_forward.3} parent=76 // pred_check_branch
                %1114 = sbr.rel target = $region103
              $region102: #{_device_forward.3} parent=76 // pred_region
                _
              $region103: #{_device_forward.3} parent=76 // pred_fallthru
                _
            $region77: #{_device_forward.3} parent=72 // pred_fallthru
              _
            // Predicated region
            $region78: #{_device_forward.3} parent=72 // pred_check
              _
            $region79: #{_device_forward.3} parent=72 // pred_check_branch
              %1085 = sbr.rel target = $region81
            $region80: #{_device_forward.3} parent=72 // pred_region
              loop: start=0, step=1, limit=1
              $region82: #{_device_forward.3} parent=80 // loop_pre_header
                _
              $region83: #{_device_forward.3} parent=80 // loop_header
                %s1088 = sphi 0, %s1092
                %p1089 = scmp.ge.s32.totalorder %s1088, 1
                %s1093 = sphi %s1073, %s1073
                %s1094 = sphi %s1079, %s1079
              $region84: #{_device_forward.3} parent=80 // loop_header_branch
                %1091 = sbr.rel (%p1089) target = $region88
              $region85: #{_device_forward.3} parent=80 // loop_body
                %v1095 = vld [vmem:[%s1093] sm:$0xff]
                %1096 = vst [vmem:[%s1094] sm:$0xff] %v1095
                %v1097 = vld [vmem:[%s1093 + $0x8] sm:$0xff]
                %1098 = vst [vmem:[%s1094 + $0x10] sm:$0xff] %v1097
              $region86: #{_device_forward.3} parent=80 // loop_footer
                %s1092 = sadd.s32 1, %s1088
              $region87: #{_device_forward.3} parent=80 // loop_footer_branch
                %1087 = sbr.rel target = $region83
              $region88: #{_device_forward.3} parent=80 // loop_exit
                _
            $region81: #{_device_forward.3} parent=72 // pred_fallthru
              _
          $region73: #{_device_forward.3} parent=68 // pred_fallthru
            _
          %1115 = vnop
        $region69: #{_device_forward.3} parent=27 // pred_fallthru
          _
      $region28: #{_device_forward.3} parent=5 // pred_fallthru
        _
      %p1116 = scmp.le.s32.totalorder 2, %s9
      // Predicated region
      $region104: #{_device_forward.3} parent=5 // pred_check
        %p1117 = pneg %p1116
      $region105: #{_device_forward.3} parent=5 // pred_check_branch
        %1119 = sbr.rel (%p1117) target = $region107
      $region106: #{_device_forward.3} parent=5 // pred_region
        %s1120 = ssub.s32 %s9, 2
        // Predicated region
        $region108: #{_device_forward.3} parent=106 // pred_check
          %p1121 = pneg %p80
        $region109: #{_device_forward.3} parent=106 // pred_check_branch
          %1123 = sbr.rel (%p1121) target = $region111
        $region110: #{_device_forward.3} parent=106 // pred_region
          %s1124 = sand.u32 %s65, 1
          %s1125 = sand.u32 %s65, 1
          %s1126 = smul.addr %s1125, 16
          %s1127 = scalar_lea.vmem [#allocation4], %s1126
        $region111: #{_device_forward.3} parent=106 // pred_fallthru
          _
      $region107: #{_device_forward.3} parent=5 // pred_fallthru
        _
    $region6: #{_device_forward.3} parent=1 // loop_footer
      %s13 = sadd.s32 1, %s9
    $region7: #{_device_forward.3} parent=1 // loop_footer_branch
      %8 = sbr.rel target = $region3
    $region8: #{_device_forward.3} parent=1 // loop_exit
      _
  %1128 = vsyncmov [#allocation3]
  %s1129 = vpop.sfrf %1128
  %p1130 = scmp.eq.s32.totalorder %s1129, 0
  %p1131 = pneg %p1130
  %1133 = shalt.err (%p1131)

// kernel: _device_forward.4
$region0: #{_device_forward.4}
  #allocation0 [shape = 'u32[]', space=smem, size = 0x4, offset = 0x4, fixed_abs, tag = 'smem constant byte address 0x4 - core index']
  #allocation1 [shape = 'u32[144,128]{1,0:T(1,128)}', space=vmem, size = 0x12000, scoped, tag = 'internal scratch']
  #allocation2 [shape = 'bf16[64,256]{1,0:T(16,128)(2,1)}', space=vmem, size = 0x8000, scoped, tag = 'scratch operand']
  #allocation3 [shape = 's32[1]{0}', space=sflag, size = 0x4, scoped, tag = 'scratch operand']
  #allocation4 [shape = 's32[]', space=sflag, size = 0x4, offset = 0, fixed_abs, tag = 'sflag constant byte address 0x0 - dummy sync flag']
  %s0 = inlined_call_operand.vmem [shape: bf16[9,32,64], index: 0, kind: input, shape index: {}]
  %s1 = inlined_call_operand.vmem [shape: f32[32,1], index: 1, kind: input, shape index: {}]
  %s2 = inlined_call_operand.vmem [shape: bf16[64,256], index: 2, kind: input, shape index: {}]
  %s3 = inlined_call_operand.vmem [shape: bf16[32,128], index: 3, kind: output, shape index: {}]
  %s4 = sld [smem:[#allocation0]]
  $region55: #{_device_forward.4} parent=0
    _
  %s6 = ssub.s32 1, %s4
  %s7 = scalar_select 0, %s6, %s4
  // Predicated region
  $region2: #{_device_forward.4} parent=0 // pred_check
    _
  $region3: #{_device_forward.4} parent=0 // pred_check_branch
    %9 = sbr.rel (0) target = $region5
  $region4: #{_device_forward.4} parent=0 // pred_region
    _
  $region5: #{_device_forward.4} parent=0 // pred_fallthru
    _
  // Predicated region
  $region6: #{_device_forward.4} parent=0 // pred_check
    _
  $region7: #{_device_forward.4} parent=0 // pred_check_branch
    %11 = sbr.rel (0) target = $region9
  $region8: #{_device_forward.4} parent=0 // pred_region
    _
  $region9: #{_device_forward.4} parent=0 // pred_fallthru
    _
  %s13 = smul.u32 0, 128
  %s14 = sshra.s32 %s13, 7
  %s15 = sand.u32 %s13, 127
  %s16 = smul.addr %s14, 4
  %s17 = scalar_lea.vmem %s2, %s16
  %p19 = scmp.lt.u32.totalorder 4, 8
  %p20 = pneg %p19
  // Predicated region
  $region10: #{_device_forward.4} parent=0 // pred_check
    _
  $region11: #{_device_forward.4} parent=0 // pred_check_branch
    %22 = sbr.rel (%p19) target = $region13
  $region12: #{_device_forward.4} parent=0 // pred_region
    %s67 = sand.u32 4, 7
    %p68 = scmp.eq.s32.totalorder %s67, 0
    %p69 = pneg %p68
    // Predicated region
    $region25: #{_device_forward.4} parent=12 // pred_check
      _
    $region26: #{_device_forward.4} parent=12 // pred_check_branch
      %71 = sbr.rel (%p68) target = $region28
    $region27: #{_device_forward.4} parent=12 // pred_region
      %s72 = sand.u32 4, 7
      %s73 = ssub.s32 4, %s72
      %s74 = scalar_lea.vmem %s17, %s73
      %s75 = ssub.s32 4, %s72
      %s76 = scalar_lea.vmem [#allocation2], %s75
      loop: start=0, step=1, limit=1
      $region29: #{_device_forward.4} parent=27 // loop_pre_header
        _
      $region30: #{_device_forward.4} parent=27 // loop_header
        %s78 = sphi 0, %s82
        %p79 = scmp.ge.s32.totalorder %s78, 1
        %s83 = sphi %s17, %s17
        %s84 = sphi [#allocation2], [#allocation2]
      $region31: #{_device_forward.4} parent=27 // loop_header_branch
        %81 = sbr.rel (%p79) target = $region35
      $region32: #{_device_forward.4} parent=27 // loop_body
        _
      $region33: #{_device_forward.4} parent=27 // loop_footer
        %s82 = sadd.s32 1, %s78
      $region34: #{_device_forward.4} parent=27 // loop_footer_branch
        %77 = sbr.rel target = $region30
      $region35: #{_device_forward.4} parent=27 // loop_exit
        _
      %s85 = sshllo.u32 0, %s72
      loop: start=0, step=1, limit=1
      $region36: #{_device_forward.4} parent=27 // loop_pre_header
        _
      $region37: #{_device_forward.4} parent=27 // loop_header
        %s87 = sphi 0, %s91
        %p88 = scmp.ge.s32.totalorder %s87, 1
        %s92 = sphi %s74, %s74
        %s93 = sphi %s76, %s76
      $region38: #{_device_forward.4} parent=27 // loop_header_branch
        %90 = sbr.rel (%p88) target = $region42
      $region39: #{_device_forward.4} parent=27 // loop_body
        %v94 = vld [vmem:[%s92] sm:%s85]
        %95 = vst [vmem:[%s93] sm:%s85] %v94
        %v96 = vld [vmem:[%s92 + $0x8] sm:%s85]
        %97 = vst [vmem:[%s93 + $0x4] sm:%s85] %v96
        %v98 = vld [vmem:[%s92 + $0x4] sm:%s85]
        %99 = vst [vmem:[%s93 + $0x8] sm:%s85] %v98
        %v100 = vld [vmem:[%s92 + $0xc] sm:%s85]
        %101 = vst [vmem:[%s93 + $0xc] sm:%s85] %v100
        %v102 = vld [vmem:[%s92 + $0x10] sm:%s85]
        %103 = vst [vmem:[%s93 + $0x10] sm:%s85] %v102
        %v104 = vld [vmem:[%s92 + $0x18] sm:%s85]
        %105 = vst [vmem:[%s93 + $0x14] sm:%s85] %v104
        %v106 = vld [vmem:[%s92 + $0x14] sm:%s85]
        %107 = vst [vmem:[%s93 + $0x18] sm:%s85] %v106
        %v108 = vld [vmem:[%s92 + $0x1c] sm:%s85]
        %109 = vst [vmem:[%s93 + $0x1c] sm:%s85] %v108
        %v110 = vld [vmem:[%s92 + $0x20] sm:%s85]
        %111 = vst [vmem:[%s93 + $0x20] sm:%s85] %v110
        %v112 = vld [vmem:[%s92 + $0x28] sm:%s85]
        %113 = vst [vmem:[%s93 + $0x24] sm:%s85] %v112
        %v114 = vld [vmem:[%s92 + $0x24] sm:%s85]
        %115 = vst [vmem:[%s93 + $0x28] sm:%s85] %v114
        %v116 = vld [vmem:[%s92 + $0x2c] sm:%s85]
        %117 = vst [vmem:[%s93 + $0x2c] sm:%s85] %v116
        %v118 = vld [vmem:[%s92 + $0x30] sm:%s85]
        %119 = vst [vmem:[%s93 + $0x30] sm:%s85] %v118
        %v120 = vld [vmem:[%s92 + $0x38] sm:%s85]
        %121 = vst [vmem:[%s93 + $0x34] sm:%s85] %v120
        %v122 = vld [vmem:[%s92 + $0x34] sm:%s85]
        %123 = vst [vmem:[%s93 + $0x38] sm:%s85] %v122
        %v124 = vld [vmem:[%s92 + $0x3c] sm:%s85]
        %125 = vst [vmem:[%s93 + $0x3c] sm:%s85] %v124
      $region40: #{_device_forward.4} parent=27 // loop_footer
        %s91 = sadd.s32 1, %s87
      $region41: #{_device_forward.4} parent=27 // loop_footer_branch
        %86 = sbr.rel target = $region37
      $region42: #{_device_forward.4} parent=27 // loop_exit
        _
    $region28: #{_device_forward.4} parent=12 // pred_fallthru
      _
  $region13: #{_device_forward.4} parent=0 // pred_fallthru
    _
  // Predicated region
  $region14: #{_device_forward.4} parent=0 // pred_check
    %p23 = pneg %p19
  $region15: #{_device_forward.4} parent=0 // pred_check_branch
    %25 = sbr.rel (%p23) target = $region17
  $region16: #{_device_forward.4} parent=0 // pred_region
    %s26 = sshllo.u32 0, 4
    loop: start=0, step=1, limit=1
    $region18: #{_device_forward.4} parent=16 // loop_pre_header
      _
    $region19: #{_device_forward.4} parent=16 // loop_header
      %s28 = sphi 0, %s32
      %p29 = scmp.ge.s32.totalorder %s28, 1
      %s33 = sphi %s17, %s17
      %s34 = sphi [#allocation2], [#allocation2]
    $region20: #{_device_forward.4} parent=16 // loop_header_branch
      %31 = sbr.rel (%p29) target = $region24
    $region21: #{_device_forward.4} parent=16 // loop_body
      %v35 = vld [vmem:[%s33] sm:%s26]
      %36 = vst [vmem:[%s34] sm:%s26] %v35
      %v37 = vld [vmem:[%s33 + $0x8] sm:%s26]
      %38 = vst [vmem:[%s34 + $0x4] sm:%s26] %v37
      %v39 = vld [vmem:[%s33 + $0x4] sm:%s26]
      %40 = vst [vmem:[%s34 + $0x8] sm:%s26] %v39
      %v41 = vld [vmem:[%s33 + $0xc] sm:%s26]
      %42 = vst [vmem:[%s34 + $0xc] sm:%s26] %v41
      %v43 = vld [vmem:[%s33 + $0x10] sm:%s26]
      %44 = vst [vmem:[%s34 + $0x10] sm:%s26] %v43
      %v45 = vld [vmem:[%s33 + $0x18] sm:%s26]
      %46 = vst [vmem:[%s34 + $0x14] sm:%s26] %v45
      %v47 = vld [vmem:[%s33 + $0x14] sm:%s26]
      %48 = vst [vmem:[%s34 + $0x18] sm:%s26] %v47
      %v49 = vld [vmem:[%s33 + $0x1c] sm:%s26]
      %50 = vst [vmem:[%s34 + $0x1c] sm:%s26] %v49
      %v51 = vld [vmem:[%s33 + $0x20] sm:%s26]
      %52 = vst [vmem:[%s34 + $0x20] sm:%s26] %v51
      %v53 = vld [vmem:[%s33 + $0x28] sm:%s26]
      %54 = vst [vmem:[%s34 + $0x24] sm:%s26] %v53
      %v55 = vld [vmem:[%s33 + $0x24] sm:%s26]
      %56 = vst [vmem:[%s34 + $0x28] sm:%s26] %v55
      %v57 = vld [vmem:[%s33 + $0x2c] sm:%s26]
      %58 = vst [vmem:[%s34 + $0x2c] sm:%s26] %v57
      %v59 = vld [vmem:[%s33 + $0x30] sm:%s26]
      %60 = vst [vmem:[%s34 + $0x30] sm:%s26] %v59
      %v61 = vld [vmem:[%s33 + $0x38] sm:%s26]
      %62 = vst [vmem:[%s34 + $0x34] sm:%s26] %v61
      %v63 = vld [vmem:[%s33 + $0x34] sm:%s26]
      %64 = vst [vmem:[%s34 + $0x38] sm:%s26] %v63
      %v65 = vld [vmem:[%s33 + $0x3c] sm:%s26]
      %66 = vst [vmem:[%s34 + $0x3c] sm:%s26] %v65
    $region22: #{_device_forward.4} parent=16 // loop_footer
      %s32 = sadd.s32 1, %s28
    $region23: #{_device_forward.4} parent=16 // loop_footer_branch
      %27 = sbr.rel target = $region19
    $region24: #{_device_forward.4} parent=16 // loop_exit
      _
  $region17: #{_device_forward.4} parent=0 // pred_fallthru
    _
  // Predicated region
  $region43: #{_device_forward.4} parent=0 // pred_check
    _
  $region44: #{_device_forward.4} parent=0 // pred_check_branch
    %128 = sbr.rel (0) target = $region46
  $region45: #{_device_forward.4} parent=0 // pred_region
    %129 = vsyncadd [#allocation3], 1024
  $region46: #{_device_forward.4} parent=0 // pred_fallthru
    _
  %s130 = smul.u32 4, 8
  %s131 = smul.u32 %s130, 2
  %s132 = sshll.u32 %s131, 4
  %133 = dma.done [#allocation3], %s132
  %v134 = vld [vmem:[%s0] sm:$0xf]
  %v135 = vld [vmem:[%s0 + $0x4] sm:$0xf]
  %v136 = vld [vmem:[%s0 + $0x8] sm:$0xf]
  %v137 = vld [vmem:[%s0 + $0xc] sm:$0xf]
  %v138 = vld [vmem:[#allocation2] sm:$0xff]
  %v139 = vld [vmem:[#allocation2 + $0x10] sm:$0xff]
  %v140 = vld [vmem:[#allocation2 + $0x20] sm:$0xff]
  %v141 = vld [vmem:[#allocation2 + $0x30] sm:$0xff]
  %s142 = scalar_lea.vmem %s0, 16
  %v143 = vld [vmem:[%s142] sm:$0xf]
  %v144 = vld [vmem:[%s142 + $0x4] sm:$0xf]
  %v145 = vld [vmem:[%s142 + $0x8] sm:$0xf]
  %v146 = vld [vmem:[%s142 + $0xc] sm:$0xf]
  %v147 = vld [vmem:[#allocation2] sm:$0xff]
  %v148 = vld [vmem:[#allocation2 + $0x8] sm:$0xff]
  %v149 = vld [vmem:[#allocation2 + $0x10] sm:$0xff]
  %v150 = vld [vmem:[#allocation2 + $0x18] sm:$0xff]
  %v151 = vld [vmem:[#allocation2 + $0x20] sm:$0xff]
  %v152 = vld [vmem:[#allocation2 + $0x28] sm:$0xff]
  %v153 = vld [vmem:[#allocation2 + $0x30] sm:$0xff]
  %v154 = vld [vmem:[#allocation2 + $0x38] sm:$0xff]
  %v159 = vunpack.c.l.b16 %v143
  %v160 = vunpack.c.l.b16 %v144
  %v161 = vunpack.c.l.b16 %v145
  %v162 = vunpack.c.l.b16 %v146
  %v163 = vpack.c.b16 %v160, %v159
  %v164 = vpack.c.b16 %v162, %v161
  %173 = vrot.lane.b32.xlu0 %v147, 127
  %v174 = vpop.permute.xlu0 %173
  %175 = vrot.lane.b32.xlu0 %v148, 127
  %v176 = vpop.permute.xlu0 %175
  %177 = vrot.lane.b32.xlu0 %v149, 127
  %v178 = vpop.permute.xlu0 %177
  %179 = vrot.lane.b32.xlu0 %v150, 127
  %v180 = vpop.permute.xlu0 %179
  %181 = vrot.lane.b32.xlu0 %v151, 127
  %v182 = vpop.permute.xlu0 %181
  %183 = vrot.lane.b32.xlu0 %v152, 127
  %v184 = vpop.permute.xlu0 %183
  %185 = vrot.lane.b32.xlu0 %v153, 127
  %v186 = vpop.permute.xlu0 %185
  %187 = vrot.lane.b32.xlu0 %v154, 127
  %v188 = vpop.permute.xlu0 %187
  %vm189 = vcmask 1039360
  %v190 = vsel %vm189, %v174, %v176
  %v191 = vsel %vm189, %v178, %v180
  %v192 = vsel %vm189, %v182, %v184
  %v193 = vsel %vm189, %v186, %v188
  %vm198 = vcmask 523264
  %v200 = vsel %vm198, %v163, 0
  %v203 = vsel %vm198, %v164, 0
  %205 = vmatprep.subr.bf16.mxu0 0
  %206 = vmatpush1.bf16.msra.mxu0 %v190
  %207 = vmatprep.subr.bf16.mxu0 0
  %208 = vmatpush1.bf16.msra.mxu0 %v191
  %209 = vmatprep.subr.bf16.mxu0 0
  %210 = vmatpush1.bf16.msra.mxu0 %v192
  %211 = vmatprep.subr.bf16.mxu0 0
  %212 = vmatpush1.bf16.msra.mxu0 %v193
  %213 = vmatprep.subr.bf16.mxu0 0
  %214 = vmatpush1.bf16.msra.mxu0 0
  %215 = vmatprep.subr.bf16.mxu0 0
  %216 = vmatpush1.bf16.msra.mxu0 0
  %217 = vmatprep.subr.bf16.mxu0 0
  %218 = vmatpush1.bf16.msra.mxu0 0
  %219 = vmatprep.subr.bf16.mxu0 0
  %220 = vmatpush1.bf16.msra.mxu0 0
  %221 = vmatprep.subr.bf16.mxu0 0
  %222 = vmatpush1.bf16.msra.mxu0 0
  %223 = vmatprep.subr.bf16.mxu0 0
  %224 = vmatpush1.bf16.msra.mxu0 0
  %225 = vmatprep.subr.bf16.mxu0 0
  %226 = vmatpush1.bf16.msra.mxu0 0
  %227 = vmatprep.subr.bf16.mxu0 0
  %228 = vmatpush1.bf16.msra.mxu0 0
  %229 = vmatprep.subr.bf16.mxu0 0
  %230 = vmatpush1.bf16.msra.mxu0 0
  %231 = vmatprep.subr.bf16.mxu0 0
  %232 = vmatpush1.bf16.msra.mxu0 0
  %233 = vmatprep.subr.bf16.mxu0 0
  %234 = vmatpush1.bf16.msra.mxu0 0
  %235 = vmatprep.subr.bf16.mxu0 0
  %236 = vmatpush1.bf16.msra.mxu0 0
  %237 = vmatprep.mubr.bf16.mxu0 0
  %238 = vmatmul.mubr.bf16.gmra.mrb[0].mxu0 %v200
  %v239 = vpop.f32.mrb[0].mxu0
  %v240 = vadd.f32 0.0, %v239
  %v241 = vpop.f32.mrb[0].mxu0
  %v242 = vpop.f32.mrb[0].mxu0
  %v243 = vadd.f32 0.0, %v242
  %v244 = vpop.f32.mrb[0].mxu0
  %245 = vmatprep.mubr.bf16.mxu0 0
  %246 = vmatmul.mubr.bf16.gmra.mrb[0].mxu0 %v203
  %v247 = vpop.f32.mrb[0].mxu0
  %v248 = vadd.f32 0.0, %v247
  %v249 = vpop.f32.mrb[0].mxu0
  %v250 = vpop.f32.mrb[0].mxu0
  %v251 = vadd.f32 0.0, %v250
  %v252 = vpop.f32.mrb[0].mxu0
  %253 = vdwg.mxu0
  %v258 = vunpack.c.l.b16 %v134
  %v259 = vunpack.c.l.b16 %v135
  %v260 = vunpack.c.l.b16 %v136
  %v261 = vunpack.c.l.b16 %v137
  %v262 = vpack.c.b16 %v259, %v258
  %v263 = vpack.c.b16 %v261, %v260
  %v265 = vsel %vm198, %v262, 0
  %v268 = vsel %vm198, %v263, 0
  %270 = vmatprep.subr.bf16.mxu0 0
  %271 = vmatpush1.bf16.msra.mxu0 %v138
  %272 = vmatprep.subr.bf16.mxu0 0
  %273 = vmatpush1.bf16.msra.mxu0 %v139
  %274 = vmatprep.subr.bf16.mxu0 0
  %275 = vmatpush1.bf16.msra.mxu0 %v140
  %276 = vmatprep.subr.bf16.mxu0 0
  %277 = vmatpush1.bf16.msra.mxu0 %v141
  %278 = vmatprep.subr.bf16.mxu0 0
  %279 = vmatpush1.bf16.msra.mxu0 0
  %280 = vmatprep.subr.bf16.mxu0 0
  %281 = vmatpush1.bf16.msra.mxu0 0
  %282 = vmatprep.subr.bf16.mxu0 0
  %283 = vmatpush1.bf16.msra.mxu0 0
  %284 = vmatprep.subr.bf16.mxu0 0
  %285 = vmatpush1.bf16.msra.mxu0 0
  %286 = vmatprep.subr.bf16.mxu0 0
  %287 = vmatpush1.bf16.msra.mxu0 0
  %288 = vmatprep.subr.bf16.mxu0 0
  %289 = vmatpush1.bf16.msra.mxu0 0
  %290 = vmatprep.subr.bf16.mxu0 0
  %291 = vmatpush1.bf16.msra.mxu0 0
  %292 = vmatprep.subr.bf16.mxu0 0
  %293 = vmatpush1.bf16.msra.mxu0 0
  %294 = vmatprep.subr.bf16.mxu0 0
  %295 = vmatpush1.bf16.msra.mxu0 0
  %296 = vmatprep.subr.bf16.mxu0 0
  %297 = vmatpush1.bf16.msra.mxu0 0
  %298 = vmatprep.subr.bf16.mxu0 0
  %299 = vmatpush1.bf16.msra.mxu0 0
  %300 = vmatprep.subr.bf16.mxu0 0
  %301 = vmatpush1.bf16.msra.mxu0 0
  %302 = vmatprep.mubr.bf16.mxu0 0
  %303 = vmatmul.mubr.bf16.gmra.mrb[0].mxu0 %v265
  %v304 = vpop.f32.mrb[0].mxu0
  %v305 = vadd.f32 %v240, %v304
  %v306 = vpop.f32.mrb[0].mxu0
  %v307 = vpop.f32.mrb[0].mxu0
  %v308 = vadd.f32 %v243, %v307
  %v309 = vpop.f32.mrb[0].mxu0
  %310 = vmatprep.mubr.bf16.mxu0 0
  %311 = vmatmul.mubr.bf16.gmra.mrb[0].mxu0 %v268
  %v312 = vpop.f32.mrb[0].mxu0
  %v313 = vadd.f32 %v248, %v312
  %v314 = vpop.f32.mrb[0].mxu0
  %v315 = vpop.f32.mrb[0].mxu0
  %v316 = vadd.f32 %v251, %v315
  %v317 = vpop.f32.mrb[0].mxu0
  %318 = vdwg.mxu0
  %s319 = scalar_lea.vmem %s0, 32
  %v320 = vld [vmem:[%s319] sm:$0xf]
  %v321 = vld [vmem:[%s319 + $0x4] sm:$0xf]
  %v322 = vld [vmem:[%s319 + $0x8] sm:$0xf]
  %v323 = vld [vmem:[%s319 + $0xc] sm:$0xf]
  %v328 = vunpack.c.l.b16 %v320
  %v329 = vunpack.c.l.b16 %v321
  %v330 = vunpack.c.l.b16 %v322
  %v331 = vunpack.c.l.b16 %v323
  %v332 = vpack.c.b16 %v329, %v328
  %v333 = vpack.c.b16 %v331, %v330
  %334 = vrot.lane.b32.xlu0 %v147, 126
  %v335 = vpop.permute.xlu0 %334
  %336 = vrot.lane.b32.xlu0 %v148, 126
  %v337 = vpop.permute.xlu0 %336
  %338 = vrot.lane.b32.xlu0 %v149, 126
  %v339 = vpop.permute.xlu0 %338
  %340 = vrot.lane.b32.xlu0 %v150, 126
  %v341 = vpop.permute.xlu0 %340
  %342 = vrot.lane.b32.xlu0 %v151, 126
  %v343 = vpop.permute.xlu0 %342
  %344 = vrot.lane.b32.xlu0 %v152, 126
  %v345 = vpop.permute.xlu0 %344
  %346 = vrot.lane.b32.xlu0 %v153, 126
  %v347 = vpop.permute.xlu0 %346
  %348 = vrot.lane.b32.xlu0 %v154, 126
  %v349 = vpop.permute.xlu0 %348
  %vm350 = vcmask 1031168
  %v351 = vsel %vm350, %v335, %v337
  %v352 = vsel %vm350, %v339, %v341
  %v353 = vsel %vm350, %v343, %v345
  %v354 = vsel %vm350, %v347, %v349
  %v360 = vsel %vm198, %v332, 0
  %v363 = vsel %vm198, %v333, 0
  %365 = vmatprep.subr.bf16.mxu0 0
  %366 = vmatpush1.bf16.msra.mxu0 %v351
  %367 = vmatprep.subr.bf16.mxu0 0
  %368 = vmatpush1.bf16.msra.mxu0 %v352
  %369 = vmatprep.subr.bf16.mxu0 0
  %370 = vmatpush1.bf16.msra.mxu0 %v353
  %371 = vmatprep.subr.bf16.mxu0 0
  %372 = vmatpush1.bf16.msra.mxu0 %v354
  %373 = vmatprep.subr.bf16.mxu0 0
  %374 = vmatpush1.bf16.msra.mxu0 0
  %375 = vmatprep.subr.bf16.mxu0 0
  %376 = vmatpush1.bf16.msra.mxu0 0
  %377 = vmatprep.subr.bf16.mxu0 0
  %378 = vmatpush1.bf16.msra.mxu0 0
  %379 = vmatprep.subr.bf16.mxu0 0
  %380 = vmatpush1.bf16.msra.mxu0 0
  %381 = vmatprep.subr.bf16.mxu0 0
  %382 = vmatpush1.bf16.msra.mxu0 0
  %383 = vmatprep.subr.bf16.mxu0 0
  %384 = vmatpush1.bf16.msra.mxu0 0
  %385 = vmatprep.subr.bf16.mxu0 0
  %386 = vmatpush1.bf16.msra.mxu0 0
  %387 = vmatprep.subr.bf16.mxu0 0
  %388 = vmatpush1.bf16.msra.mxu0 0
  %389 = vmatprep.subr.bf16.mxu0 0
  %390 = vmatpush1.bf16.msra.mxu0 0
  %391 = vmatprep.subr.bf16.mxu0 0
  %392 = vmatpush1.bf16.msra.mxu0 0
  %393 = vmatprep.subr.bf16.mxu0 0
  %394 = vmatpush1.bf16.msra.mxu0 0
  %395 = vmatprep.subr.bf16.mxu0 0
  %396 = vmatpush1.bf16.msra.mxu0 0
  %397 = vmatprep.mubr.bf16.mxu0 0
  %398 = vmatmul.mubr.bf16.gmra.mrb[0].mxu0 %v360
  %v399 = vpop.f32.mrb[0].mxu0
  %v400 = vadd.f32 0.0, %v399
  %v401 = vpop.f32.mrb[0].mxu0
  %v402 = vpop.f32.mrb[0].mxu0
  %v403 = vadd.f32 0.0, %v402
  %v404 = vpop.f32.mrb[0].mxu0
  %405 = vmatprep.mubr.bf16.mxu0 0
  %406 = vmatmul.mubr.bf16.gmra.mrb[0].mxu0 %v363
  %v407 = vpop.f32.mrb[0].mxu0
  %v408 = vadd.f32 0.0, %v407
  %v409 = vpop.f32.mrb[0].mxu0
  %v410 = vpop.f32.mrb[0].mxu0
  %v411 = vadd.f32 0.0, %v410
  %v412 = vpop.f32.mrb[0].mxu0
  %413 = vdwg.mxu0
  %v414 = vadd.f32 %v305, %v400
  %v415 = vadd.f32 %v308, %v403
  %v416 = vadd.f32 %v313, %v408
  %v417 = vadd.f32 %v316, %v411
  %s418 = scalar_lea.vmem %s0, 48
  %v419 = vld [vmem:[%s418] sm:$0xf]
  %v420 = vld [vmem:[%s418 + $0x4] sm:$0xf]
  %v421 = vld [vmem:[%s418 + $0x8] sm:$0xf]
  %v422 = vld [vmem:[%s418 + $0xc] sm:$0xf]
  %v427 = vunpack.c.l.b16 %v419
  %v428 = vunpack.c.l.b16 %v420
  %v429 = vunpack.c.l.b16 %v421
  %v430 = vunpack.c.l.b16 %v422
  %v431 = vpack.c.b16 %v428, %v427
  %v432 = vpack.c.b16 %v430, %v429
  %433 = vrot.lane.b32.xlu0 %v147, 117
  %v434 = vpop.permute.xlu0 %433
  %435 = vrot.lane.b32.xlu0 %v148, 117
  %v436 = vpop.permute.xlu0 %435
  %437 = vrot.lane.b32.xlu0 %v149, 117
  %v438 = vpop.permute.xlu0 %437
  %439 = vrot.lane.b32.xlu0 %v150, 117
  %v440 = vpop.permute.xlu0 %439
  %441 = vrot.lane.b32.xlu0 %v151, 117
  %v442 = vpop.permute.xlu0 %441
  %443 = vrot.lane.b32.xlu0 %v152, 117
  %v444 = vpop.permute.xlu0 %443
  %445 = vrot.lane.b32.xlu0 %v153, 117
  %v446 = vpop.permute.xlu0 %445
  %447 = vrot.lane.b32.xlu0 %v154, 117
  %v448 = vpop.permute.xlu0 %447
  %vm449 = vcmask 957440
  %v450 = vsel %vm449, %v434, %v436
  %v451 = vsel %vm449, %v438, %v440
  %v452 = vsel %vm449, %v442, %v444
  %v453 = vsel %vm449, %v446, %v448
  %v459 = vsel %vm198, %v431, 0
  %v462 = vsel %vm198, %v432, 0
  %464 = vmatprep.subr.bf16.mxu0 0
  %465 = vmatpush1.bf16.msra.mxu0 %v450
  %466 = vmatprep.subr.bf16.mxu0 0
  %467 = vmatpush1.bf16.msra.mxu0 %v451
  %468 = vmatprep.subr.bf16.mxu0 0
  %469 = vmatpush1.bf16.msra.mxu0 %v452
  %470 = vmatprep.subr.bf16.mxu0 0
  %471 = vmatpush1.bf16.msra.mxu0 %v453
  %472 = vmatprep.subr.bf16.mxu0 0
  %473 = vmatpush1.bf16.msra.mxu0 0
  %474 = vmatprep.subr.bf16.mxu0 0
  %475 = vmatpush1.bf16.msra.mxu0 0
  %476 = vmatprep.subr.bf16.mxu0 0
  %477 = vmatpush1.bf16.msra.mxu0 0
  %478 = vmatprep.subr.bf16.mxu0 0
  %479 = vmatpush1.bf16.msra.mxu0 0
  %480 = vmatprep.subr.bf16.mxu0 0
  %481 = vmatpush1.bf16.msra.mxu0 0
  %482 = vmatprep.subr.bf16.mxu0 0
  %483 = vmatpush1.bf16.msra.mxu0 0
  %484 = vmatprep.subr.bf16.mxu0 0
  %485 = vmatpush1.bf16.msra.mxu0 0
  %486 = vmatprep.subr.bf16.mxu0 0
  %487 = vmatpush1.bf16.msra.mxu0 0
  %488 = vmatprep.subr.bf16.mxu0 0
  %489 = vmatpush1.bf16.msra.mxu0 0
  %490 = vmatprep.subr.bf16.mxu0 0
  %491 = vmatpush1.bf16.msra.mxu0 0
  %492 = vmatprep.subr.bf16.mxu0 0
  %493 = vmatpush1.bf16.msra.mxu0 0
  %494 = vmatprep.subr.bf16.mxu0 0
  %495 = vmatpush1.bf16.msra.mxu0 0
  %496 = vmatprep.mubr.bf16.mxu0 0
  %497 = vmatmul.mubr.bf16.gmra.mrb[0].mxu0 %v459
  %v498 = vpop.f32.mrb[0].mxu0
  %v499 = vadd.f32 0.0, %v498
  %v500 = vpop.f32.mrb[0].mxu0
  %v501 = vpop.f32.mrb[0].mxu0
  %v502 = vadd.f32 0.0, %v501
  %v503 = vpop.f32.mrb[0].mxu0
  %504 = vmatprep.mubr.bf16.mxu0 0
  %505 = vmatmul.mubr.bf16.gmra.mrb[0].mxu0 %v462
  %v506 = vpop.f32.mrb[0].mxu0
  %v507 = vadd.f32 0.0, %v506
  %v508 = vpop.f32.mrb[0].mxu0
  %v509 = vpop.f32.mrb[0].mxu0
  %v510 = vadd.f32 0.0, %v509
  %v511 = vpop.f32.mrb[0].mxu0
  %512 = vdwg.mxu0
  %v513 = vadd.f32 %v414, %v499
  %v514 = vadd.f32 %v415, %v502
  %v515 = vadd.f32 %v416, %v507
  %v516 = vadd.f32 %v417, %v510
  %s517 = scalar_lea.vmem %s0, 64
  %v518 = vld [vmem:[%s517] sm:$0xf]
  %v519 = vld [vmem:[%s517 + $0x4] sm:$0xf]
  %v520 = vld [vmem:[%s517 + $0x8] sm:$0xf]
  %v521 = vld [vmem:[%s517 + $0xc] sm:$0xf]
  %v526 = vunpack.c.l.b16 %v518
  %v527 = vunpack.c.l.b16 %v519
  %v528 = vunpack.c.l.b16 %v520
  %v529 = vunpack.c.l.b16 %v521
  %v530 = vpack.c.b16 %v527, %v526
  %v531 = vpack.c.b16 %v529, %v528
  %532 = vrot.lane.b32.xlu0 %v147, 116
  %v533 = vpop.permute.xlu0 %532
  %534 = vrot.lane.b32.xlu0 %v148, 116
  %v535 = vpop.permute.xlu0 %534
  %536 = vrot.lane.b32.xlu0 %v149, 116
  %v537 = vpop.permute.xlu0 %536
  %538 = vrot.lane.b32.xlu0 %v150, 116
  %v539 = vpop.permute.xlu0 %538
  %540 = vrot.lane.b32.xlu0 %v151, 116
  %v541 = vpop.permute.xlu0 %540
  %542 = vrot.lane.b32.xlu0 %v152, 116
  %v543 = vpop.permute.xlu0 %542
  %544 = vrot.lane.b32.xlu0 %v153, 116
  %v545 = vpop.permute.xlu0 %544
  %546 = vrot.lane.b32.xlu0 %v154, 116
  %v547 = vpop.permute.xlu0 %546
  %vm548 = vcmask 949248
  %v549 = vsel %vm548, %v533, %v535
  %v550 = vsel %vm548, %v537, %v539
  %v551 = vsel %vm548, %v541, %v543
  %v552 = vsel %vm548, %v545, %v547
  %v558 = vsel %vm198, %v530, 0
  %v561 = vsel %vm198, %v531, 0
  %563 = vmatprep.subr.bf16.mxu0 0
  %564 = vmatpush1.bf16.msra.mxu0 %v549
  %565 = vmatprep.subr.bf16.mxu0 0
  %566 = vmatpush1.bf16.msra.mxu0 %v550
  %567 = vmatprep.subr.bf16.mxu0 0
  %568 = vmatpush1.bf16.msra.mxu0 %v551
  %569 = vmatprep.subr.bf16.mxu0 0
  %570 = vmatpush1.bf16.msra.mxu0 %v552
  %571 = vmatprep.subr.bf16.mxu0 0
  %572 = vmatpush1.bf16.msra.mxu0 0
  %573 = vmatprep.subr.bf16.mxu0 0
  %574 = vmatpush1.bf16.msra.mxu0 0
  %575 = vmatprep.subr.bf16.mxu0 0
  %576 = vmatpush1.bf16.msra.mxu0 0
  %577 = vmatprep.subr.bf16.mxu0 0
  %578 = vmatpush1.bf16.msra.mxu0 0
  %579 = vmatprep.subr.bf16.mxu0 0
  %580 = vmatpush1.bf16.msra.mxu0 0
  %581 = vmatprep.subr.bf16.mxu0 0
  %582 = vmatpush1.bf16.msra.mxu0 0
  %583 = vmatprep.subr.bf16.mxu0 0
  %584 = vmatpush1.bf16.msra.mxu0 0
  %585 = vmatprep.subr.bf16.mxu0 0
  %586 = vmatpush1.bf16.msra.mxu0 0
  %587 = vmatprep.subr.bf16.mxu0 0
  %588 = vmatpush1.bf16.msra.mxu0 0
  %589 = vmatprep.subr.bf16.mxu0 0
  %590 = vmatpush1.bf16.msra.mxu0 0
  %591 = vmatprep.subr.bf16.mxu0 0
  %592 = vmatpush1.bf16.msra.mxu0 0
  %593 = vmatprep.subr.bf16.mxu0 0
  %594 = vmatpush1.bf16.msra.mxu0 0
  %595 = vmatprep.mubr.bf16.mxu0 0
  %596 = vmatmul.mubr.bf16.gmra.mrb[0].mxu0 %v558
  %v597 = vpop.f32.mrb[0].mxu0
  %v598 = vadd.f32 0.0, %v597
  %v599 = vpop.f32.mrb[0].mxu0
  %v600 = vpop.f32.mrb[0].mxu0
  %v601 = vadd.f32 0.0, %v600
  %v602 = vpop.f32.mrb[0].mxu0
  %603 = vmatprep.mubr.bf16.mxu0 0
  %604 = vmatmul.mubr.bf16.gmra.mrb[0].mxu0 %v561
  %v605 = vpop.f32.mrb[0].mxu0
  %v606 = vadd.f32 0.0, %v605
  %v607 = vpop.f32.mrb[0].mxu0
  %v608 = vpop.f32.mrb[0].mxu0
  %v609 = vadd.f32 0.0, %v608
  %v610 = vpop.f32.mrb[0].mxu0
  %611 = vdwg.mxu0
  %v612 = vadd.f32 %v513, %v598
  %v613 = vadd.f32 %v514, %v601
  %v614 = vadd.f32 %v515, %v606
  %v615 = vadd.f32 %v516, %v609
  %s616 = scalar_lea.vmem %s0, 80
  %v617 = vld [vmem:[%s616] sm:$0xf]
  %v618 = vld [vmem:[%s616 + $0x4] sm:$0xf]
  %v619 = vld [vmem:[%s616 + $0x8] sm:$0xf]
  %v620 = vld [vmem:[%s616 + $0xc] sm:$0xf]
  %v625 = vunpack.c.l.b16 %v617
  %v626 = vunpack.c.l.b16 %v618
  %v627 = vunpack.c.l.b16 %v619
  %v628 = vunpack.c.l.b16 %v620
  %v629 = vpack.c.b16 %v626, %v625
  %v630 = vpack.c.b16 %v628, %v627
  %631 = vrot.lane.b32.xlu0 %v147, 115
  %v632 = vpop.permute.xlu0 %631
  %633 = vrot.lane.b32.xlu0 %v148, 115
  %v634 = vpop.permute.xlu0 %633
  %635 = vrot.lane.b32.xlu0 %v149, 115
  %v636 = vpop.permute.xlu0 %635
  %637 = vrot.lane.b32.xlu0 %v150, 115
  %v638 = vpop.permute.xlu0 %637
  %639 = vrot.lane.b32.xlu0 %v151, 115
  %v640 = vpop.permute.xlu0 %639
  %641 = vrot.lane.b32.xlu0 %v152, 115
  %v642 = vpop.permute.xlu0 %641
  %643 = vrot.lane.b32.xlu0 %v153, 115
  %v644 = vpop.permute.xlu0 %643
  %645 = vrot.lane.b32.xlu0 %v154, 115
  %v646 = vpop.permute.xlu0 %645
  %vm647 = vcmask 941056
  %v648 = vsel %vm647, %v632, %v634
  %v649 = vsel %vm647, %v636, %v638
  %v650 = vsel %vm647, %v640, %v642
  %v651 = vsel %vm647, %v644, %v646
  %v657 = vsel %vm198, %v629, 0
  %v660 = vsel %vm198, %v630, 0
  %662 = vmatprep.subr.bf16.mxu0 0
  %663 = vmatpush1.bf16.msra.mxu0 %v648
  %664 = vmatprep.subr.bf16.mxu0 0
  %665 = vmatpush1.bf16.msra.mxu0 %v649
  %666 = vmatprep.subr.bf16.mxu0 0
  %667 = vmatpush1.bf16.msra.mxu0 %v650
  %668 = vmatprep.subr.bf16.mxu0 0
  %669 = vmatpush1.bf16.msra.mxu0 %v651
  %670 = vmatprep.subr.bf16.mxu0 0
  %671 = vmatpush1.bf16.msra.mxu0 0
  %672 = vmatprep.subr.bf16.mxu0 0
  %673 = vmatpush1.bf16.msra.mxu0 0
  %674 = vmatprep.subr.bf16.mxu0 0
  %675 = vmatpush1.bf16.msra.mxu0 0
  %676 = vmatprep.subr.bf16.mxu0 0
  %677 = vmatpush1.bf16.msra.mxu0 0
  %678 = vmatprep.subr.bf16.mxu0 0
  %679 = vmatpush1.bf16.msra.mxu0 0
  %680 = vmatprep.subr.bf16.mxu0 0
  %681 = vmatpush1.bf16.msra.mxu0 0
  %682 = vmatprep.subr.bf16.mxu0 0
  %683 = vmatpush1.bf16.msra.mxu0 0
  %684 = vmatprep.subr.bf16.mxu0 0
  %685 = vmatpush1.bf16.msra.mxu0 0
  %686 = vmatprep.subr.bf16.mxu0 0
  %687 = vmatpush1.bf16.msra.mxu0 0
  %688 = vmatprep.subr.bf16.mxu0 0
  %689 = vmatpush1.bf16.msra.mxu0 0
  %690 = vmatprep.subr.bf16.mxu0 0
  %691 = vmatpush1.bf16.msra.mxu0 0
  %692 = vmatprep.subr.bf16.mxu0 0
  %693 = vmatpush1.bf16.msra.mxu0 0
  %694 = vmatprep.mubr.bf16.mxu0 0
  %695 = vmatmul.mubr.bf16.gmra.mrb[0].mxu0 %v657
  %v696 = vpop.f32.mrb[0].mxu0
  %v697 = vadd.f32 0.0, %v696
  %v698 = vpop.f32.mrb[0].mxu0
  %v699 = vpop.f32.mrb[0].mxu0
  %v700 = vadd.f32 0.0, %v699
  %v701 = vpop.f32.mrb[0].mxu0
  %702 = vmatprep.mubr.bf16.mxu0 0
  %703 = vmatmul.mubr.bf16.gmra.mrb[0].mxu0 %v660
  %v704 = vpop.f32.mrb[0].mxu0
  %v705 = vadd.f32 0.0, %v704
  %v706 = vpop.f32.mrb[0].mxu0
  %v707 = vpop.f32.mrb[0].mxu0
  %v708 = vadd.f32 0.0, %v707
  %v709 = vpop.f32.mrb[0].mxu0
  %710 = vdwg.mxu0
  %v711 = vadd.f32 %v612, %v697
  %v712 = vadd.f32 %v613, %v700
  %v713 = vadd.f32 %v614, %v705
  %v714 = vadd.f32 %v615, %v708
  %s715 = scalar_lea.vmem %s0, 96
  %v716 = vld [vmem:[%s715] sm:$0xf]
  %v717 = vld [vmem:[%s715 + $0x4] sm:$0xf]
  %v718 = vld [vmem:[%s715 + $0x8] sm:$0xf]
  %v719 = vld [vmem:[%s715 + $0xc] sm:$0xf]
  %v724 = vunpack.c.l.b16 %v716
  %v725 = vunpack.c.l.b16 %v717
  %v726 = vunpack.c.l.b16 %v718
  %v727 = vunpack.c.l.b16 %v719
  %v728 = vpack.c.b16 %v725, %v724
  %v729 = vpack.c.b16 %v727, %v726
  %730 = vrot.lane.b32.xlu0 %v147, 106
  %v731 = vpop.permute.xlu0 %730
  %732 = vrot.lane.b32.xlu0 %v148, 106
  %v733 = vpop.permute.xlu0 %732
  %734 = vrot.lane.b32.xlu0 %v149, 106
  %v735 = vpop.permute.xlu0 %734
  %736 = vrot.lane.b32.xlu0 %v150, 106
  %v737 = vpop.permute.xlu0 %736
  %738 = vrot.lane.b32.xlu0 %v151, 106
  %v739 = vpop.permute.xlu0 %738
  %740 = vrot.lane.b32.xlu0 %v152, 106
  %v741 = vpop.permute.xlu0 %740
  %742 = vrot.lane.b32.xlu0 %v153, 106
  %v743 = vpop.permute.xlu0 %742
  %744 = vrot.lane.b32.xlu0 %v154, 106
  %v745 = vpop.permute.xlu0 %744
  %vm746 = vcmask 867328
  %v747 = vsel %vm746, %v731, %v733
  %v748 = vsel %vm746, %v735, %v737
  %v749 = vsel %vm746, %v739, %v741
  %v750 = vsel %vm746, %v743, %v745
  %v756 = vsel %vm198, %v728, 0
  %v759 = vsel %vm198, %v729, 0
  %761 = vmatprep.subr.bf16.mxu0 0
  %762 = vmatpush1.bf16.msra.mxu0 %v747
  %763 = vmatprep.subr.bf16.mxu0 0
  %764 = vmatpush1.bf16.msra.mxu0 %v748
  %765 = vmatprep.subr.bf16.mxu0 0
  %766 = vmatpush1.bf16.msra.mxu0 %v749
  %767 = vmatprep.subr.bf16.mxu0 0
  %768 = vmatpush1.bf16.msra.mxu0 %v750
  %769 = vmatprep.subr.bf16.mxu0 0
  %770 = vmatpush1.bf16.msra.mxu0 0
  %771 = vmatprep.subr.bf16.mxu0 0
  %772 = vmatpush1.bf16.msra.mxu0 0
  %773 = vmatprep.subr.bf16.mxu0 0
  %774 = vmatpush1.bf16.msra.mxu0 0
  %775 = vmatprep.subr.bf16.mxu0 0
  %776 = vmatpush1.bf16.msra.mxu0 0
  %777 = vmatprep.subr.bf16.mxu0 0
  %778 = vmatpush1.bf16.msra.mxu0 0
  %779 = vmatprep.subr.bf16.mxu0 0
  %780 = vmatpush1.bf16.msra.mxu0 0
  %781 = vmatprep.subr.bf16.mxu0 0
  %782 = vmatpush1.bf16.msra.mxu0 0
  %783 = vmatprep.subr.bf16.mxu0 0
  %784 = vmatpush1.bf16.msra.mxu0 0
  %785 = vmatprep.subr.bf16.mxu0 0
  %786 = vmatpush1.bf16.msra.mxu0 0
  %787 = vmatprep.subr.bf16.mxu0 0
  %788 = vmatpush1.bf16.msra.mxu0 0
  %789 = vmatprep.subr.bf16.mxu0 0
  %790 = vmatpush1.bf16.msra.mxu0 0
  %791 = vmatprep.subr.bf16.mxu0 0
  %792 = vmatpush1.bf16.msra.mxu0 0
  %793 = vmatprep.mubr.bf16.mxu0 0
  %794 = vmatmul.mubr.bf16.gmra.mrb[0].mxu0 %v756
  %v795 = vpop.f32.mrb[0].mxu0
  %v796 = vadd.f32 0.0, %v795
  %v797 = vpop.f32.mrb[0].mxu0
  %v798 = vpop.f32.mrb[0].mxu0
  %v799 = vadd.f32 0.0, %v798
  %v800 = vpop.f32.mrb[0].mxu0
  %801 = vmatprep.mubr.bf16.mxu0 0
  %802 = vmatmul.mubr.bf16.gmra.mrb[0].mxu0 %v759
  %v803 = vpop.f32.mrb[0].mxu0
  %v804 = vadd.f32 0.0, %v803
  %v805 = vpop.f32.mrb[0].mxu0
  %v806 = vpop.f32.mrb[0].mxu0
  %v807 = vadd.f32 0.0, %v806
  %v808 = vpop.f32.mrb[0].mxu0
  %809 = vdwg.mxu0
  %v810 = vadd.f32 %v711, %v796
  %v811 = vadd.f32 %v712, %v799
  %v812 = vadd.f32 %v713, %v804
  %v813 = vadd.f32 %v714, %v807
  %s814 = scalar_lea.vmem %s0, 112
  %v815 = vld [vmem:[%s814] sm:$0xf]
  %v816 = vld [vmem:[%s814 + $0x4] sm:$0xf]
  %v817 = vld [vmem:[%s814 + $0x8] sm:$0xf]
  %v818 = vld [vmem:[%s814 + $0xc] sm:$0xf]
  %v823 = vunpack.c.l.b16 %v815
  %v824 = vunpack.c.l.b16 %v816
  %v825 = vunpack.c.l.b16 %v817
  %v826 = vunpack.c.l.b16 %v818
  %v827 = vpack.c.b16 %v824, %v823
  %v828 = vpack.c.b16 %v826, %v825
  %829 = vrot.lane.b32.xlu0 %v147, 105
  %v830 = vpop.permute.xlu0 %829
  %831 = vrot.lane.b32.xlu0 %v148, 105
  %v832 = vpop.permute.xlu0 %831
  %833 = vrot.lane.b32.xlu0 %v149, 105
  %v834 = vpop.permute.xlu0 %833
  %835 = vrot.lane.b32.xlu0 %v150, 105
  %v836 = vpop.permute.xlu0 %835
  %837 = vrot.lane.b32.xlu0 %v151, 105
  %v838 = vpop.permute.xlu0 %837
  %839 = vrot.lane.b32.xlu0 %v152, 105
  %v840 = vpop.permute.xlu0 %839
  %841 = vrot.lane.b32.xlu0 %v153, 105
  %v842 = vpop.permute.xlu0 %841
  %843 = vrot.lane.b32.xlu0 %v154, 105
  %v844 = vpop.permute.xlu0 %843
  %vm845 = vcmask 859136
  %v846 = vsel %vm845, %v830, %v832
  %v847 = vsel %vm845, %v834, %v836
  %v848 = vsel %vm845, %v838, %v840
  %v849 = vsel %vm845, %v842, %v844
  %v855 = vsel %vm198, %v827, 0
  %v858 = vsel %vm198, %v828, 0
  %860 = vmatprep.subr.bf16.mxu0 0
  %861 = vmatpush1.bf16.msra.mxu0 %v846
  %862 = vmatprep.subr.bf16.mxu0 0
  %863 = vmatpush1.bf16.msra.mxu0 %v847
  %864 = vmatprep.subr.bf16.mxu0 0
  %865 = vmatpush1.bf16.msra.mxu0 %v848
  %866 = vmatprep.subr.bf16.mxu0 0
  %867 = vmatpush1.bf16.msra.mxu0 %v849
  %868 = vmatprep.subr.bf16.mxu0 0
  %869 = vmatpush1.bf16.msra.mxu0 0
  %870 = vmatprep.subr.bf16.mxu0 0
  %871 = vmatpush1.bf16.msra.mxu0 0
  %872 = vmatprep.subr.bf16.mxu0 0
  %873 = vmatpush1.bf16.msra.mxu0 0
  %874 = vmatprep.subr.bf16.mxu0 0
  %875 = vmatpush1.bf16.msra.mxu0 0
  %876 = vmatprep.subr.bf16.mxu0 0
  %877 = vmatpush1.bf16.msra.mxu0 0
  %878 = vmatprep.subr.bf16.mxu0 0
  %879 = vmatpush1.bf16.msra.mxu0 0
  %880 = vmatprep.subr.bf16.mxu0 0
  %881 = vmatpush1.bf16.msra.mxu0 0
  %882 = vmatprep.subr.bf16.mxu0 0
  %883 = vmatpush1.bf16.msra.mxu0 0
  %884 = vmatprep.subr.bf16.mxu0 0
  %885 = vmatpush1.bf16.msra.mxu0 0
  %886 = vmatprep.subr.bf16.mxu0 0
  %887 = vmatpush1.bf16.msra.mxu0 0
  %888 = vmatprep.subr.bf16.mxu0 0
  %889 = vmatpush1.bf16.msra.mxu0 0
  %890 = vmatprep.subr.bf16.mxu0 0
  %891 = vmatpush1.bf16.msra.mxu0 0
  %892 = vmatprep.mubr.bf16.mxu0 0
  %893 = vmatmul.mubr.bf16.gmra.mrb[0].mxu0 %v855
  %v894 = vpop.f32.mrb[0].mxu0
  %v895 = vadd.f32 0.0, %v894
  %v896 = vpop.f32.mrb[0].mxu0
  %v897 = vpop.f32.mrb[0].mxu0
  %v898 = vadd.f32 0.0, %v897
  %v899 = vpop.f32.mrb[0].mxu0
  %900 = vmatprep.mubr.bf16.mxu0 0
  %901 = vmatmul.mubr.bf16.gmra.mrb[0].mxu0 %v858
  %v902 = vpop.f32.mrb[0].mxu0
  %v903 = vadd.f32 0.0, %v902
  %v904 = vpop.f32.mrb[0].mxu0
  %v905 = vpop.f32.mrb[0].mxu0
  %v906 = vadd.f32 0.0, %v905
  %v907 = vpop.f32.mrb[0].mxu0
  %908 = vdwg.mxu0
  %v909 = vadd.f32 %v810, %v895
  %v910 = vadd.f32 %v811, %v898
  %v911 = vadd.f32 %v812, %v903
  %v912 = vadd.f32 %v813, %v906
  %s913 = scalar_lea.vmem %s0, 128
  %v914 = vld [vmem:[%s913] sm:$0xf]
  %v915 = vld [vmem:[%s913 + $0x4] sm:$0xf]
  %v916 = vld [vmem:[%s913 + $0x8] sm:$0xf]
  %v917 = vld [vmem:[%s913 + $0xc] sm:$0xf]
  %v922 = vunpack.c.l.b16 %v914
  %v923 = vunpack.c.l.b16 %v915
  %v924 = vunpack.c.l.b16 %v916
  %v925 = vunpack.c.l.b16 %v917
  %v926 = vpack.c.b16 %v923, %v922
  %v927 = vpack.c.b16 %v925, %v924
  %928 = vrot.lane.b32.xlu0 %v147, 104
  %v929 = vpop.permute.xlu0 %928
  %930 = vrot.lane.b32.xlu0 %v148, 104
  %v931 = vpop.permute.xlu0 %930
  %932 = vrot.lane.b32.xlu0 %v149, 104
  %v933 = vpop.permute.xlu0 %932
  %934 = vrot.lane.b32.xlu0 %v150, 104
  %v935 = vpop.permute.xlu0 %934
  %936 = vrot.lane.b32.xlu0 %v151, 104
  %v937 = vpop.permute.xlu0 %936
  %938 = vrot.lane.b32.xlu0 %v152, 104
  %v939 = vpop.permute.xlu0 %938
  %940 = vrot.lane.b32.xlu0 %v153, 104
  %v941 = vpop.permute.xlu0 %940
  %942 = vrot.lane.b32.xlu0 %v154, 104
  %v943 = vpop.permute.xlu0 %942
  %vm944 = vcmask 850944
  %v945 = vsel %vm944, %v929, %v931
  %v946 = vsel %vm944, %v933, %v935
  %v947 = vsel %vm944, %v937, %v939
  %v948 = vsel %vm944, %v941, %v943
  %v954 = vsel %vm198, %v926, 0
  %v957 = vsel %vm198, %v927, 0
  %959 = vmatprep.subr.bf16.mxu0 0
  %960 = vmatpush1.bf16.msra.mxu0 %v945
  %961 = vmatprep.subr.bf16.mxu0 0
  %962 = vmatpush1.bf16.msra.mxu0 %v946
  %963 = vmatprep.subr.bf16.mxu0 0
  %964 = vmatpush1.bf16.msra.mxu0 %v947
  %965 = vmatprep.subr.bf16.mxu0 0
  %966 = vmatpush1.bf16.msra.mxu0 %v948
  %967 = vmatprep.subr.bf16.mxu0 0
  %968 = vmatpush1.bf16.msra.mxu0 0
  %969 = vmatprep.subr.bf16.mxu0 0
  %970 = vmatpush1.bf16.msra.mxu0 0
  %971 = vmatprep.subr.bf16.mxu0 0
  %972 = vmatpush1.bf16.msra.mxu0 0
  %973 = vmatprep.subr.bf16.mxu0 0
  %974 = vmatpush1.bf16.msra.mxu0 0
  %975 = vmatprep.subr.bf16.mxu0 0
  %976 = vmatpush1.bf16.msra.mxu0 0
  %977 = vmatprep.subr.bf16.mxu0 0
  %978 = vmatpush1.bf16.msra.mxu0 0
  %979 = vmatprep.subr.bf16.mxu0 0
  %980 = vmatpush1.bf16.msra.mxu0 0
  %981 = vmatprep.subr.bf16.mxu0 0
  %982 = vmatpush1.bf16.msra.mxu0 0
  %983 = vmatprep.subr.bf16.mxu0 0
  %984 = vmatpush1.bf16.msra.mxu0 0
  %985 = vmatprep.subr.bf16.mxu0 0
  %986 = vmatpush1.bf16.msra.mxu0 0
  %987 = vmatprep.subr.bf16.mxu0 0
  %988 = vmatpush1.bf16.msra.mxu0 0
  %989 = vmatprep.subr.bf16.mxu0 0
  %990 = vmatpush1.bf16.msra.mxu0 0
  %991 = vmatprep.mubr.bf16.mxu0 0
  %992 = vmatmul.mubr.bf16.gmra.mrb[0].mxu0 %v954
  %v993 = vpop.f32.mrb[0].mxu0
  %v994 = vadd.f32 0.0, %v993
  %v995 = vpop.f32.mrb[0].mxu0
  %v996 = vpop.f32.mrb[0].mxu0
  %v997 = vadd.f32 0.0, %v996
  %v998 = vpop.f32.mrb[0].mxu0
  %999 = vmatprep.mubr.bf16.mxu0 0
  %1000 = vmatmul.mubr.bf16.gmra.mrb[0].mxu0 %v957
  %v1001 = vpop.f32.mrb[0].mxu0
  %v1002 = vadd.f32 0.0, %v1001
  %v1003 = vpop.f32.mrb[0].mxu0
  %v1004 = vpop.f32.mrb[0].mxu0
  %v1005 = vadd.f32 0.0, %v1004
  %v1006 = vpop.f32.mrb[0].mxu0
  %1007 = vdwg.mxu0
  %v1008 = vadd.f32 %v909, %v994
  %v1009 = vadd.f32 %v910, %v997
  %v1010 = vadd.f32 %v911, %v1002
  %v1011 = vadd.f32 %v912, %v1005
  %v1012 = vld [vmem:[%s1] sm:$0xff]
  %v1013 = vld [vmem:[%s1 + $0x8] sm:$0xff]
  %v1014 = vld [vmem:[%s1 + $0x10] sm:$0xff]
  %v1015 = vld [vmem:[%s1 + $0x18] sm:$0xff]
  %1017 = vset.pattern.permute.xlu0 0
  %1018 = vperm.xlu0 %1017, %v1012
  %v1019 = vpop.permute.xlu0 %1018
  %1022 = vset.pattern.permute.xlu0 0
  %1023 = vperm.xlu0 %1022, %v1013
  %v1024 = vpop.permute.xlu0 %1023
  %1027 = vset.pattern.permute.xlu0 0
  %1028 = vperm.xlu0 %1027, %v1014
  %v1029 = vpop.permute.xlu0 %1028
  %1032 = vset.pattern.permute.xlu0 0
  %1033 = vperm.xlu0 %1032, %v1015
  %v1034 = vpop.permute.xlu0 %1033
  %v1036 = vadd.f32 %v1008, %v1019
  %v1037 = vadd.f32 %v1009, %v1024
  %v1038 = vadd.f32 %v1010, %v1029
  %v1039 = vadd.f32 %v1011, %v1034
  %v1040 = vmax.f32 %v1036, 0.0
  %v1041 = vmax.f32 %v1037, 0.0
  %v1042 = vmax.f32 %v1038, 0.0
  %v1043 = vmax.f32 %v1039, 0.0
  %v1044 = vpack.c.bf16 %v1041, %v1040
  %v1045 = vpack.c.bf16 %v1043, %v1042
  %v1048 = vunpack.c.l.b16 %v1044
  %v1049 = vunpack.c.h.b16 %v1044
  %v1050 = vunpack.c.l.b16 %v1045
  %v1051 = vunpack.c.h.b16 %v1045
  %v1052 = vpack.c.b16 %v1048, %v1048
  %v1053 = vpack.c.b16 %v1049, %v1049
  %v1054 = vpack.c.b16 %v1050, %v1050
  %v1055 = vpack.c.b16 %v1051, %v1051
  %1060 = vst [vmem:[%s3] sm:$0xf] %v1052
  %1061 = vst [vmem:[%s3 + $0x4] sm:$0xf] %v1053
  %1062 = vst [vmem:[%s3 + $0x8] sm:$0xf] %v1054
  %1063 = vst [vmem:[%s3 + $0xc] sm:$0xf] %v1055
  // Predicated region
  $region47: #{_device_forward.4} parent=0 // pred_check
    _
  $region48: #{_device_forward.4} parent=0 // pred_check_branch
    %1065 = sbr.rel (0) target = $region50
  $region49: #{_device_forward.4} parent=0 // pred_region
    _
  $region50: #{_device_forward.4} parent=0 // pred_fallthru
    _
  // Predicated region
  $region51: #{_device_forward.4} parent=0 // pred_check
    _
  $region52: #{_device_forward.4} parent=0 // pred_check_branch
    %1067 = sbr.rel (0) target = $region54
  $region53: #{_device_forward.4} parent=0 // pred_region
    _
  $region54: #{_device_forward.4} parent=0 // pred_fallthru
    _
  %1068 = vsyncmov [#allocation3]
  %s1069 = vpop.sfrf %1068
  %p1070 = scmp.eq.s32.totalorder %s1069, 0
  %p1071 = pneg %p1070
  %1073 = shalt.err (%p1071)

// kernel: _device_forward.5
$region0: #{_device_forward.5}
  #allocation0 [shape = 'u32[]', space=smem, size = 0x4, offset = 0x4, fixed_abs, tag = 'smem constant byte address 0x4 - core index']
  #allocation1 [shape = 'u32[144,128]{1,0:T(1,128)}', space=vmem, size = 0x12000, scoped, tag = 'internal scratch']
  #allocation2 [shape = 'bf16[128,256]{1,0:T(16,128)(2,1)}', space=vmem, size = 0x10000, scoped, tag = 'scratch operand']
  #allocation3 [shape = 's32[1]{0}', space=sflag, size = 0x4, scoped, tag = 'scratch operand']
  #allocation4 [shape = 's32[]', space=sflag, size = 0x4, offset = 0, fixed_abs, tag = 'sflag constant byte address 0x0 - dummy sync flag']
  %s0 = inlined_call_operand.vmem [shape: bf16[4,3,128], index: 0, kind: input, shape index: {}]
  %s1 = inlined_call_operand.vmem [shape: f32[3,1], index: 1, kind: input, shape index: {}]
  %s2 = inlined_call_operand.vmem [shape: bf16[128,256], index: 2, kind: input, shape index: {}]
  %s3 = inlined_call_operand.vmem [shape: f32[3,128], index: 3, kind: output, shape index: {}]
  %s4 = sld [smem:[#allocation0]]
  $region55: #{_device_forward.5} parent=0
    _
  %s6 = ssub.s32 1, %s4
  %s7 = scalar_select 0, %s6, %s4
  // Predicated region
  $region2: #{_device_forward.5} parent=0 // pred_check
    _
  $region3: #{_device_forward.5} parent=0 // pred_check_branch
    %9 = sbr.rel (0) target = $region5
  $region4: #{_device_forward.5} parent=0 // pred_region
    _
  $region5: #{_device_forward.5} parent=0 // pred_fallthru
    _
  // Predicated region
  $region6: #{_device_forward.5} parent=0 // pred_check
    _
  $region7: #{_device_forward.5} parent=0 // pred_check_branch
    %11 = sbr.rel (0) target = $region9
  $region8: #{_device_forward.5} parent=0 // pred_region
    _
  $region9: #{_device_forward.5} parent=0 // pred_fallthru
    _
  %s13 = smul.u32 0, 128
  %s14 = sshra.s32 %s13, 7
  %s15 = sand.u32 %s13, 127
  %s16 = smul.addr %s14, 4
  %s17 = scalar_lea.vmem %s2, %s16
  %p19 = scmp.lt.u32.totalorder 4, 8
  %p20 = pneg %p19
  // Predicated region
  $region10: #{_device_forward.5} parent=0 // pred_check
    _
  $region11: #{_device_forward.5} parent=0 // pred_check_branch
    %22 = sbr.rel (%p19) target = $region13
  $region12: #{_device_forward.5} parent=0 // pred_region
    %s99 = sand.u32 4, 7
    %p100 = scmp.eq.s32.totalorder %s99, 0
    %p101 = pneg %p100
    // Predicated region
    $region25: #{_device_forward.5} parent=12 // pred_check
      _
    $region26: #{_device_forward.5} parent=12 // pred_check_branch
      %103 = sbr.rel (%p100) target = $region28
    $region27: #{_device_forward.5} parent=12 // pred_region
      %s104 = sand.u32 4, 7
      %s105 = ssub.s32 4, %s104
      %s106 = scalar_lea.vmem %s17, %s105
      %s107 = ssub.s32 4, %s104
      %s108 = scalar_lea.vmem [#allocation2], %s107
      loop: start=0, step=1, limit=1
      $region29: #{_device_forward.5} parent=27 // loop_pre_header
        _
      $region30: #{_device_forward.5} parent=27 // loop_header
        %s110 = sphi 0, %s114
        %p111 = scmp.ge.s32.totalorder %s110, 1
        %s115 = sphi %s17, %s17
        %s116 = sphi [#allocation2], [#allocation2]
      $region31: #{_device_forward.5} parent=27 // loop_header_branch
        %113 = sbr.rel (%p111) target = $region35
      $region32: #{_device_forward.5} parent=27 // loop_body
        _
      $region33: #{_device_forward.5} parent=27 // loop_footer
        %s114 = sadd.s32 1, %s110
      $region34: #{_device_forward.5} parent=27 // loop_footer_branch
        %109 = sbr.rel target = $region30
      $region35: #{_device_forward.5} parent=27 // loop_exit
        _
      %s117 = sshllo.u32 0, %s104
      loop: start=0, step=1, limit=1
      $region36: #{_device_forward.5} parent=27 // loop_pre_header
        _
      $region37: #{_device_forward.5} parent=27 // loop_header
        %s119 = sphi 0, %s123
        %p120 = scmp.ge.s32.totalorder %s119, 1
        %s124 = sphi %s106, %s106
        %s125 = sphi %s108, %s108
      $region38: #{_device_forward.5} parent=27 // loop_header_branch
        %122 = sbr.rel (%p120) target = $region42
      $region39: #{_device_forward.5} parent=27 // loop_body
        %v126 = vld [vmem:[%s124] sm:%s117]
        %127 = vst [vmem:[%s125] sm:%s117] %v126
        %v128 = vld [vmem:[%s124 + $0x8] sm:%s117]
        %129 = vst [vmem:[%s125 + $0x4] sm:%s117] %v128
        %v130 = vld [vmem:[%s124 + $0x4] sm:%s117]
        %131 = vst [vmem:[%s125 + $0x8] sm:%s117] %v130
        %v132 = vld [vmem:[%s124 + $0xc] sm:%s117]
        %133 = vst [vmem:[%s125 + $0xc] sm:%s117] %v132
        %v134 = vld [vmem:[%s124 + $0x10] sm:%s117]
        %135 = vst [vmem:[%s125 + $0x10] sm:%s117] %v134
        %v136 = vld [vmem:[%s124 + $0x18] sm:%s117]
        %137 = vst [vmem:[%s125 + $0x14] sm:%s117] %v136
        %v138 = vld [vmem:[%s124 + $0x14] sm:%s117]
        %139 = vst [vmem:[%s125 + $0x18] sm:%s117] %v138
        %v140 = vld [vmem:[%s124 + $0x1c] sm:%s117]
        %141 = vst [vmem:[%s125 + $0x1c] sm:%s117] %v140
        %v142 = vld [vmem:[%s124 + $0x20] sm:%s117]
        %143 = vst [vmem:[%s125 + $0x20] sm:%s117] %v142
        %v144 = vld [vmem:[%s124 + $0x28] sm:%s117]
        %145 = vst [vmem:[%s125 + $0x24] sm:%s117] %v144
        %v146 = vld [vmem:[%s124 + $0x24] sm:%s117]
        %147 = vst [vmem:[%s125 + $0x28] sm:%s117] %v146
        %v148 = vld [vmem:[%s124 + $0x2c] sm:%s117]
        %149 = vst [vmem:[%s125 + $0x2c] sm:%s117] %v148
        %v150 = vld [vmem:[%s124 + $0x30] sm:%s117]
        %151 = vst [vmem:[%s125 + $0x30] sm:%s117] %v150
        %v152 = vld [vmem:[%s124 + $0x38] sm:%s117]
        %153 = vst [vmem:[%s125 + $0x34] sm:%s117] %v152
        %v154 = vld [vmem:[%s124 + $0x34] sm:%s117]
        %155 = vst [vmem:[%s125 + $0x38] sm:%s117] %v154
        %v156 = vld [vmem:[%s124 + $0x3c] sm:%s117]
        %157 = vst [vmem:[%s125 + $0x3c] sm:%s117] %v156
        %v158 = vld [vmem:[%s124 + $0x40] sm:%s117]
        %159 = vst [vmem:[%s125 + $0x40] sm:%s117] %v158
        %v160 = vld [vmem:[%s124 + $0x48] sm:%s117]
        %161 = vst [vmem:[%s125 + $0x44] sm:%s117] %v160
        %v162 = vld [vmem:[%s124 + $0x44] sm:%s117]
        %163 = vst [vmem:[%s125 + $0x48] sm:%s117] %v162
        %v164 = vld [vmem:[%s124 + $0x4c] sm:%s117]
        %165 = vst [vmem:[%s125 + $0x4c] sm:%s117] %v164
        %v166 = vld [vmem:[%s124 + $0x50] sm:%s117]
        %167 = vst [vmem:[%s125 + $0x50] sm:%s117] %v166
        %v168 = vld [vmem:[%s124 + $0x58] sm:%s117]
        %169 = vst [vmem:[%s125 + $0x54] sm:%s117] %v168
        %v170 = vld [vmem:[%s124 + $0x54] sm:%s117]
        %171 = vst [vmem:[%s125 + $0x58] sm:%s117] %v170
        %v172 = vld [vmem:[%s124 + $0x5c] sm:%s117]
        %173 = vst [vmem:[%s125 + $0x5c] sm:%s117] %v172
        %v174 = vld [vmem:[%s124 + $0x60] sm:%s117]
        %175 = vst [vmem:[%s125 + $0x60] sm:%s117] %v174
        %v176 = vld [vmem:[%s124 + $0x68] sm:%s117]
        %177 = vst [vmem:[%s125 + $0x64] sm:%s117] %v176
        %v178 = vld [vmem:[%s124 + $0x64] sm:%s117]
        %179 = vst [vmem:[%s125 + $0x68] sm:%s117] %v178
        %v180 = vld [vmem:[%s124 + $0x6c] sm:%s117]
        %181 = vst [vmem:[%s125 + $0x6c] sm:%s117] %v180
        %v182 = vld [vmem:[%s124 + $0x70] sm:%s117]
        %183 = vst [vmem:[%s125 + $0x70] sm:%s117] %v182
        %v184 = vld [vmem:[%s124 + $0x78] sm:%s117]
        %185 = vst [vmem:[%s125 + $0x74] sm:%s117] %v184
        %v186 = vld [vmem:[%s124 + $0x74] sm:%s117]
        %187 = vst [vmem:[%s125 + $0x78] sm:%s117] %v186
        %v188 = vld [vmem:[%s124 + $0x7c] sm:%s117]
        %189 = vst [vmem:[%s125 + $0x7c] sm:%s117] %v188
      $region40: #{_device_forward.5} parent=27 // loop_footer
        %s123 = sadd.s32 1, %s119
      $region41: #{_device_forward.5} parent=27 // loop_footer_branch
        %118 = sbr.rel target = $region37
      $region42: #{_device_forward.5} parent=27 // loop_exit
        _
    $region28: #{_device_forward.5} parent=12 // pred_fallthru
      _
  $region13: #{_device_forward.5} parent=0 // pred_fallthru
    _
  // Predicated region
  $region14: #{_device_forward.5} parent=0 // pred_check
    %p23 = pneg %p19
  $region15: #{_device_forward.5} parent=0 // pred_check_branch
    %25 = sbr.rel (%p23) target = $region17
  $region16: #{_device_forward.5} parent=0 // pred_region
    %s26 = sshllo.u32 0, 4
    loop: start=0, step=1, limit=1
    $region18: #{_device_forward.5} parent=16 // loop_pre_header
      _
    $region19: #{_device_forward.5} parent=16 // loop_header
      %s28 = sphi 0, %s32
      %p29 = scmp.ge.s32.totalorder %s28, 1
      %s33 = sphi %s17, %s17
      %s34 = sphi [#allocation2], [#allocation2]
    $region20: #{_device_forward.5} parent=16 // loop_header_branch
      %31 = sbr.rel (%p29) target = $region24
    $region21: #{_device_forward.5} parent=16 // loop_body
      %v35 = vld [vmem:[%s33] sm:%s26]
      %36 = vst [vmem:[%s34] sm:%s26] %v35
      %v37 = vld [vmem:[%s33 + $0x8] sm:%s26]
      %38 = vst [vmem:[%s34 + $0x4] sm:%s26] %v37
      %v39 = vld [vmem:[%s33 + $0x4] sm:%s26]
      %40 = vst [vmem:[%s34 + $0x8] sm:%s26] %v39
      %v41 = vld [vmem:[%s33 + $0xc] sm:%s26]
      %42 = vst [vmem:[%s34 + $0xc] sm:%s26] %v41
      %v43 = vld [vmem:[%s33 + $0x10] sm:%s26]
      %44 = vst [vmem:[%s34 + $0x10] sm:%s26] %v43
      %v45 = vld [vmem:[%s33 + $0x18] sm:%s26]
      %46 = vst [vmem:[%s34 + $0x14] sm:%s26] %v45
      %v47 = vld [vmem:[%s33 + $0x14] sm:%s26]
      %48 = vst [vmem:[%s34 + $0x18] sm:%s26] %v47
      %v49 = vld [vmem:[%s33 + $0x1c] sm:%s26]
      %50 = vst [vmem:[%s34 + $0x1c] sm:%s26] %v49
      %v51 = vld [vmem:[%s33 + $0x20] sm:%s26]
      %52 = vst [vmem:[%s34 + $0x20] sm:%s26] %v51
      %v53 = vld [vmem:[%s33 + $0x28] sm:%s26]
      %54 = vst [vmem:[%s34 + $0x24] sm:%s26] %v53
      %v55 = vld [vmem:[%s33 + $0x24] sm:%s26]
      %56 = vst [vmem:[%s34 + $0x28] sm:%s26] %v55
      %v57 = vld [vmem:[%s33 + $0x2c] sm:%s26]
      %58 = vst [vmem:[%s34 + $0x2c] sm:%s26] %v57
      %v59 = vld [vmem:[%s33 + $0x30] sm:%s26]
      %60 = vst [vmem:[%s34 + $0x30] sm:%s26] %v59
      %v61 = vld [vmem:[%s33 + $0x38] sm:%s26]
      %62 = vst [vmem:[%s34 + $0x34] sm:%s26] %v61
      %v63 = vld [vmem:[%s33 + $0x34] sm:%s26]
      %64 = vst [vmem:[%s34 + $0x38] sm:%s26] %v63
      %v65 = vld [vmem:[%s33 + $0x3c] sm:%s26]
      %66 = vst [vmem:[%s34 + $0x3c] sm:%s26] %v65
      %v67 = vld [vmem:[%s33 + $0x40] sm:%s26]
      %68 = vst [vmem:[%s34 + $0x40] sm:%s26] %v67
      %v69 = vld [vmem:[%s33 + $0x48] sm:%s26]
      %70 = vst [vmem:[%s34 + $0x44] sm:%s26] %v69
      %v71 = vld [vmem:[%s33 + $0x44] sm:%s26]
      %72 = vst [vmem:[%s34 + $0x48] sm:%s26] %v71
      %v73 = vld [vmem:[%s33 + $0x4c] sm:%s26]
      %74 = vst [vmem:[%s34 + $0x4c] sm:%s26] %v73
      %v75 = vld [vmem:[%s33 + $0x50] sm:%s26]
      %76 = vst [vmem:[%s34 + $0x50] sm:%s26] %v75
      %v77 = vld [vmem:[%s33 + $0x58] sm:%s26]
      %78 = vst [vmem:[%s34 + $0x54] sm:%s26] %v77
      %v79 = vld [vmem:[%s33 + $0x54] sm:%s26]
      %80 = vst [vmem:[%s34 + $0x58] sm:%s26] %v79
      %v81 = vld [vmem:[%s33 + $0x5c] sm:%s26]
      %82 = vst [vmem:[%s34 + $0x5c] sm:%s26] %v81
      %v83 = vld [vmem:[%s33 + $0x60] sm:%s26]
      %84 = vst [vmem:[%s34 + $0x60] sm:%s26] %v83
      %v85 = vld [vmem:[%s33 + $0x68] sm:%s26]
      %86 = vst [vmem:[%s34 + $0x64] sm:%s26] %v85
      %v87 = vld [vmem:[%s33 + $0x64] sm:%s26]
      %88 = vst [vmem:[%s34 + $0x68] sm:%s26] %v87
      %v89 = vld [vmem:[%s33 + $0x6c] sm:%s26]
      %90 = vst [vmem:[%s34 + $0x6c] sm:%s26] %v89
      %v91 = vld [vmem:[%s33 + $0x70] sm:%s26]
      %92 = vst [vmem:[%s34 + $0x70] sm:%s26] %v91
      %v93 = vld [vmem:[%s33 + $0x78] sm:%s26]
      %94 = vst [vmem:[%s34 + $0x74] sm:%s26] %v93
      %v95 = vld [vmem:[%s33 + $0x74] sm:%s26]
      %96 = vst [vmem:[%s34 + $0x78] sm:%s26] %v95
      %v97 = vld [vmem:[%s33 + $0x7c] sm:%s26]
      %98 = vst [vmem:[%s34 + $0x7c] sm:%s26] %v97
    $region22: #{_device_forward.5} parent=16 // loop_footer
      %s32 = sadd.s32 1, %s28
    $region23: #{_device_forward.5} parent=16 // loop_footer_branch
      %27 = sbr.rel target = $region19
    $region24: #{_device_forward.5} parent=16 // loop_exit
      _
  $region17: #{_device_forward.5} parent=0 // pred_fallthru
    _
  // Predicated region
  $region43: #{_device_forward.5} parent=0 // pred_check
    _
  $region44: #{_device_forward.5} parent=0 // pred_check_branch
    %192 = sbr.rel (0) target = $region46
  $region45: #{_device_forward.5} parent=0 // pred_region
    %193 = vsyncadd [#allocation3], 2048
  $region46: #{_device_forward.5} parent=0 // pred_fallthru
    _
  %s194 = smul.u32 4, 16
  %s195 = smul.u32 %s194, 2
  %s196 = sshll.u32 %s195, 4
  %197 = dma.done [#allocation3], %s196
  %v198 = vld [vmem:[%s0] sm:$0x3]
  %v199 = vld [vmem:[#allocation2] sm:$0xff]
  %v200 = vld [vmem:[#allocation2 + $0x10] sm:$0xff]
  %v201 = vld [vmem:[#allocation2 + $0x20] sm:$0xff]
  %v202 = vld [vmem:[#allocation2 + $0x30] sm:$0xff]
  %v203 = vld [vmem:[#allocation2 + $0x40] sm:$0xff]
  %v204 = vld [vmem:[#allocation2 + $0x50] sm:$0xff]
  %v205 = vld [vmem:[#allocation2 + $0x60] sm:$0xff]
  %v206 = vld [vmem:[#allocation2 + $0x70] sm:$0xff]
  %s207 = scalar_lea.vmem %s0, 2
  %v208 = vld [vmem:[%s207] sm:$0x3]
  %v209 = vld [vmem:[#allocation2] sm:$0xff]
  %v210 = vld [vmem:[#allocation2 + $0x8] sm:$0xff]
  %v211 = vld [vmem:[#allocation2 + $0x10] sm:$0xff]
  %v212 = vld [vmem:[#allocation2 + $0x18] sm:$0xff]
  %v213 = vld [vmem:[#allocation2 + $0x20] sm:$0xff]
  %v214 = vld [vmem:[#allocation2 + $0x28] sm:$0xff]
  %v215 = vld [vmem:[#allocation2 + $0x30] sm:$0xff]
  %v216 = vld [vmem:[#allocation2 + $0x38] sm:$0xff]
  %v217 = vld [vmem:[#allocation2 + $0x40] sm:$0xff]
  %v218 = vld [vmem:[#allocation2 + $0x48] sm:$0xff]
  %v219 = vld [vmem:[#allocation2 + $0x50] sm:$0xff]
  %v220 = vld [vmem:[#allocation2 + $0x58] sm:$0xff]
  %v221 = vld [vmem:[#allocation2 + $0x60] sm:$0xff]
  %v222 = vld [vmem:[#allocation2 + $0x68] sm:$0xff]
  %v223 = vld [vmem:[#allocation2 + $0x70] sm:$0xff]
  %v224 = vld [vmem:[#allocation2 + $0x78] sm:$0xff]
  %241 = vrot.lane.b32.xlu0 %v209, 127
  %v242 = vpop.permute.xlu0 %241
  %243 = vrot.lane.b32.xlu0 %v210, 127
  %v244 = vpop.permute.xlu0 %243
  %245 = vrot.lane.b32.xlu0 %v211, 127
  %v246 = vpop.permute.xlu0 %245
  %247 = vrot.lane.b32.xlu0 %v212, 127
  %v248 = vpop.permute.xlu0 %247
  %249 = vrot.lane.b32.xlu0 %v213, 127
  %v250 = vpop.permute.xlu0 %249
  %251 = vrot.lane.b32.xlu0 %v214, 127
  %v252 = vpop.permute.xlu0 %251
  %253 = vrot.lane.b32.xlu0 %v215, 127
  %v254 = vpop.permute.xlu0 %253
  %255 = vrot.lane.b32.xlu0 %v216, 127
  %v256 = vpop.permute.xlu0 %255
  %257 = vrot.lane.b32.xlu0 %v217, 127
  %v258 = vpop.permute.xlu0 %257
  %259 = vrot.lane.b32.xlu0 %v218, 127
  %v260 = vpop.permute.xlu0 %259
  %261 = vrot.lane.b32.xlu0 %v219, 127
  %v262 = vpop.permute.xlu0 %261
  %263 = vrot.lane.b32.xlu0 %v220, 127
  %v264 = vpop.permute.xlu0 %263
  %265 = vrot.lane.b32.xlu0 %v221, 127
  %v266 = vpop.permute.xlu0 %265
  %267 = vrot.lane.b32.xlu0 %v222, 127
  %v268 = vpop.permute.xlu0 %267
  %269 = vrot.lane.b32.xlu0 %v223, 127
  %v270 = vpop.permute.xlu0 %269
  %271 = vrot.lane.b32.xlu0 %v224, 127
  %v272 = vpop.permute.xlu0 %271
  %vm273 = vcmask 1039360
  %v274 = vsel %vm273, %v242, %v244
  %v275 = vsel %vm273, %v246, %v248
  %v276 = vsel %vm273, %v250, %v252
  %v277 = vsel %vm273, %v254, %v256
  %v278 = vsel %vm273, %v258, %v260
  %v279 = vsel %vm273, %v262, %v264
  %v280 = vsel %vm273, %v266, %v268
  %v281 = vsel %vm273, %v270, %v272
  %290 = vmatprep.subr.bf16.mxu0 0
  %291 = vmatpush1.bf16.msra.mxu0 %v274
  %292 = vmatprep.subr.bf16.mxu0 0
  %293 = vmatpush1.bf16.msra.mxu0 %v275
  %294 = vmatprep.subr.bf16.mxu0 0
  %295 = vmatpush1.bf16.msra.mxu0 %v276
  %296 = vmatprep.subr.bf16.mxu0 0
  %297 = vmatpush1.bf16.msra.mxu0 %v277
  %298 = vmatprep.subr.bf16.mxu0 0
  %299 = vmatpush1.bf16.msra.mxu0 %v278
  %300 = vmatprep.subr.bf16.mxu0 0
  %301 = vmatpush1.bf16.msra.mxu0 %v279
  %302 = vmatprep.subr.bf16.mxu0 0
  %303 = vmatpush1.bf16.msra.mxu0 %v280
  %304 = vmatprep.subr.bf16.mxu0 0
  %305 = vmatpush1.bf16.msra.mxu0 %v281
  %306 = vmatprep.subr.bf16.mxu0 0
  %307 = vmatpush1.bf16.msra.mxu0 0
  %308 = vmatprep.subr.bf16.mxu0 0
  %309 = vmatpush1.bf16.msra.mxu0 0
  %310 = vmatprep.subr.bf16.mxu0 0
  %311 = vmatpush1.bf16.msra.mxu0 0
  %312 = vmatprep.subr.bf16.mxu0 0
  %313 = vmatpush1.bf16.msra.mxu0 0
  %314 = vmatprep.subr.bf16.mxu0 0
  %315 = vmatpush1.bf16.msra.mxu0 0
  %316 = vmatprep.subr.bf16.mxu0 0
  %317 = vmatpush1.bf16.msra.mxu0 0
  %318 = vmatprep.subr.bf16.mxu0 0
  %319 = vmatpush1.bf16.msra.mxu0 0
  %320 = vmatprep.subr.bf16.mxu0 0
  %321 = vmatpush1.bf16.msra.mxu0 0
  %322 = vmatprep.mubr.bf16.mxu0 0
  %323 = vmatmul.mubr.bf16.gmra.mrb[0].mxu0 %v208
  %v324 = vpop.f32.mrb[0].mxu0
  %v325 = vadd.f32 0.0, %v324
  %v326 = vpop.f32.mrb[0].mxu0
  %v327 = vpop.f32.mrb[0].mxu0
  %v328 = vpop.f32.mrb[0].mxu0
  %329 = vdwg.mxu0
  %330 = vmatprep.subr.bf16.mxu0 0
  %331 = vmatpush1.bf16.msra.mxu0 %v199
  %332 = vmatprep.subr.bf16.mxu0 0
  %333 = vmatpush1.bf16.msra.mxu0 %v200
  %334 = vmatprep.subr.bf16.mxu0 0
  %335 = vmatpush1.bf16.msra.mxu0 %v201
  %336 = vmatprep.subr.bf16.mxu0 0
  %337 = vmatpush1.bf16.msra.mxu0 %v202
  %338 = vmatprep.subr.bf16.mxu0 0
  %339 = vmatpush1.bf16.msra.mxu0 %v203
  %340 = vmatprep.subr.bf16.mxu0 0
  %341 = vmatpush1.bf16.msra.mxu0 %v204
  %342 = vmatprep.subr.bf16.mxu0 0
  %343 = vmatpush1.bf16.msra.mxu0 %v205
  %344 = vmatprep.subr.bf16.mxu0 0
  %345 = vmatpush1.bf16.msra.mxu0 %v206
  %346 = vmatprep.subr.bf16.mxu0 0
  %347 = vmatpush1.bf16.msra.mxu0 0
  %348 = vmatprep.subr.bf16.mxu0 0
  %349 = vmatpush1.bf16.msra.mxu0 0
  %350 = vmatprep.subr.bf16.mxu0 0
  %351 = vmatpush1.bf16.msra.mxu0 0
  %352 = vmatprep.subr.bf16.mxu0 0
  %353 = vmatpush1.bf16.msra.mxu0 0
  %354 = vmatprep.subr.bf16.mxu0 0
  %355 = vmatpush1.bf16.msra.mxu0 0
  %356 = vmatprep.subr.bf16.mxu0 0
  %357 = vmatpush1.bf16.msra.mxu0 0
  %358 = vmatprep.subr.bf16.mxu0 0
  %359 = vmatpush1.bf16.msra.mxu0 0
  %360 = vmatprep.subr.bf16.mxu0 0
  %361 = vmatpush1.bf16.msra.mxu0 0
  %362 = vmatprep.mubr.bf16.mxu0 0
  %363 = vmatmul.mubr.bf16.gmra.mrb[0].mxu0 %v198
  %v364 = vpop.f32.mrb[0].mxu0
  %v365 = vadd.f32 %v325, %v364
  %v366 = vpop.f32.mrb[0].mxu0
  %v367 = vpop.f32.mrb[0].mxu0
  %v368 = vpop.f32.mrb[0].mxu0
  %369 = vdwg.mxu0
  %s370 = scalar_lea.vmem %s0, 4
  %v371 = vld [vmem:[%s370] sm:$0x3]
  %372 = vrot.lane.b32.xlu0 %v209, 122
  %v373 = vpop.permute.xlu0 %372
  %374 = vrot.lane.b32.xlu0 %v210, 122
  %v375 = vpop.permute.xlu0 %374
  %376 = vrot.lane.b32.xlu0 %v211, 122
  %v377 = vpop.permute.xlu0 %376
  %378 = vrot.lane.b32.xlu0 %v212, 122
  %v379 = vpop.permute.xlu0 %378
  %380 = vrot.lane.b32.xlu0 %v213, 122
  %v381 = vpop.permute.xlu0 %380
  %382 = vrot.lane.b32.xlu0 %v214, 122
  %v383 = vpop.permute.xlu0 %382
  %384 = vrot.lane.b32.xlu0 %v215, 122
  %v385 = vpop.permute.xlu0 %384
  %386 = vrot.lane.b32.xlu0 %v216, 122
  %v387 = vpop.permute.xlu0 %386
  %388 = vrot.lane.b32.xlu0 %v217, 122
  %v389 = vpop.permute.xlu0 %388
  %390 = vrot.lane.b32.xlu0 %v218, 122
  %v391 = vpop.permute.xlu0 %390
  %392 = vrot.lane.b32.xlu0 %v219, 122
  %v393 = vpop.permute.xlu0 %392
  %394 = vrot.lane.b32.xlu0 %v220, 122
  %v395 = vpop.permute.xlu0 %394
  %396 = vrot.lane.b32.xlu0 %v221, 122
  %v397 = vpop.permute.xlu0 %396
  %398 = vrot.lane.b32.xlu0 %v222, 122
  %v399 = vpop.permute.xlu0 %398
  %400 = vrot.lane.b32.xlu0 %v223, 122
  %v401 = vpop.permute.xlu0 %400
  %402 = vrot.lane.b32.xlu0 %v224, 122
  %v403 = vpop.permute.xlu0 %402
  %vm404 = vcmask 998400
  %v405 = vsel %vm404, %v373, %v375
  %v406 = vsel %vm404, %v377, %v379
  %v407 = vsel %vm404, %v381, %v383
  %v408 = vsel %vm404, %v385, %v387
  %v409 = vsel %vm404, %v389, %v391
  %v410 = vsel %vm404, %v393, %v395
  %v411 = vsel %vm404, %v397, %v399
  %v412 = vsel %vm404, %v401, %v403
  %421 = vmatprep.subr.bf16.mxu0 0
  %422 = vmatpush1.bf16.msra.mxu0 %v405
  %423 = vmatprep.subr.bf16.mxu0 0
  %424 = vmatpush1.bf16.msra.mxu0 %v406
  %425 = vmatprep.subr.bf16.mxu0 0
  %426 = vmatpush1.bf16.msra.mxu0 %v407
  %427 = vmatprep.subr.bf16.mxu0 0
  %428 = vmatpush1.bf16.msra.mxu0 %v408
  %429 = vmatprep.subr.bf16.mxu0 0
  %430 = vmatpush1.bf16.msra.mxu0 %v409
  %431 = vmatprep.subr.bf16.mxu0 0
  %432 = vmatpush1.bf16.msra.mxu0 %v410
  %433 = vmatprep.subr.bf16.mxu0 0
  %434 = vmatpush1.bf16.msra.mxu0 %v411
  %435 = vmatprep.subr.bf16.mxu0 0
  %436 = vmatpush1.bf16.msra.mxu0 %v412
  %437 = vmatprep.subr.bf16.mxu0 0
  %438 = vmatpush1.bf16.msra.mxu0 0
  %439 = vmatprep.subr.bf16.mxu0 0
  %440 = vmatpush1.bf16.msra.mxu0 0
  %441 = vmatprep.subr.bf16.mxu0 0
  %442 = vmatpush1.bf16.msra.mxu0 0
  %443 = vmatprep.subr.bf16.mxu0 0
  %444 = vmatpush1.bf16.msra.mxu0 0
  %445 = vmatprep.subr.bf16.mxu0 0
  %446 = vmatpush1.bf16.msra.mxu0 0
  %447 = vmatprep.subr.bf16.mxu0 0
  %448 = vmatpush1.bf16.msra.mxu0 0
  %449 = vmatprep.subr.bf16.mxu0 0
  %450 = vmatpush1.bf16.msra.mxu0 0
  %451 = vmatprep.subr.bf16.mxu0 0
  %452 = vmatpush1.bf16.msra.mxu0 0
  %453 = vmatprep.mubr.bf16.mxu0 0
  %454 = vmatmul.mubr.bf16.gmra.mrb[0].mxu0 %v371
  %v455 = vpop.f32.mrb[0].mxu0
  %v456 = vadd.f32 0.0, %v455
  %v457 = vpop.f32.mrb[0].mxu0
  %v458 = vpop.f32.mrb[0].mxu0
  %v459 = vpop.f32.mrb[0].mxu0
  %460 = vdwg.mxu0
  %v461 = vadd.f32 %v365, %v456
  %s462 = scalar_lea.vmem %s0, 6
  %v463 = vld [vmem:[%s462] sm:$0x3]
  %464 = vrot.lane.b32.xlu0 %v209, 121
  %v465 = vpop.permute.xlu0 %464
  %466 = vrot.lane.b32.xlu0 %v210, 121
  %v467 = vpop.permute.xlu0 %466
  %468 = vrot.lane.b32.xlu0 %v211, 121
  %v469 = vpop.permute.xlu0 %468
  %470 = vrot.lane.b32.xlu0 %v212, 121
  %v471 = vpop.permute.xlu0 %470
  %472 = vrot.lane.b32.xlu0 %v213, 121
  %v473 = vpop.permute.xlu0 %472
  %474 = vrot.lane.b32.xlu0 %v214, 121
  %v475 = vpop.permute.xlu0 %474
  %476 = vrot.lane.b32.xlu0 %v215, 121
  %v477 = vpop.permute.xlu0 %476
  %478 = vrot.lane.b32.xlu0 %v216, 121
  %v479 = vpop.permute.xlu0 %478
  %480 = vrot.lane.b32.xlu0 %v217, 121
  %v481 = vpop.permute.xlu0 %480
  %482 = vrot.lane.b32.xlu0 %v218, 121
  %v483 = vpop.permute.xlu0 %482
  %484 = vrot.lane.b32.xlu0 %v219, 121
  %v485 = vpop.permute.xlu0 %484
  %486 = vrot.lane.b32.xlu0 %v220, 121
  %v487 = vpop.permute.xlu0 %486
  %488 = vrot.lane.b32.xlu0 %v221, 121
  %v489 = vpop.permute.xlu0 %488
  %490 = vrot.lane.b32.xlu0 %v222, 121
  %v491 = vpop.permute.xlu0 %490
  %492 = vrot.lane.b32.xlu0 %v223, 121
  %v493 = vpop.permute.xlu0 %492
  %494 = vrot.lane.b32.xlu0 %v224, 121
  %v495 = vpop.permute.xlu0 %494
  %vm496 = vcmask 990208
  %v497 = vsel %vm496, %v465, %v467
  %v498 = vsel %vm496, %v469, %v471
  %v499 = vsel %vm496, %v473, %v475
  %v500 = vsel %vm496, %v477, %v479
  %v501 = vsel %vm496, %v481, %v483
  %v502 = vsel %vm496, %v485, %v487
  %v503 = vsel %vm496, %v489, %v491
  %v504 = vsel %vm496, %v493, %v495
  %513 = vmatprep.subr.bf16.mxu0 0
  %514 = vmatpush1.bf16.msra.mxu0 %v497
  %515 = vmatprep.subr.bf16.mxu0 0
  %516 = vmatpush1.bf16.msra.mxu0 %v498
  %517 = vmatprep.subr.bf16.mxu0 0
  %518 = vmatpush1.bf16.msra.mxu0 %v499
  %519 = vmatprep.subr.bf16.mxu0 0
  %520 = vmatpush1.bf16.msra.mxu0 %v500
  %521 = vmatprep.subr.bf16.mxu0 0
  %522 = vmatpush1.bf16.msra.mxu0 %v501
  %523 = vmatprep.subr.bf16.mxu0 0
  %524 = vmatpush1.bf16.msra.mxu0 %v502
  %525 = vmatprep.subr.bf16.mxu0 0
  %526 = vmatpush1.bf16.msra.mxu0 %v503
  %527 = vmatprep.subr.bf16.mxu0 0
  %528 = vmatpush1.bf16.msra.mxu0 %v504
  %529 = vmatprep.subr.bf16.mxu0 0
  %530 = vmatpush1.bf16.msra.mxu0 0
  %531 = vmatprep.subr.bf16.mxu0 0
  %532 = vmatpush1.bf16.msra.mxu0 0
  %533 = vmatprep.subr.bf16.mxu0 0
  %534 = vmatpush1.bf16.msra.mxu0 0
  %535 = vmatprep.subr.bf16.mxu0 0
  %536 = vmatpush1.bf16.msra.mxu0 0
  %537 = vmatprep.subr.bf16.mxu0 0
  %538 = vmatpush1.bf16.msra.mxu0 0
  %539 = vmatprep.subr.bf16.mxu0 0
  %540 = vmatpush1.bf16.msra.mxu0 0
  %541 = vmatprep.subr.bf16.mxu0 0
  %542 = vmatpush1.bf16.msra.mxu0 0
  %543 = vmatprep.subr.bf16.mxu0 0
  %544 = vmatpush1.bf16.msra.mxu0 0
  %545 = vmatprep.mubr.bf16.mxu0 0
  %546 = vmatmul.mubr.bf16.gmra.mrb[0].mxu0 %v463
  %v547 = vpop.f32.mrb[0].mxu0
  %v548 = vadd.f32 0.0, %v547
  %v549 = vpop.f32.mrb[0].mxu0
  %v550 = vpop.f32.mrb[0].mxu0
  %v551 = vpop.f32.mrb[0].mxu0
  %552 = vdwg.mxu0
  %v553 = vadd.f32 %v461, %v548
  %v554 = vld [vmem:[%s1] sm:$0x7]
  %556 = vset.pattern.permute.xlu0 0
  %557 = vperm.xlu0 %556, %v554
  %v558 = vpop.permute.xlu0 %557
  %v560 = vadd.f32 %v553, %v558
  %v561 = vmax.f32 %v560, 0.0
  %562 = vst [vmem:[%s3] sm:$0x7] %v561
  // Predicated region
  $region47: #{_device_forward.5} parent=0 // pred_check
    _
  $region48: #{_device_forward.5} parent=0 // pred_check_branch
    %564 = sbr.rel (0) target = $region50
  $region49: #{_device_forward.5} parent=0 // pred_region
    _
  $region50: #{_device_forward.5} parent=0 // pred_fallthru
    _
  // Predicated region
  $region51: #{_device_forward.5} parent=0 // pred_check
    _
  $region52: #{_device_forward.5} parent=0 // pred_check_branch
    %566 = sbr.rel (0) target = $region54
  $region53: #{_device_forward.5} parent=0 // pred_region
    _
  $region54: #{_device_forward.5} parent=0 // pred_fallthru
    _
  %567 = vsyncmov [#allocation3]
  %s568 = vpop.sfrf %567
  %p569 = scmp.eq.s32.totalorder %s568, 0
  %p570 = pneg %p569
  %572 = shalt.err (%p570)

</llo_original>
